<compile_context>
chip_gen: v7x
topology: tpu7x:2x2x1
jax: 0.10.0
libtpu: 0.0.40
codegen_flags: <defaults>
</compile_context>

<pallas_src>
import math
import functools

import jax
import jax.numpy as jnp
from jax.experimental import pallas as pl
from jax.experimental.pallas import tpu as pltpu

# ----------------------------- model config ---------------------------------
VOCAB = 256
D_MODEL = 32
N_HEADS = 4
D_KV = 8                      # head dim; N_HEADS * D_KV == D_MODEL
D_FF = 64
REL_BUCKETS = 8
REL_MAX_DIST = 16
LN_EPS = 1e-6
NEG_INF = -1e9
IGNORE_INDEX = -100
PAD_TOKEN_ID = 0
DECODER_START_TOKEN_ID = 0


# ------------------------- in-kernel helper math -----------------------------
def _rms(x, w):
    """T5 LayerNorm (no mean subtraction, no bias). x: [L, D], w: [1, D]."""
    var = jnp.mean(x * x, axis=-1, keepdims=True)
    return x * jax.lax.rsqrt(var + LN_EPS) * w


def _mha_proj(q, k, v, wo, bias_rows, mask_row):
    """Multi-head attention + output projection, per-head 2D matmuls.

    q: [Lq, D], k/v: [Lk, D], wo: [D, D], bias_rows: [H, Lq, Lk] or None,
    mask_row: [1, Lk] additive padding mask or None.  Returns [Lq, D].

    T5 attention: no 1/sqrt(d) scaling.  The output projection is folded into
    the head loop (ctx @ Wo == sum_h ctx_h @ Wo[h*Dh:(h+1)*Dh, :]), so no
    concatenate / 3D batched einsum is needed; every matmul is a plain 2D dot
    that maps straight onto the MXU.
    """
    out = None
    for h in range(N_HEADS):
        sl = slice(h * D_KV, (h + 1) * D_KV)
        qh, kh, vh = q[:, sl], k[:, sl], v[:, sl]
        # q @ k^T expressed as a dot_general contracting the head dim of both.
        s = jax.lax.dot_general(qh, kh, (((1,), (1,)), ((), ())),
                                preferred_element_type=jnp.float32)
        if bias_rows is not None:
            s = s + bias_rows[h]
        if mask_row is not None:
            s = s + mask_row
        m = jnp.max(s, axis=-1, keepdims=True)
        p = jnp.exp(s - m)
        denom = jnp.sum(p, axis=-1, keepdims=True)
        attn = p * pl.reciprocal(denom, approx=True)
        ctx_h = jnp.dot(attn, vh, preferred_element_type=jnp.float32)
        part = jnp.dot(ctx_h, wo[sl, :], preferred_element_type=jnp.float32)
        out = part if out is None else out + part
    return out


# --------------------------- fused forward kernel ----------------------------
def _t5_fused_kernel(
    # per-batch activations / masks / labels
    enc_emb_ref, dec_emb_ref, enc_mask_ref, enc_bias_ref, dec_bias_ref,
    labels_ref,
    # encoder weights
    e_ln1_ref, e_wqkv_ref, e_wo_ref, e_ln2_ref, e_wi_ref, e_wof_ref, e_lnf_ref,
    # decoder weights
    d_ln1_ref, d_sa_wqkv_ref, d_sa_wo_ref, d_ln2_ref, d_ca_wq_ref,
    d_ca_wkv_ref, d_ca_wo_ref, d_ln3_ref, d_wi_ref, d_wof_ref, d_lnf_ref,
    # LM head (tied embedding, pre-scaled & transposed)
    lm_head_ref,
    # outputs: per-batch loss sum and valid-token count
    loss_ref, count_ref,
):
    enc_mask = enc_mask_ref[0]                      # [1, S] additive mask

    # ------------------------------ encoder ------------------------------
    h = enc_emb_ref[0]                              # [S, D]
    x = _rms(h, e_ln1_ref[...])
    qkv = jnp.dot(x, e_wqkv_ref[...], preferred_element_type=jnp.float32)
    q = qkv[:, :D_MODEL]
    k = qkv[:, D_MODEL:2 * D_MODEL]
    v = qkv[:, 2 * D_MODEL:]
    h = h + _mha_proj(q, k, v, e_wo_ref[...], enc_bias_ref[...], enc_mask)
    x = _rms(h, e_ln2_ref[...])
    ff = jnp.maximum(
        jnp.dot(x, e_wi_ref[...], preferred_element_type=jnp.float32), 0.0)
    h = h + jnp.dot(ff, e_wof_ref[...], preferred_element_type=jnp.float32)
    enc_out = _rms(h, e_lnf_ref[...])               # [S, D]

    # ------------------------------ decoder ------------------------------
    d = dec_emb_ref[0]                              # [T, D]
    # self attention (causal mask pre-folded into dec_bias)
    x = _rms(d, d_ln1_ref[...])
    qkv = jnp.dot(x, d_sa_wqkv_ref[...], preferred_element_type=jnp.float32)
    q = qkv[:, :D_MODEL]
    k = qkv[:, D_MODEL:2 * D_MODEL]
    v = qkv[:, 2 * D_MODEL:]
    d = d + _mha_proj(q, k, v, d_sa_wo_ref[...], dec_bias_ref[...], None)
    # cross attention (no position bias, encoder padding mask)
    x = _rms(d, d_ln2_ref[...])
    q = jnp.dot(x, d_ca_wq_ref[...], preferred_element_type=jnp.float32)
    kv = jnp.dot(enc_out, d_ca_wkv_ref[...], preferred_element_type=jnp.float32)
    k = kv[:, :D_MODEL]
    v = kv[:, D_MODEL:]
    d = d + _mha_proj(q, k, v, d_ca_wo_ref[...], None, enc_mask)
    # FFN
    x = _rms(d, d_ln3_ref[...])
    ff = jnp.maximum(
        jnp.dot(x, d_wi_ref[...], preferred_element_type=jnp.float32), 0.0)
    d = d + jnp.dot(ff, d_wof_ref[...], preferred_element_type=jnp.float32)
    dec_out = _rms(d, d_lnf_ref[...])               # [T, D]

    # ------------------- LM head + cross-entropy (fused) ------------------
    logits = jnp.dot(dec_out, lm_head_ref[...],
                     preferred_element_type=jnp.float32)          # [T, V]
    labels = labels_ref[0]                                        # [T, 1] i32
    m = jnp.max(logits, axis=-1, keepdims=True)
    shifted = logits - m
    lse = jnp.log(jnp.sum(jnp.exp(shifted), axis=-1, keepdims=True))
    logprobs = shifted - lse
    vocab_ids = jax.lax.broadcasted_iota(jnp.int32, logits.shape, 1)
    onehot = (vocab_ids == labels).astype(jnp.float32)
    target_lp = jnp.sum(logprobs * onehot, axis=-1, keepdims=True)  # [T, 1]
    valid = (labels != IGNORE_INDEX).astype(jnp.float32)
    # Full-ref stores (robust lowering for tiny scalar outputs in VMEM).
    loss_ref[...] = jnp.sum(-target_lp * valid).reshape(1, 1, 1)
    count_ref[...] = jnp.sum(valid).reshape(1, 1, 1)


# ----------------------------- glue (plain JAX) ------------------------------
def _relative_position_bucket(rel_pos, bidirectional, num_buckets, max_distance):
    rel_buckets = jnp.zeros_like(rel_pos)
    if bidirectional:
        num_buckets = num_buckets // 2
        rel_buckets = rel_buckets + (rel_pos > 0).astype(jnp.int32) * num_buckets
        rel_pos = jnp.abs(rel_pos)
    else:
        rel_pos = -jnp.minimum(rel_pos, 0)
    max_exact = num_buckets // 2
    is_small = rel_pos < max_exact
    rel_if_large = max_exact + (
        jnp.log(rel_pos.astype(jnp.float32) / max_exact + 1e-9)
        / math.log(max_distance / max_exact)
        * (num_buckets - max_exact)
    ).astype(jnp.int32)
    rel_if_large = jnp.minimum(rel_if_large, num_buckets - 1)
    return rel_buckets + jnp.where(is_small, rel_pos, rel_if_large)


def compute_position_bias(rel_embed, q_len, k_len, bidirectional):
    ctx = jnp.arange(q_len)[:, None]
    mem = jnp.arange(k_len)[None, :]
    rel_pos = mem - ctx
    buckets = _relative_position_bucket(rel_pos, bidirectional,
                                        REL_BUCKETS, REL_MAX_DIST)
    values = rel_embed[buckets]                       # [q, k, H]
    return jnp.transpose(values, (2, 0, 1))           # [H, q, k]


def shift_right(labels):
    shifted = jnp.zeros_like(labels)
    shifted = shifted.at[:, 1:].set(labels[:, :-1])
    shifted = shifted.at[:, 0].set(DECODER_START_TOKEN_ID)
    return jnp.where(shifted == IGNORE_INDEX, PAD_TOKEN_ID, shifted)


def t5_forward(params, input_ids, attention_mask, labels):
    b, s = input_ids.shape
    t = labels.shape[1]
    emb = params['shared']
    pe, pd = params['enc'], params['dec']

    # Embedding gathers / masks / biases (tiny; constant-folded weight prep).
    enc_emb = emb[input_ids]                                       # [B, S, D]
    dec_emb = emb[shift_right(labels)]                             # [B, T, D]
    enc_mask_add = ((1.0 - attention_mask.astype(jnp.float32))[:, None, :]
                    * NEG_INF)                                     # [B, 1, S]
    enc_pos_bias = compute_position_bias(pe['rel_bias'], s, s, True)  # [H,S,S]
    causal = jnp.tril(jnp.ones((t, t), jnp.float32))
    dec_self_bias = (compute_position_bias(pd['rel_bias'], t, t, False)
                     + (1.0 - causal)[None] * NEG_INF)             # [H, T, T]
    labels3 = labels.reshape(b, t, 1).astype(jnp.int32)

    # Fold fused-QKV concatenation, tied-embedding transpose and the
    # d_model**-0.5 rescale into precomputed weights (constants under jit).
    e_wqkv = jnp.concatenate([pe['self_attn']['q'], pe['self_attn']['k'],
                              pe['self_attn']['v']], axis=1)       # [D, 3D]
    d_sa_wqkv = jnp.concatenate([pd['self_attn']['q'], pd['self_attn']['k'],
                                 pd['self_attn']['v']], axis=1)    # [D, 3D]
    d_ca_wkv = jnp.concatenate([pd['cross_attn']['k'],
                                pd['cross_attn']['v']], axis=1)    # [D, 2D]
    lm_head = emb.T * (D_MODEL ** -0.5)                            # [D, V]

    ln = lambda w: w.reshape(1, D_MODEL)

    def batched_spec(*tail):
        z = (0,) * len(tail)
        return pl.BlockSpec((1,) + tail, lambda i, _z=z: (i,) + _z)

    def shared_spec(*shape):
        z = (0,) * len(shape)
        return pl.BlockSpec(shape, lambda i, _z=z: _z)

    operands = [
        # per-batch activations / masks / labels
        (enc_emb,                 batched_spec(s, D_MODEL)),
        (dec_emb,                 batched_spec(t, D_MODEL)),
        (enc_mask_add,            batched_spec(1, s)),
        (enc_pos_bias,            shared_spec(N_HEADS, s, s)),
        (dec_self_bias,           shared_spec(N_HEADS, t, t)),
        (labels3,                 batched_spec(t, 1)),
        # encoder weights
        (ln(pe['ln1']),           shared_spec(1, D_MODEL)),
        (e_wqkv,                  shared_spec(D_MODEL, 3 * D_MODEL)),
        (pe['self_attn']['o'],    shared_spec(D_MODEL, D_MODEL)),
        (ln(pe['ln2']),           shared_spec(1, D_MODEL)),
        (pe['wi'],                shared_spec(D_MODEL, D_FF)),
        (pe['wo'],                shared_spec(D_FF, D_MODEL)),
        (ln(pe['final_ln']),      shared_spec(1, D_MODEL)),
        # decoder weights
        (ln(pd['ln1']),           shared_spec(1, D_MODEL)),
        (d_sa_wqkv,               shared_spec(D_MODEL, 3 * D_MODEL)),
        (pd['self_attn']['o'],    shared_spec(D_MODEL, D_MODEL)),
        (ln(pd['ln2']),           shared_spec(1, D_MODEL)),
        (pd['cross_attn']['q'],   shared_spec(D_MODEL, D_MODEL)),
        (d_ca_wkv,                shared_spec(D_MODEL, 2 * D_MODEL)),
        (pd['cross_attn']['o'],   shared_spec(D_MODEL, D_MODEL)),
        (ln(pd['ln3']),           shared_spec(1, D_MODEL)),
        (pd['wi'],                shared_spec(D_MODEL, D_FF)),
        (pd['wo'],                shared_spec(D_FF, D_MODEL)),
        (ln(pd['final_ln']),      shared_spec(1, D_MODEL)),
        # LM head
        (lm_head,                 shared_spec(D_MODEL, VOCAB)),
    ]
    args = [a for a, _ in operands]
    in_specs = [spec for _, spec in operands]

    loss_sums, counts = pl.pallas_call(
        _t5_fused_kernel,
        out_shape=(jax.ShapeDtypeStruct((b, 1, 1), jnp.float32),
                   jax.ShapeDtypeStruct((b, 1, 1), jnp.float32)),
        grid=(b,),
        in_specs=in_specs,
        out_specs=(pl.BlockSpec((1, 1, 1), lambda i: (i, 0, 0)),
                   pl.BlockSpec((1, 1, 1), lambda i: (i, 0, 0))),
        compiler_params=pltpu.CompilerParams(
            dimension_semantics=("parallel",),
            vmem_limit_bytes=32 * 1024 * 1024),
    )(*args)

    # Mean over valid tokens across the whole batch (tiny scalar glue).
    return jnp.sum(loss_sums) / jnp.sum(counts)


# ----------------------------- parameter init --------------------------------
def init_params(key):
    def nrm(k, shape, scale=0.02):
        return jax.random.normal(k, shape, jnp.float32) * scale

    keys = iter(jax.random.split(key, 40))
    attn = lambda: {'q': nrm(next(keys), (D_MODEL, N_HEADS * D_KV)),
                    'k': nrm(next(keys), (D_MODEL, N_HEADS * D_KV)),
                    'v': nrm(next(keys), (D_MODEL, N_HEADS * D_KV)),
                    'o': nrm(next(keys), (N_HEADS * D_KV, D_MODEL))}
    params = {
        'shared': nrm(next(keys), (VOCAB, D_MODEL)),
        'enc': {
            'rel_bias': nrm(next(keys), (REL_BUCKETS, N_HEADS)),
            'self_attn': attn(),
            'ln1': jnp.ones((D_MODEL,), jnp.float32),
            'ln2': jnp.ones((D_MODEL,), jnp.float32),
            'wi': nrm(next(keys), (D_MODEL, D_FF)),
            'wo': nrm(next(keys), (D_FF, D_MODEL)),
            'final_ln': jnp.ones((D_MODEL,), jnp.float32),
        },
        'dec': {
            'rel_bias': nrm(next(keys), (REL_BUCKETS, N_HEADS)),
            'self_attn': attn(),
            'cross_attn': attn(),
            'ln1': jnp.ones((D_MODEL,), jnp.float32),
            'ln2': jnp.ones((D_MODEL,), jnp.float32),
            'ln3': jnp.ones((D_MODEL,), jnp.float32),
            'wi': nrm(next(keys), (D_MODEL, D_FF)),
            'wo': nrm(next(keys), (D_FF, D_MODEL)),
            'final_ln': jnp.ones((D_MODEL,), jnp.float32),
        },
    }
    return params


# ----------------------------------- main ------------------------------------
if __name__ == "__main__":
    key = jax.random.PRNGKey(0)
    kp, ki, kl = jax.random.split(key, 3)

    B, S, T = 2, 8, 8
    params = init_params(kp)

    input_ids = jax.random.randint(ki, (B, S), 0, VOCAB, dtype=jnp.int32)
    attention_mask = jnp.ones((B, S), jnp.int32).at[1, 6:].set(0)
    labels = jax.random.randint(kl, (B, T), 0, VOCAB, dtype=jnp.int32)
    labels = labels.at[:, -1].set(IGNORE_INDEX)        # exercise ignore_index

    loss_fn = jax.jit(functools.partial(t5_forward, params))
    loss = loss_fn(input_ids, attention_mask, labels)
    jax.block_until_ready(loss)

    assert loss.shape == () and jnp.isfinite(loss), loss
    print("KERNEL_OK")
</pallas_src>

<mosaic_0001>
module attributes {stable_mosaic.version = 11 : i64} {
  func.func @_t5_fused_kernel(%arg0: i32, %arg1: memref<1x8x32xf32, #tpu.memory_space<vmem>>, %arg2: memref<1x8x32xf32, #tpu.memory_space<vmem>>, %arg3: memref<1x1x8xf32, #tpu.memory_space<vmem>>, %arg4: memref<4x8x8xf32, #tpu.memory_space<vmem>>, %arg5: memref<4x8x8xf32, #tpu.memory_space<vmem>>, %arg6: memref<1x8x1xi32, #tpu.memory_space<vmem>>, %arg7: memref<1x32xf32, #tpu.memory_space<vmem>>, %arg8: memref<32x96xf32, #tpu.memory_space<vmem>>, %arg9: memref<32x32xf32, #tpu.memory_space<vmem>>, %arg10: memref<1x32xf32, #tpu.memory_space<vmem>>, %arg11: memref<32x64xf32, #tpu.memory_space<vmem>>, %arg12: memref<64x32xf32, #tpu.memory_space<vmem>>, %arg13: memref<1x32xf32, #tpu.memory_space<vmem>>, %arg14: memref<1x32xf32, #tpu.memory_space<vmem>>, %arg15: memref<32x96xf32, #tpu.memory_space<vmem>>, %arg16: memref<32x32xf32, #tpu.memory_space<vmem>>, %arg17: memref<1x32xf32, #tpu.memory_space<vmem>>, %arg18: memref<32x32xf32, #tpu.memory_space<vmem>>, %arg19: memref<32x64xf32, #tpu.memory_space<vmem>>, %arg20: memref<32x32xf32, #tpu.memory_space<vmem>>, %arg21: memref<1x32xf32, #tpu.memory_space<vmem>>, %arg22: memref<32x64xf32, #tpu.memory_space<vmem>>, %arg23: memref<64x32xf32, #tpu.memory_space<vmem>>, %arg24: memref<1x32xf32, #tpu.memory_space<vmem>>, %arg25: memref<32x256xf32, #tpu.memory_space<vmem>>, %arg26: memref<1x1x1xf32, #tpu.memory_space<vmem>>, %arg27: memref<1x1x1xf32, #tpu.memory_space<vmem>>) attributes {dimension_semantics = [#tpu.dimension_semantics<parallel>], iteration_bounds = array<i64: 2>, scalar_prefetch = 0 : i64, scratch_operands = 0 : i64, tpu.core_type = #tpu.core_type<tc>, window_params = [{transform_indices = @transform_0, window_bounds = array<i64: 1, 8, 32>}, {transform_indices = @transform_1, window_bounds = array<i64: 1, 8, 32>}, {transform_indices = @transform_2, window_bounds = array<i64: 1, 1, 8>}, {pipeline_mode = #tpu.pipeline_mode<synchronous>, transform_indices = @transform_3, window_bounds = array<i64: 4, 8, 8>}, {pipeline_mode = #tpu.pipeline_mode<synchronous>, transform_indices = @transform_4, window_bounds = array<i64: 4, 8, 8>}, {transform_indices = @transform_5, window_bounds = array<i64: 1, 8, 1>}, {pipeline_mode = #tpu.pipeline_mode<synchronous>, transform_indices = @transform_6, window_bounds = array<i64: 1, 32>}, {pipeline_mode = #tpu.pipeline_mode<synchronous>, transform_indices = @transform_7, window_bounds = array<i64: 32, 96>}, {pipeline_mode = #tpu.pipeline_mode<synchronous>, transform_indices = @transform_8, window_bounds = array<i64: 32, 32>}, {pipeline_mode = #tpu.pipeline_mode<synchronous>, transform_indices = @transform_9, window_bounds = array<i64: 1, 32>}, {pipeline_mode = #tpu.pipeline_mode<synchronous>, transform_indices = @transform_10, window_bounds = array<i64: 32, 64>}, {pipeline_mode = #tpu.pipeline_mode<synchronous>, transform_indices = @transform_11, window_bounds = array<i64: 64, 32>}, {pipeline_mode = #tpu.pipeline_mode<synchronous>, transform_indices = @transform_12, window_bounds = array<i64: 1, 32>}, {pipeline_mode = #tpu.pipeline_mode<synchronous>, transform_indices = @transform_13, window_bounds = array<i64: 1, 32>}, {pipeline_mode = #tpu.pipeline_mode<synchronous>, transform_indices = @transform_14, window_bounds = array<i64: 32, 96>}, {pipeline_mode = #tpu.pipeline_mode<synchronous>, transform_indices = @transform_15, window_bounds = array<i64: 32, 32>}, {pipeline_mode = #tpu.pipeline_mode<synchronous>, transform_indices = @transform_16, window_bounds = array<i64: 1, 32>}, {pipeline_mode = #tpu.pipeline_mode<synchronous>, transform_indices = @transform_17, window_bounds = array<i64: 32, 32>}, {pipeline_mode = #tpu.pipeline_mode<synchronous>, transform_indices = @transform_18, window_bounds = array<i64: 32, 64>}, {pipeline_mode = #tpu.pipeline_mode<synchronous>, transform_indices = @transform_19, window_bounds = array<i64: 32, 32>}, {pipeline_mode = #tpu.pipeline_mode<synchronous>, transform_indices = @transform_20, window_bounds = array<i64: 1, 32>}, {pipeline_mode = #tpu.pipeline_mode<synchronous>, transform_indices = @transform_21, window_bounds = array<i64: 32, 64>}, {pipeline_mode = #tpu.pipeline_mode<synchronous>, transform_indices = @transform_22, window_bounds = array<i64: 64, 32>}, {pipeline_mode = #tpu.pipeline_mode<synchronous>, transform_indices = @transform_23, window_bounds = array<i64: 1, 32>}, {pipeline_mode = #tpu.pipeline_mode<synchronous>, transform_indices = @transform_24, window_bounds = array<i64: 32, 256>}, {transform_indices = @transform_25, window_bounds = array<i64: 1, 1, 1>}, {transform_indices = @transform_26, window_bounds = array<i64: 1, 1, 1>}]} {
    %c0 = arith.constant 0 : index
    %c0_0 = arith.constant 0 : index
    %c0_1 = arith.constant 0 : index
    %0 = vector.load %arg3[%c0, %c0_0, %c0_1] : memref<1x1x8xf32, #tpu.memory_space<vmem>>, vector<1x1x8xf32>
    %1 = vector.shape_cast %0 : vector<1x1x8xf32> to vector<1x8xf32>
    %c0_2 = arith.constant 0 : index
    %c0_3 = arith.constant 0 : index
    %c0_4 = arith.constant 0 : index
    %2 = vector.load %arg1[%c0_2, %c0_3, %c0_4] : memref<1x8x32xf32, #tpu.memory_space<vmem>>, vector<1x8x32xf32>
    %3 = vector.shape_cast %2 : vector<1x8x32xf32> to vector<8x32xf32>
    %c0_5 = arith.constant 0 : index
    %c0_6 = arith.constant 0 : index
    %4 = vector.load %arg7[%c0_5, %c0_6] : memref<1x32xf32, #tpu.memory_space<vmem>>, vector<1x32xf32>
    %5 = arith.mulf %3, %3 : vector<8x32xf32>
    %cst = arith.constant dense<0.000000e+00> : vector<8xf32>
    %6 = vector.multi_reduction <add>, %5, %cst [1] : vector<8x32xf32> to vector<8xf32>
    %7 = vector.shape_cast %6 : vector<8xf32> to vector<8x1xf32>
    %cst_7 = arith.constant 3.200000e+01 : f32
    %8 = vector.broadcast %cst_7 : f32 to vector<8x1xf32>
    %9 = arith.divf %7, %8 : vector<8x1xf32>
    %cst_8 = arith.constant 9.99999997E-7 : f32
    %10 = vector.broadcast %cst_8 : f32 to vector<8x1xf32>
    %11 = arith.addf %9, %10 : vector<8x1xf32>
    %12 = math.rsqrt %11 : vector<8x1xf32>
    %13 = vector.broadcast %12 : vector<8x1xf32> to vector<8x32xf32>
    %14 = arith.mulf %3, %13 : vector<8x32xf32>
    %15 = vector.broadcast %4 : vector<1x32xf32> to vector<8x32xf32>
    %16 = arith.mulf %14, %15 : vector<8x32xf32>
    %c0_9 = arith.constant 0 : index
    %c0_10 = arith.constant 0 : index
    %17 = vector.load %arg8[%c0_9, %c0_10] : memref<32x96xf32, #tpu.memory_space<vmem>>, vector<32x96xf32>
    %cst_11 = arith.constant dense<0.000000e+00> : vector<8x96xf32>
    %18 = tpu.matmul %16, %17, %cst_11 {dimension_numbers = #tpu.dot_dimension_numbers<[1], [0], [0], [1], [0, 0, 1, 1], [], []>} : vector<8x32xf32>, vector<32x96xf32>, vector<8x96xf32> -> vector<8x96xf32>
    %19 = vector.extract_strided_slice %18 {offsets = [0, 0], sizes = [8, 32], strides = [1, 1]} : vector<8x96xf32> to vector<8x32xf32>
    %20 = vector.extract_strided_slice %18 {offsets = [0, 32], sizes = [8, 32], strides = [1, 1]} : vector<8x96xf32> to vector<8x32xf32>
    %21 = vector.extract_strided_slice %18 {offsets = [0, 64], sizes = [8, 32], strides = [1, 1]} : vector<8x96xf32> to vector<8x32xf32>
    %c0_12 = arith.constant 0 : index
    %c0_13 = arith.constant 0 : index
    %22 = vector.load %arg9[%c0_12, %c0_13] : memref<32x32xf32, #tpu.memory_space<vmem>>, vector<32x32xf32>
    %c0_14 = arith.constant 0 : index
    %c0_15 = arith.constant 0 : index
    %c0_16 = arith.constant 0 : index
    %23 = vector.load %arg4[%c0_14, %c0_15, %c0_16] : memref<4x8x8xf32, #tpu.memory_space<vmem>>, vector<4x8x8xf32>
    %24 = vector.extract_strided_slice %19 {offsets = [0, 0], sizes = [8, 8], strides = [1, 1]} : vector<8x32xf32> to vector<8x8xf32>
    %25 = vector.extract_strided_slice %20 {offsets = [0, 0], sizes = [8, 8], strides = [1, 1]} : vector<8x32xf32> to vector<8x8xf32>
    %26 = vector.extract_strided_slice %21 {offsets = [0, 0], sizes = [8, 8], strides = [1, 1]} : vector<8x32xf32> to vector<8x8xf32>
    %cst_17 = arith.constant dense<0.000000e+00> : vector<8x8xf32>
    %27 = tpu.matmul %24, %25, %cst_17 {dimension_numbers = #tpu.dot_dimension_numbers<[1], [1], [0], [0], [0, 0, 1, 0], [], []>} : vector<8x8xf32>, vector<8x8xf32>, vector<8x8xf32> -> vector<8x8xf32>
    %28 = vector.extract_strided_slice %23 {offsets = [0, 0, 0], sizes = [1, 8, 8], strides = [1, 1, 1]} : vector<4x8x8xf32> to vector<1x8x8xf32>
    %29 = vector.shape_cast %28 : vector<1x8x8xf32> to vector<8x8xf32>
    %30 = arith.addf %27, %29 : vector<8x8xf32>
    %31 = vector.broadcast %1 : vector<1x8xf32> to vector<8x8xf32>
    %32 = arith.addf %30, %31 : vector<8x8xf32>
    %cst_18 = arith.constant dense<0xFF800000> : vector<8xf32>
    %33 = vector.multi_reduction <maximumf>, %32, %cst_18 [1] : vector<8x8xf32> to vector<8xf32>
    %34 = vector.shape_cast %33 : vector<8xf32> to vector<8x1xf32>
    %35 = vector.broadcast %34 : vector<8x1xf32> to vector<8x8xf32>
    %36 = arith.subf %32, %35 : vector<8x8xf32>
    %37 = math.exp %36 : vector<8x8xf32>
    %cst_19 = arith.constant dense<0.000000e+00> : vector<8xf32>
    %38 = vector.multi_reduction <add>, %37, %cst_19 [1] : vector<8x8xf32> to vector<8xf32>
    %39 = vector.shape_cast %38 : vector<8xf32> to vector<8x1xf32>
    %40 = tpu.reciprocal %39 {approx = true} : vector<8x1xf32> -> vector<8x1xf32>
    %41 = vector.broadcast %40 : vector<8x1xf32> to vector<8x8xf32>
    %42 = arith.mulf %37, %41 : vector<8x8xf32>
    %cst_20 = arith.constant dense<0.000000e+00> : vector<8x8xf32>
    %43 = tpu.matmul %42, %26, %cst_20 {dimension_numbers = #tpu.dot_dimension_numbers<[1], [0], [0], [1], [0, 0, 1, 1], [], []>} : vector<8x8xf32>, vector<8x8xf32>, vector<8x8xf32> -> vector<8x8xf32>
    %44 = vector.extract_strided_slice %22 {offsets = [0, 0], sizes = [8, 32], strides = [1, 1]} : vector<32x32xf32> to vector<8x32xf32>
    %cst_21 = arith.constant dense<0.000000e+00> : vector<8x32xf32>
    %45 = tpu.matmul %43, %44, %cst_21 {dimension_numbers = #tpu.dot_dimension_numbers<[1], [0], [0], [1], [0, 0, 1, 1], [], []>} : vector<8x8xf32>, vector<8x32xf32>, vector<8x32xf32> -> vector<8x32xf32>
    %46 = vector.extract_strided_slice %19 {offsets = [0, 8], sizes = [8, 8], strides = [1, 1]} : vector<8x32xf32> to vector<8x8xf32>
    %47 = vector.extract_strided_slice %20 {offsets = [0, 8], sizes = [8, 8], strides = [1, 1]} : vector<8x32xf32> to vector<8x8xf32>
    %48 = vector.extract_strided_slice %21 {offsets = [0, 8], sizes = [8, 8], strides = [1, 1]} : vector<8x32xf32> to vector<8x8xf32>
    %cst_22 = arith.constant dense<0.000000e+00> : vector<8x8xf32>
    %49 = tpu.matmul %46, %47, %cst_22 {dimension_numbers = #tpu.dot_dimension_numbers<[1], [1], [0], [0], [0, 0, 1, 0], [], []>} : vector<8x8xf32>, vector<8x8xf32>, vector<8x8xf32> -> vector<8x8xf32>
    %50 = vector.extract_strided_slice %23 {offsets = [1, 0, 0], sizes = [1, 8, 8], strides = [1, 1, 1]} : vector<4x8x8xf32> to vector<1x8x8xf32>
    %51 = vector.shape_cast %50 : vector<1x8x8xf32> to vector<8x8xf32>
    %52 = arith.addf %49, %51 : vector<8x8xf32>
    %53 = vector.broadcast %1 : vector<1x8xf32> to vector<8x8xf32>
    %54 = arith.addf %52, %53 : vector<8x8xf32>
    %cst_23 = arith.constant dense<0xFF800000> : vector<8xf32>
    %55 = vector.multi_reduction <maximumf>, %54, %cst_23 [1] : vector<8x8xf32> to vector<8xf32>
    %56 = vector.shape_cast %55 : vector<8xf32> to vector<8x1xf32>
    %57 = vector.broadcast %56 : vector<8x1xf32> to vector<8x8xf32>
    %58 = arith.subf %54, %57 : vector<8x8xf32>
    %59 = math.exp %58 : vector<8x8xf32>
    %cst_24 = arith.constant dense<0.000000e+00> : vector<8xf32>
    %60 = vector.multi_reduction <add>, %59, %cst_24 [1] : vector<8x8xf32> to vector<8xf32>
    %61 = vector.shape_cast %60 : vector<8xf32> to vector<8x1xf32>
    %62 = tpu.reciprocal %61 {approx = true} : vector<8x1xf32> -> vector<8x1xf32>
    %63 = vector.broadcast %62 : vector<8x1xf32> to vector<8x8xf32>
    %64 = arith.mulf %59, %63 : vector<8x8xf32>
    %cst_25 = arith.constant dense<0.000000e+00> : vector<8x8xf32>
    %65 = tpu.matmul %64, %48, %cst_25 {dimension_numbers = #tpu.dot_dimension_numbers<[1], [0], [0], [1], [0, 0, 1, 1], [], []>} : vector<8x8xf32>, vector<8x8xf32>, vector<8x8xf32> -> vector<8x8xf32>
    %66 = vector.extract_strided_slice %22 {offsets = [8, 0], sizes = [8, 32], strides = [1, 1]} : vector<32x32xf32> to vector<8x32xf32>
    %cst_26 = arith.constant dense<0.000000e+00> : vector<8x32xf32>
    %67 = tpu.matmul %65, %66, %cst_26 {dimension_numbers = #tpu.dot_dimension_numbers<[1], [0], [0], [1], [0, 0, 1, 1], [], []>} : vector<8x8xf32>, vector<8x32xf32>, vector<8x32xf32> -> vector<8x32xf32>
    %68 = arith.addf %45, %67 : vector<8x32xf32>
    %69 = vector.extract_strided_slice %19 {offsets = [0, 16], sizes = [8, 8], strides = [1, 1]} : vector<8x32xf32> to vector<8x8xf32>
    %70 = vector.extract_strided_slice %20 {offsets = [0, 16], sizes = [8, 8], strides = [1, 1]} : vector<8x32xf32> to vector<8x8xf32>
    %71 = vector.extract_strided_slice %21 {offsets = [0, 16], sizes = [8, 8], strides = [1, 1]} : vector<8x32xf32> to vector<8x8xf32>
    %cst_27 = arith.constant dense<0.000000e+00> : vector<8x8xf32>
    %72 = tpu.matmul %69, %70, %cst_27 {dimension_numbers = #tpu.dot_dimension_numbers<[1], [1], [0], [0], [0, 0, 1, 0], [], []>} : vector<8x8xf32>, vector<8x8xf32>, vector<8x8xf32> -> vector<8x8xf32>
    %73 = vector.extract_strided_slice %23 {offsets = [2, 0, 0], sizes = [1, 8, 8], strides = [1, 1, 1]} : vector<4x8x8xf32> to vector<1x8x8xf32>
    %74 = vector.shape_cast %73 : vector<1x8x8xf32> to vector<8x8xf32>
    %75 = arith.addf %72, %74 : vector<8x8xf32>
    %76 = vector.broadcast %1 : vector<1x8xf32> to vector<8x8xf32>
    %77 = arith.addf %75, %76 : vector<8x8xf32>
    %cst_28 = arith.constant dense<0xFF800000> : vector<8xf32>
    %78 = vector.multi_reduction <maximumf>, %77, %cst_28 [1] : vector<8x8xf32> to vector<8xf32>
    %79 = vector.shape_cast %78 : vector<8xf32> to vector<8x1xf32>
    %80 = vector.broadcast %79 : vector<8x1xf32> to vector<8x8xf32>
    %81 = arith.subf %77, %80 : vector<8x8xf32>
    %82 = math.exp %81 : vector<8x8xf32>
    %cst_29 = arith.constant dense<0.000000e+00> : vector<8xf32>
    %83 = vector.multi_reduction <add>, %82, %cst_29 [1] : vector<8x8xf32> to vector<8xf32>
    %84 = vector.shape_cast %83 : vector<8xf32> to vector<8x1xf32>
    %85 = tpu.reciprocal %84 {approx = true} : vector<8x1xf32> -> vector<8x1xf32>
    %86 = vector.broadcast %85 : vector<8x1xf32> to vector<8x8xf32>
    %87 = arith.mulf %82, %86 : vector<8x8xf32>
    %cst_30 = arith.constant dense<0.000000e+00> : vector<8x8xf32>
    %88 = tpu.matmul %87, %71, %cst_30 {dimension_numbers = #tpu.dot_dimension_numbers<[1], [0], [0], [1], [0, 0, 1, 1], [], []>} : vector<8x8xf32>, vector<8x8xf32>, vector<8x8xf32> -> vector<8x8xf32>
    %89 = vector.extract_strided_slice %22 {offsets = [16, 0], sizes = [8, 32], strides = [1, 1]} : vector<32x32xf32> to vector<8x32xf32>
    %cst_31 = arith.constant dense<0.000000e+00> : vector<8x32xf32>
    %90 = tpu.matmul %88, %89, %cst_31 {dimension_numbers = #tpu.dot_dimension_numbers<[1], [0], [0], [1], [0, 0, 1, 1], [], []>} : vector<8x8xf32>, vector<8x32xf32>, vector<8x32xf32> -> vector<8x32xf32>
    %91 = arith.addf %68, %90 : vector<8x32xf32>
    %92 = vector.extract_strided_slice %19 {offsets = [0, 24], sizes = [8, 8], strides = [1, 1]} : vector<8x32xf32> to vector<8x8xf32>
    %93 = vector.extract_strided_slice %20 {offsets = [0, 24], sizes = [8, 8], strides = [1, 1]} : vector<8x32xf32> to vector<8x8xf32>
    %94 = vector.extract_strided_slice %21 {offsets = [0, 24], sizes = [8, 8], strides = [1, 1]} : vector<8x32xf32> to vector<8x8xf32>
    %cst_32 = arith.constant dense<0.000000e+00> : vector<8x8xf32>
    %95 = tpu.matmul %92, %93, %cst_32 {dimension_numbers = #tpu.dot_dimension_numbers<[1], [1], [0], [0], [0, 0, 1, 0], [], []>} : vector<8x8xf32>, vector<8x8xf32>, vector<8x8xf32> -> vector<8x8xf32>
    %96 = vector.extract_strided_slice %23 {offsets = [3, 0, 0], sizes = [1, 8, 8], strides = [1, 1, 1]} : vector<4x8x8xf32> to vector<1x8x8xf32>
    %97 = vector.shape_cast %96 : vector<1x8x8xf32> to vector<8x8xf32>
    %98 = arith.addf %95, %97 : vector<8x8xf32>
    %99 = vector.broadcast %1 : vector<1x8xf32> to vector<8x8xf32>
    %100 = arith.addf %98, %99 : vector<8x8xf32>
    %cst_33 = arith.constant dense<0xFF800000> : vector<8xf32>
    %101 = vector.multi_reduction <maximumf>, %100, %cst_33 [1] : vector<8x8xf32> to vector<8xf32>
    %102 = vector.shape_cast %101 : vector<8xf32> to vector<8x1xf32>
    %103 = vector.broadcast %102 : vector<8x1xf32> to vector<8x8xf32>
    %104 = arith.subf %100, %103 : vector<8x8xf32>
    %105 = math.exp %104 : vector<8x8xf32>
    %cst_34 = arith.constant dense<0.000000e+00> : vector<8xf32>
    %106 = vector.multi_reduction <add>, %105, %cst_34 [1] : vector<8x8xf32> to vector<8xf32>
    %107 = vector.shape_cast %106 : vector<8xf32> to vector<8x1xf32>
    %108 = tpu.reciprocal %107 {approx = true} : vector<8x1xf32> -> vector<8x1xf32>
    %109 = vector.broadcast %108 : vector<8x1xf32> to vector<8x8xf32>
    %110 = arith.mulf %105, %109 : vector<8x8xf32>
    %cst_35 = arith.constant dense<0.000000e+00> : vector<8x8xf32>
    %111 = tpu.matmul %110, %94, %cst_35 {dimension_numbers = #tpu.dot_dimension_numbers<[1], [0], [0], [1], [0, 0, 1, 1], [], []>} : vector<8x8xf32>, vector<8x8xf32>, vector<8x8xf32> -> vector<8x8xf32>
    %112 = vector.extract_strided_slice %22 {offsets = [24, 0], sizes = [8, 32], strides = [1, 1]} : vector<32x32xf32> to vector<8x32xf32>
    %cst_36 = arith.constant dense<0.000000e+00> : vector<8x32xf32>
    %113 = tpu.matmul %111, %112, %cst_36 {dimension_numbers = #tpu.dot_dimension_numbers<[1], [0], [0], [1], [0, 0, 1, 1], [], []>} : vector<8x8xf32>, vector<8x32xf32>, vector<8x32xf32> -> vector<8x32xf32>
    %114 = arith.addf %91, %113 : vector<8x32xf32>
    %115 = arith.addf %3, %114 : vector<8x32xf32>
    %c0_37 = arith.constant 0 : index
    %c0_38 = arith.constant 0 : index
    %116 = vector.load %arg10[%c0_37, %c0_38] : memref<1x32xf32, #tpu.memory_space<vmem>>, vector<1x32xf32>
    %117 = arith.mulf %115, %115 : vector<8x32xf32>
    %cst_39 = arith.constant dense<0.000000e+00> : vector<8xf32>
    %118 = vector.multi_reduction <add>, %117, %cst_39 [1] : vector<8x32xf32> to vector<8xf32>
    %119 = vector.shape_cast %118 : vector<8xf32> to vector<8x1xf32>
    %cst_40 = arith.constant 3.200000e+01 : f32
    %120 = vector.broadcast %cst_40 : f32 to vector<8x1xf32>
    %121 = arith.divf %119, %120 : vector<8x1xf32>
    %cst_41 = arith.constant 9.99999997E-7 : f32
    %122 = vector.broadcast %cst_41 : f32 to vector<8x1xf32>
    %123 = arith.addf %121, %122 : vector<8x1xf32>
    %124 = math.rsqrt %123 : vector<8x1xf32>
    %125 = vector.broadcast %124 : vector<8x1xf32> to vector<8x32xf32>
    %126 = arith.mulf %115, %125 : vector<8x32xf32>
    %127 = vector.broadcast %116 : vector<1x32xf32> to vector<8x32xf32>
    %128 = arith.mulf %126, %127 : vector<8x32xf32>
    %c0_42 = arith.constant 0 : index
    %c0_43 = arith.constant 0 : index
    %129 = vector.load %arg11[%c0_42, %c0_43] : memref<32x64xf32, #tpu.memory_space<vmem>>, vector<32x64xf32>
    %cst_44 = arith.constant dense<0.000000e+00> : vector<8x64xf32>
    %130 = tpu.matmul %128, %129, %cst_44 {dimension_numbers = #tpu.dot_dimension_numbers<[1], [0], [0], [1], [0, 0, 1, 1], [], []>} : vector<8x32xf32>, vector<32x64xf32>, vector<8x64xf32> -> vector<8x64xf32>
    %cst_45 = arith.constant 0.000000e+00 : f32
    %131 = vector.broadcast %cst_45 : f32 to vector<8x64xf32>
    %132 = arith.maximumf %130, %131 : vector<8x64xf32>
    %c0_46 = arith.constant 0 : index
    %c0_47 = arith.constant 0 : index
    %133 = vector.load %arg12[%c0_46, %c0_47] : memref<64x32xf32, #tpu.memory_space<vmem>>, vector<64x32xf32>
    %cst_48 = arith.constant dense<0.000000e+00> : vector<8x32xf32>
    %134 = tpu.matmul %132, %133, %cst_48 {dimension_numbers = #tpu.dot_dimension_numbers<[1], [0], [0], [1], [0, 0, 1, 1], [], []>} : vector<8x64xf32>, vector<64x32xf32>, vector<8x32xf32> -> vector<8x32xf32>
    %135 = arith.addf %115, %134 : vector<8x32xf32>
    %c0_49 = arith.constant 0 : index
    %c0_50 = arith.constant 0 : index
    %136 = vector.load %arg13[%c0_49, %c0_50] : memref<1x32xf32, #tpu.memory_space<vmem>>, vector<1x32xf32>
    %137 = arith.mulf %135, %135 : vector<8x32xf32>
    %cst_51 = arith.constant dense<0.000000e+00> : vector<8xf32>
    %138 = vector.multi_reduction <add>, %137, %cst_51 [1] : vector<8x32xf32> to vector<8xf32>
    %139 = vector.shape_cast %138 : vector<8xf32> to vector<8x1xf32>
    %cst_52 = arith.constant 3.200000e+01 : f32
    %140 = vector.broadcast %cst_52 : f32 to vector<8x1xf32>
    %141 = arith.divf %139, %140 : vector<8x1xf32>
    %cst_53 = arith.constant 9.99999997E-7 : f32
    %142 = vector.broadcast %cst_53 : f32 to vector<8x1xf32>
    %143 = arith.addf %141, %142 : vector<8x1xf32>
    %144 = math.rsqrt %143 : vector<8x1xf32>
    %145 = vector.broadcast %144 : vector<8x1xf32> to vector<8x32xf32>
    %146 = arith.mulf %135, %145 : vector<8x32xf32>
    %147 = vector.broadcast %136 : vector<1x32xf32> to vector<8x32xf32>
    %148 = arith.mulf %146, %147 : vector<8x32xf32>
    %c0_54 = arith.constant 0 : index
    %c0_55 = arith.constant 0 : index
    %c0_56 = arith.constant 0 : index
    %149 = vector.load %arg2[%c0_54, %c0_55, %c0_56] : memref<1x8x32xf32, #tpu.memory_space<vmem>>, vector<1x8x32xf32>
    %150 = vector.shape_cast %149 : vector<1x8x32xf32> to vector<8x32xf32>
    %c0_57 = arith.constant 0 : index
    %c0_58 = arith.constant 0 : index
    %151 = vector.load %arg14[%c0_57, %c0_58] : memref<1x32xf32, #tpu.memory_space<vmem>>, vector<1x32xf32>
    %152 = arith.mulf %150, %150 : vector<8x32xf32>
    %cst_59 = arith.constant dense<0.000000e+00> : vector<8xf32>
    %153 = vector.multi_reduction <add>, %152, %cst_59 [1] : vector<8x32xf32> to vector<8xf32>
    %154 = vector.shape_cast %153 : vector<8xf32> to vector<8x1xf32>
    %cst_60 = arith.constant 3.200000e+01 : f32
    %155 = vector.broadcast %cst_60 : f32 to vector<8x1xf32>
    %156 = arith.divf %154, %155 : vector<8x1xf32>
    %cst_61 = arith.constant 9.99999997E-7 : f32
    %157 = vector.broadcast %cst_61 : f32 to vector<8x1xf32>
    %158 = arith.addf %156, %157 : vector<8x1xf32>
    %159 = math.rsqrt %158 : vector<8x1xf32>
    %160 = vector.broadcast %159 : vector<8x1xf32> to vector<8x32xf32>
    %161 = arith.mulf %150, %160 : vector<8x32xf32>
    %162 = vector.broadcast %151 : vector<1x32xf32> to vector<8x32xf32>
    %163 = arith.mulf %161, %162 : vector<8x32xf32>
    %c0_62 = arith.constant 0 : index
    %c0_63 = arith.constant 0 : index
    %164 = vector.load %arg15[%c0_62, %c0_63] : memref<32x96xf32, #tpu.memory_space<vmem>>, vector<32x96xf32>
    %cst_64 = arith.constant dense<0.000000e+00> : vector<8x96xf32>
    %165 = tpu.matmul %163, %164, %cst_64 {dimension_numbers = #tpu.dot_dimension_numbers<[1], [0], [0], [1], [0, 0, 1, 1], [], []>} : vector<8x32xf32>, vector<32x96xf32>, vector<8x96xf32> -> vector<8x96xf32>
    %166 = vector.extract_strided_slice %165 {offsets = [0, 0], sizes = [8, 32], strides = [1, 1]} : vector<8x96xf32> to vector<8x32xf32>
    %167 = vector.extract_strided_slice %165 {offsets = [0, 32], sizes = [8, 32], strides = [1, 1]} : vector<8x96xf32> to vector<8x32xf32>
    %168 = vector.extract_strided_slice %165 {offsets = [0, 64], sizes = [8, 32], strides = [1, 1]} : vector<8x96xf32> to vector<8x32xf32>
    %c0_65 = arith.constant 0 : index
    %c0_66 = arith.constant 0 : index
    %169 = vector.load %arg16[%c0_65, %c0_66] : memref<32x32xf32, #tpu.memory_space<vmem>>, vector<32x32xf32>
    %c0_67 = arith.constant 0 : index
    %c0_68 = arith.constant 0 : index
    %c0_69 = arith.constant 0 : index
    %170 = vector.load %arg5[%c0_67, %c0_68, %c0_69] : memref<4x8x8xf32, #tpu.memory_space<vmem>>, vector<4x8x8xf32>
    %171 = vector.extract_strided_slice %166 {offsets = [0, 0], sizes = [8, 8], strides = [1, 1]} : vector<8x32xf32> to vector<8x8xf32>
    %172 = vector.extract_strided_slice %167 {offsets = [0, 0], sizes = [8, 8], strides = [1, 1]} : vector<8x32xf32> to vector<8x8xf32>
    %173 = vector.extract_strided_slice %168 {offsets = [0, 0], sizes = [8, 8], strides = [1, 1]} : vector<8x32xf32> to vector<8x8xf32>
    %cst_70 = arith.constant dense<0.000000e+00> : vector<8x8xf32>
    %174 = tpu.matmul %171, %172, %cst_70 {dimension_numbers = #tpu.dot_dimension_numbers<[1], [1], [0], [0], [0, 0, 1, 0], [], []>} : vector<8x8xf32>, vector<8x8xf32>, vector<8x8xf32> -> vector<8x8xf32>
    %175 = vector.extract_strided_slice %170 {offsets = [0, 0, 0], sizes = [1, 8, 8], strides = [1, 1, 1]} : vector<4x8x8xf32> to vector<1x8x8xf32>
    %176 = vector.shape_cast %175 : vector<1x8x8xf32> to vector<8x8xf32>
    %177 = arith.addf %174, %176 : vector<8x8xf32>
    %cst_71 = arith.constant dense<0xFF800000> : vector<8xf32>
    %178 = vector.multi_reduction <maximumf>, %177, %cst_71 [1] : vector<8x8xf32> to vector<8xf32>
    %179 = vector.shape_cast %178 : vector<8xf32> to vector<8x1xf32>
    %180 = vector.broadcast %179 : vector<8x1xf32> to vector<8x8xf32>
    %181 = arith.subf %177, %180 : vector<8x8xf32>
    %182 = math.exp %181 : vector<8x8xf32>
    %cst_72 = arith.constant dense<0.000000e+00> : vector<8xf32>
    %183 = vector.multi_reduction <add>, %182, %cst_72 [1] : vector<8x8xf32> to vector<8xf32>
    %184 = vector.shape_cast %183 : vector<8xf32> to vector<8x1xf32>
    %185 = tpu.reciprocal %184 {approx = true} : vector<8x1xf32> -> vector<8x1xf32>
    %186 = vector.broadcast %185 : vector<8x1xf32> to vector<8x8xf32>
    %187 = arith.mulf %182, %186 : vector<8x8xf32>
    %cst_73 = arith.constant dense<0.000000e+00> : vector<8x8xf32>
    %188 = tpu.matmul %187, %173, %cst_73 {dimension_numbers = #tpu.dot_dimension_numbers<[1], [0], [0], [1], [0, 0, 1, 1], [], []>} : vector<8x8xf32>, vector<8x8xf32>, vector<8x8xf32> -> vector<8x8xf32>
    %189 = vector.extract_strided_slice %169 {offsets = [0, 0], sizes = [8, 32], strides = [1, 1]} : vector<32x32xf32> to vector<8x32xf32>
    %cst_74 = arith.constant dense<0.000000e+00> : vector<8x32xf32>
    %190 = tpu.matmul %188, %189, %cst_74 {dimension_numbers = #tpu.dot_dimension_numbers<[1], [0], [0], [1], [0, 0, 1, 1], [], []>} : vector<8x8xf32>, vector<8x32xf32>, vector<8x32xf32> -> vector<8x32xf32>
    %191 = vector.extract_strided_slice %166 {offsets = [0, 8], sizes = [8, 8], strides = [1, 1]} : vector<8x32xf32> to vector<8x8xf32>
    %192 = vector.extract_strided_slice %167 {offsets = [0, 8], sizes = [8, 8], strides = [1, 1]} : vector<8x32xf32> to vector<8x8xf32>
    %193 = vector.extract_strided_slice %168 {offsets = [0, 8], sizes = [8, 8], strides = [1, 1]} : vector<8x32xf32> to vector<8x8xf32>
    %cst_75 = arith.constant dense<0.000000e+00> : vector<8x8xf32>
    %194 = tpu.matmul %191, %192, %cst_75 {dimension_numbers = #tpu.dot_dimension_numbers<[1], [1], [0], [0], [0, 0, 1, 0], [], []>} : vector<8x8xf32>, vector<8x8xf32>, vector<8x8xf32> -> vector<8x8xf32>
    %195 = vector.extract_strided_slice %170 {offsets = [1, 0, 0], sizes = [1, 8, 8], strides = [1, 1, 1]} : vector<4x8x8xf32> to vector<1x8x8xf32>
    %196 = vector.shape_cast %195 : vector<1x8x8xf32> to vector<8x8xf32>
    %197 = arith.addf %194, %196 : vector<8x8xf32>
    %cst_76 = arith.constant dense<0xFF800000> : vector<8xf32>
    %198 = vector.multi_reduction <maximumf>, %197, %cst_76 [1] : vector<8x8xf32> to vector<8xf32>
    %199 = vector.shape_cast %198 : vector<8xf32> to vector<8x1xf32>
    %200 = vector.broadcast %199 : vector<8x1xf32> to vector<8x8xf32>
    %201 = arith.subf %197, %200 : vector<8x8xf32>
    %202 = math.exp %201 : vector<8x8xf32>
    %cst_77 = arith.constant dense<0.000000e+00> : vector<8xf32>
    %203 = vector.multi_reduction <add>, %202, %cst_77 [1] : vector<8x8xf32> to vector<8xf32>
    %204 = vector.shape_cast %203 : vector<8xf32> to vector<8x1xf32>
    %205 = tpu.reciprocal %204 {approx = true} : vector<8x1xf32> -> vector<8x1xf32>
    %206 = vector.broadcast %205 : vector<8x1xf32> to vector<8x8xf32>
    %207 = arith.mulf %202, %206 : vector<8x8xf32>
    %cst_78 = arith.constant dense<0.000000e+00> : vector<8x8xf32>
    %208 = tpu.matmul %207, %193, %cst_78 {dimension_numbers = #tpu.dot_dimension_numbers<[1], [0], [0], [1], [0, 0, 1, 1], [], []>} : vector<8x8xf32>, vector<8x8xf32>, vector<8x8xf32> -> vector<8x8xf32>
    %209 = vector.extract_strided_slice %169 {offsets = [8, 0], sizes = [8, 32], strides = [1, 1]} : vector<32x32xf32> to vector<8x32xf32>
    %cst_79 = arith.constant dense<0.000000e+00> : vector<8x32xf32>
    %210 = tpu.matmul %208, %209, %cst_79 {dimension_numbers = #tpu.dot_dimension_numbers<[1], [0], [0], [1], [0, 0, 1, 1], [], []>} : vector<8x8xf32>, vector<8x32xf32>, vector<8x32xf32> -> vector<8x32xf32>
    %211 = arith.addf %190, %210 : vector<8x32xf32>
    %212 = vector.extract_strided_slice %166 {offsets = [0, 16], sizes = [8, 8], strides = [1, 1]} : vector<8x32xf32> to vector<8x8xf32>
    %213 = vector.extract_strided_slice %167 {offsets = [0, 16], sizes = [8, 8], strides = [1, 1]} : vector<8x32xf32> to vector<8x8xf32>
    %214 = vector.extract_strided_slice %168 {offsets = [0, 16], sizes = [8, 8], strides = [1, 1]} : vector<8x32xf32> to vector<8x8xf32>
    %cst_80 = arith.constant dense<0.000000e+00> : vector<8x8xf32>
    %215 = tpu.matmul %212, %213, %cst_80 {dimension_numbers = #tpu.dot_dimension_numbers<[1], [1], [0], [0], [0, 0, 1, 0], [], []>} : vector<8x8xf32>, vector<8x8xf32>, vector<8x8xf32> -> vector<8x8xf32>
    %216 = vector.extract_strided_slice %170 {offsets = [2, 0, 0], sizes = [1, 8, 8], strides = [1, 1, 1]} : vector<4x8x8xf32> to vector<1x8x8xf32>
    %217 = vector.shape_cast %216 : vector<1x8x8xf32> to vector<8x8xf32>
    %218 = arith.addf %215, %217 : vector<8x8xf32>
    %cst_81 = arith.constant dense<0xFF800000> : vector<8xf32>
    %219 = vector.multi_reduction <maximumf>, %218, %cst_81 [1] : vector<8x8xf32> to vector<8xf32>
    %220 = vector.shape_cast %219 : vector<8xf32> to vector<8x1xf32>
    %221 = vector.broadcast %220 : vector<8x1xf32> to vector<8x8xf32>
    %222 = arith.subf %218, %221 : vector<8x8xf32>
    %223 = math.exp %222 : vector<8x8xf32>
    %cst_82 = arith.constant dense<0.000000e+00> : vector<8xf32>
    %224 = vector.multi_reduction <add>, %223, %cst_82 [1] : vector<8x8xf32> to vector<8xf32>
    %225 = vector.shape_cast %224 : vector<8xf32> to vector<8x1xf32>
    %226 = tpu.reciprocal %225 {approx = true} : vector<8x1xf32> -> vector<8x1xf32>
    %227 = vector.broadcast %226 : vector<8x1xf32> to vector<8x8xf32>
    %228 = arith.mulf %223, %227 : vector<8x8xf32>
    %cst_83 = arith.constant dense<0.000000e+00> : vector<8x8xf32>
    %229 = tpu.matmul %228, %214, %cst_83 {dimension_numbers = #tpu.dot_dimension_numbers<[1], [0], [0], [1], [0, 0, 1, 1], [], []>} : vector<8x8xf32>, vector<8x8xf32>, vector<8x8xf32> -> vector<8x8xf32>
    %230 = vector.extract_strided_slice %169 {offsets = [16, 0], sizes = [8, 32], strides = [1, 1]} : vector<32x32xf32> to vector<8x32xf32>
    %cst_84 = arith.constant dense<0.000000e+00> : vector<8x32xf32>
    %231 = tpu.matmul %229, %230, %cst_84 {dimension_numbers = #tpu.dot_dimension_numbers<[1], [0], [0], [1], [0, 0, 1, 1], [], []>} : vector<8x8xf32>, vector<8x32xf32>, vector<8x32xf32> -> vector<8x32xf32>
    %232 = arith.addf %211, %231 : vector<8x32xf32>
    %233 = vector.extract_strided_slice %166 {offsets = [0, 24], sizes = [8, 8], strides = [1, 1]} : vector<8x32xf32> to vector<8x8xf32>
    %234 = vector.extract_strided_slice %167 {offsets = [0, 24], sizes = [8, 8], strides = [1, 1]} : vector<8x32xf32> to vector<8x8xf32>
    %235 = vector.extract_strided_slice %168 {offsets = [0, 24], sizes = [8, 8], strides = [1, 1]} : vector<8x32xf32> to vector<8x8xf32>
    %cst_85 = arith.constant dense<0.000000e+00> : vector<8x8xf32>
    %236 = tpu.matmul %233, %234, %cst_85 {dimension_numbers = #tpu.dot_dimension_numbers<[1], [1], [0], [0], [0, 0, 1, 0], [], []>} : vector<8x8xf32>, vector<8x8xf32>, vector<8x8xf32> -> vector<8x8xf32>
    %237 = vector.extract_strided_slice %170 {offsets = [3, 0, 0], sizes = [1, 8, 8], strides = [1, 1, 1]} : vector<4x8x8xf32> to vector<1x8x8xf32>
    %238 = vector.shape_cast %237 : vector<1x8x8xf32> to vector<8x8xf32>
    %239 = arith.addf %236, %238 : vector<8x8xf32>
    %cst_86 = arith.constant dense<0xFF800000> : vector<8xf32>
    %240 = vector.multi_reduction <maximumf>, %239, %cst_86 [1] : vector<8x8xf32> to vector<8xf32>
    %241 = vector.shape_cast %240 : vector<8xf32> to vector<8x1xf32>
    %242 = vector.broadcast %241 : vector<8x1xf32> to vector<8x8xf32>
    %243 = arith.subf %239, %242 : vector<8x8xf32>
    %244 = math.exp %243 : vector<8x8xf32>
    %cst_87 = arith.constant dense<0.000000e+00> : vector<8xf32>
    %245 = vector.multi_reduction <add>, %244, %cst_87 [1] : vector<8x8xf32> to vector<8xf32>
    %246 = vector.shape_cast %245 : vector<8xf32> to vector<8x1xf32>
    %247 = tpu.reciprocal %246 {approx = true} : vector<8x1xf32> -> vector<8x1xf32>
    %248 = vector.broadcast %247 : vector<8x1xf32> to vector<8x8xf32>
    %249 = arith.mulf %244, %248 : vector<8x8xf32>
    %cst_88 = arith.constant dense<0.000000e+00> : vector<8x8xf32>
    %250 = tpu.matmul %249, %235, %cst_88 {dimension_numbers = #tpu.dot_dimension_numbers<[1], [0], [0], [1], [0, 0, 1, 1], [], []>} : vector<8x8xf32>, vector<8x8xf32>, vector<8x8xf32> -> vector<8x8xf32>
    %251 = vector.extract_strided_slice %169 {offsets = [24, 0], sizes = [8, 32], strides = [1, 1]} : vector<32x32xf32> to vector<8x32xf32>
    %cst_89 = arith.constant dense<0.000000e+00> : vector<8x32xf32>
    %252 = tpu.matmul %250, %251, %cst_89 {dimension_numbers = #tpu.dot_dimension_numbers<[1], [0], [0], [1], [0, 0, 1, 1], [], []>} : vector<8x8xf32>, vector<8x32xf32>, vector<8x32xf32> -> vector<8x32xf32>
    %253 = arith.addf %232, %252 : vector<8x32xf32>
    %254 = arith.addf %150, %253 : vector<8x32xf32>
    %c0_90 = arith.constant 0 : index
    %c0_91 = arith.constant 0 : index
    %255 = vector.load %arg17[%c0_90, %c0_91] : memref<1x32xf32, #tpu.memory_space<vmem>>, vector<1x32xf32>
    %256 = arith.mulf %254, %254 : vector<8x32xf32>
    %cst_92 = arith.constant dense<0.000000e+00> : vector<8xf32>
    %257 = vector.multi_reduction <add>, %256, %cst_92 [1] : vector<8x32xf32> to vector<8xf32>
    %258 = vector.shape_cast %257 : vector<8xf32> to vector<8x1xf32>
    %cst_93 = arith.constant 3.200000e+01 : f32
    %259 = vector.broadcast %cst_93 : f32 to vector<8x1xf32>
    %260 = arith.divf %258, %259 : vector<8x1xf32>
    %cst_94 = arith.constant 9.99999997E-7 : f32
    %261 = vector.broadcast %cst_94 : f32 to vector<8x1xf32>
    %262 = arith.addf %260, %261 : vector<8x1xf32>
    %263 = math.rsqrt %262 : vector<8x1xf32>
    %264 = vector.broadcast %263 : vector<8x1xf32> to vector<8x32xf32>
    %265 = arith.mulf %254, %264 : vector<8x32xf32>
    %266 = vector.broadcast %255 : vector<1x32xf32> to vector<8x32xf32>
    %267 = arith.mulf %265, %266 : vector<8x32xf32>
    %c0_95 = arith.constant 0 : index
    %c0_96 = arith.constant 0 : index
    %268 = vector.load %arg18[%c0_95, %c0_96] : memref<32x32xf32, #tpu.memory_space<vmem>>, vector<32x32xf32>
    %cst_97 = arith.constant dense<0.000000e+00> : vector<8x32xf32>
    %269 = tpu.matmul %267, %268, %cst_97 {dimension_numbers = #tpu.dot_dimension_numbers<[1], [0], [0], [1], [0, 0, 1, 1], [], []>} : vector<8x32xf32>, vector<32x32xf32>, vector<8x32xf32> -> vector<8x32xf32>
    %c0_98 = arith.constant 0 : index
    %c0_99 = arith.constant 0 : index
    %270 = vector.load %arg19[%c0_98, %c0_99] : memref<32x64xf32, #tpu.memory_space<vmem>>, vector<32x64xf32>
    %cst_100 = arith.constant dense<0.000000e+00> : vector<8x64xf32>
    %271 = tpu.matmul %148, %270, %cst_100 {dimension_numbers = #tpu.dot_dimension_numbers<[1], [0], [0], [1], [0, 0, 1, 1], [], []>} : vector<8x32xf32>, vector<32x64xf32>, vector<8x64xf32> -> vector<8x64xf32>
    %272 = vector.extract_strided_slice %271 {offsets = [0, 0], sizes = [8, 32], strides = [1, 1]} : vector<8x64xf32> to vector<8x32xf32>
    %273 = vector.extract_strided_slice %271 {offsets = [0, 32], sizes = [8, 32], strides = [1, 1]} : vector<8x64xf32> to vector<8x32xf32>
    %c0_101 = arith.constant 0 : index
    %c0_102 = arith.constant 0 : index
    %274 = vector.load %arg20[%c0_101, %c0_102] : memref<32x32xf32, #tpu.memory_space<vmem>>, vector<32x32xf32>
    %275 = vector.extract_strided_slice %269 {offsets = [0, 0], sizes = [8, 8], strides = [1, 1]} : vector<8x32xf32> to vector<8x8xf32>
    %276 = vector.extract_strided_slice %272 {offsets = [0, 0], sizes = [8, 8], strides = [1, 1]} : vector<8x32xf32> to vector<8x8xf32>
    %277 = vector.extract_strided_slice %273 {offsets = [0, 0], sizes = [8, 8], strides = [1, 1]} : vector<8x32xf32> to vector<8x8xf32>
    %cst_103 = arith.constant dense<0.000000e+00> : vector<8x8xf32>
    %278 = tpu.matmul %275, %276, %cst_103 {dimension_numbers = #tpu.dot_dimension_numbers<[1], [1], [0], [0], [0, 0, 1, 0], [], []>} : vector<8x8xf32>, vector<8x8xf32>, vector<8x8xf32> -> vector<8x8xf32>
    %279 = vector.broadcast %1 : vector<1x8xf32> to vector<8x8xf32>
    %280 = arith.addf %278, %279 : vector<8x8xf32>
    %cst_104 = arith.constant dense<0xFF800000> : vector<8xf32>
    %281 = vector.multi_reduction <maximumf>, %280, %cst_104 [1] : vector<8x8xf32> to vector<8xf32>
    %282 = vector.shape_cast %281 : vector<8xf32> to vector<8x1xf32>
    %283 = vector.broadcast %282 : vector<8x1xf32> to vector<8x8xf32>
    %284 = arith.subf %280, %283 : vector<8x8xf32>
    %285 = math.exp %284 : vector<8x8xf32>
    %cst_105 = arith.constant dense<0.000000e+00> : vector<8xf32>
    %286 = vector.multi_reduction <add>, %285, %cst_105 [1] : vector<8x8xf32> to vector<8xf32>
    %287 = vector.shape_cast %286 : vector<8xf32> to vector<8x1xf32>
    %288 = tpu.reciprocal %287 {approx = true} : vector<8x1xf32> -> vector<8x1xf32>
    %289 = vector.broadcast %288 : vector<8x1xf32> to vector<8x8xf32>
    %290 = arith.mulf %285, %289 : vector<8x8xf32>
    %cst_106 = arith.constant dense<0.000000e+00> : vector<8x8xf32>
    %291 = tpu.matmul %290, %277, %cst_106 {dimension_numbers = #tpu.dot_dimension_numbers<[1], [0], [0], [1], [0, 0, 1, 1], [], []>} : vector<8x8xf32>, vector<8x8xf32>, vector<8x8xf32> -> vector<8x8xf32>
    %292 = vector.extract_strided_slice %274 {offsets = [0, 0], sizes = [8, 32], strides = [1, 1]} : vector<32x32xf32> to vector<8x32xf32>
    %cst_107 = arith.constant dense<0.000000e+00> : vector<8x32xf32>
    %293 = tpu.matmul %291, %292, %cst_107 {dimension_numbers = #tpu.dot_dimension_numbers<[1], [0], [0], [1], [0, 0, 1, 1], [], []>} : vector<8x8xf32>, vector<8x32xf32>, vector<8x32xf32> -> vector<8x32xf32>
    %294 = vector.extract_strided_slice %269 {offsets = [0, 8], sizes = [8, 8], strides = [1, 1]} : vector<8x32xf32> to vector<8x8xf32>
    %295 = vector.extract_strided_slice %272 {offsets = [0, 8], sizes = [8, 8], strides = [1, 1]} : vector<8x32xf32> to vector<8x8xf32>
    %296 = vector.extract_strided_slice %273 {offsets = [0, 8], sizes = [8, 8], strides = [1, 1]} : vector<8x32xf32> to vector<8x8xf32>
    %cst_108 = arith.constant dense<0.000000e+00> : vector<8x8xf32>
    %297 = tpu.matmul %294, %295, %cst_108 {dimension_numbers = #tpu.dot_dimension_numbers<[1], [1], [0], [0], [0, 0, 1, 0], [], []>} : vector<8x8xf32>, vector<8x8xf32>, vector<8x8xf32> -> vector<8x8xf32>
    %298 = vector.broadcast %1 : vector<1x8xf32> to vector<8x8xf32>
    %299 = arith.addf %297, %298 : vector<8x8xf32>
    %cst_109 = arith.constant dense<0xFF800000> : vector<8xf32>
    %300 = vector.multi_reduction <maximumf>, %299, %cst_109 [1] : vector<8x8xf32> to vector<8xf32>
    %301 = vector.shape_cast %300 : vector<8xf32> to vector<8x1xf32>
    %302 = vector.broadcast %301 : vector<8x1xf32> to vector<8x8xf32>
    %303 = arith.subf %299, %302 : vector<8x8xf32>
    %304 = math.exp %303 : vector<8x8xf32>
    %cst_110 = arith.constant dense<0.000000e+00> : vector<8xf32>
    %305 = vector.multi_reduction <add>, %304, %cst_110 [1] : vector<8x8xf32> to vector<8xf32>
    %306 = vector.shape_cast %305 : vector<8xf32> to vector<8x1xf32>
    %307 = tpu.reciprocal %306 {approx = true} : vector<8x1xf32> -> vector<8x1xf32>
    %308 = vector.broadcast %307 : vector<8x1xf32> to vector<8x8xf32>
    %309 = arith.mulf %304, %308 : vector<8x8xf32>
    %cst_111 = arith.constant dense<0.000000e+00> : vector<8x8xf32>
    %310 = tpu.matmul %309, %296, %cst_111 {dimension_numbers = #tpu.dot_dimension_numbers<[1], [0], [0], [1], [0, 0, 1, 1], [], []>} : vector<8x8xf32>, vector<8x8xf32>, vector<8x8xf32> -> vector<8x8xf32>
    %311 = vector.extract_strided_slice %274 {offsets = [8, 0], sizes = [8, 32], strides = [1, 1]} : vector<32x32xf32> to vector<8x32xf32>
    %cst_112 = arith.constant dense<0.000000e+00> : vector<8x32xf32>
    %312 = tpu.matmul %310, %311, %cst_112 {dimension_numbers = #tpu.dot_dimension_numbers<[1], [0], [0], [1], [0, 0, 1, 1], [], []>} : vector<8x8xf32>, vector<8x32xf32>, vector<8x32xf32> -> vector<8x32xf32>
    %313 = arith.addf %293, %312 : vector<8x32xf32>
    %314 = vector.extract_strided_slice %269 {offsets = [0, 16], sizes = [8, 8], strides = [1, 1]} : vector<8x32xf32> to vector<8x8xf32>
    %315 = vector.extract_strided_slice %272 {offsets = [0, 16], sizes = [8, 8], strides = [1, 1]} : vector<8x32xf32> to vector<8x8xf32>
    %316 = vector.extract_strided_slice %273 {offsets = [0, 16], sizes = [8, 8], strides = [1, 1]} : vector<8x32xf32> to vector<8x8xf32>
    %cst_113 = arith.constant dense<0.000000e+00> : vector<8x8xf32>
    %317 = tpu.matmul %314, %315, %cst_113 {dimension_numbers = #tpu.dot_dimension_numbers<[1], [1], [0], [0], [0, 0, 1, 0], [], []>} : vector<8x8xf32>, vector<8x8xf32>, vector<8x8xf32> -> vector<8x8xf32>
    %318 = vector.broadcast %1 : vector<1x8xf32> to vector<8x8xf32>
    %319 = arith.addf %317, %318 : vector<8x8xf32>
    %cst_114 = arith.constant dense<0xFF800000> : vector<8xf32>
    %320 = vector.multi_reduction <maximumf>, %319, %cst_114 [1] : vector<8x8xf32> to vector<8xf32>
    %321 = vector.shape_cast %320 : vector<8xf32> to vector<8x1xf32>
    %322 = vector.broadcast %321 : vector<8x1xf32> to vector<8x8xf32>
    %323 = arith.subf %319, %322 : vector<8x8xf32>
    %324 = math.exp %323 : vector<8x8xf32>
    %cst_115 = arith.constant dense<0.000000e+00> : vector<8xf32>
    %325 = vector.multi_reduction <add>, %324, %cst_115 [1] : vector<8x8xf32> to vector<8xf32>
    %326 = vector.shape_cast %325 : vector<8xf32> to vector<8x1xf32>
    %327 = tpu.reciprocal %326 {approx = true} : vector<8x1xf32> -> vector<8x1xf32>
    %328 = vector.broadcast %327 : vector<8x1xf32> to vector<8x8xf32>
    %329 = arith.mulf %324, %328 : vector<8x8xf32>
    %cst_116 = arith.constant dense<0.000000e+00> : vector<8x8xf32>
    %330 = tpu.matmul %329, %316, %cst_116 {dimension_numbers = #tpu.dot_dimension_numbers<[1], [0], [0], [1], [0, 0, 1, 1], [], []>} : vector<8x8xf32>, vector<8x8xf32>, vector<8x8xf32> -> vector<8x8xf32>
    %331 = vector.extract_strided_slice %274 {offsets = [16, 0], sizes = [8, 32], strides = [1, 1]} : vector<32x32xf32> to vector<8x32xf32>
    %cst_117 = arith.constant dense<0.000000e+00> : vector<8x32xf32>
    %332 = tpu.matmul %330, %331, %cst_117 {dimension_numbers = #tpu.dot_dimension_numbers<[1], [0], [0], [1], [0, 0, 1, 1], [], []>} : vector<8x8xf32>, vector<8x32xf32>, vector<8x32xf32> -> vector<8x32xf32>
    %333 = arith.addf %313, %332 : vector<8x32xf32>
    %334 = vector.extract_strided_slice %269 {offsets = [0, 24], sizes = [8, 8], strides = [1, 1]} : vector<8x32xf32> to vector<8x8xf32>
    %335 = vector.extract_strided_slice %272 {offsets = [0, 24], sizes = [8, 8], strides = [1, 1]} : vector<8x32xf32> to vector<8x8xf32>
    %336 = vector.extract_strided_slice %273 {offsets = [0, 24], sizes = [8, 8], strides = [1, 1]} : vector<8x32xf32> to vector<8x8xf32>
    %cst_118 = arith.constant dense<0.000000e+00> : vector<8x8xf32>
    %337 = tpu.matmul %334, %335, %cst_118 {dimension_numbers = #tpu.dot_dimension_numbers<[1], [1], [0], [0], [0, 0, 1, 0], [], []>} : vector<8x8xf32>, vector<8x8xf32>, vector<8x8xf32> -> vector<8x8xf32>
    %338 = vector.broadcast %1 : vector<1x8xf32> to vector<8x8xf32>
    %339 = arith.addf %337, %338 : vector<8x8xf32>
    %cst_119 = arith.constant dense<0xFF800000> : vector<8xf32>
    %340 = vector.multi_reduction <maximumf>, %339, %cst_119 [1] : vector<8x8xf32> to vector<8xf32>
    %341 = vector.shape_cast %340 : vector<8xf32> to vector<8x1xf32>
    %342 = vector.broadcast %341 : vector<8x1xf32> to vector<8x8xf32>
    %343 = arith.subf %339, %342 : vector<8x8xf32>
    %344 = math.exp %343 : vector<8x8xf32>
    %cst_120 = arith.constant dense<0.000000e+00> : vector<8xf32>
    %345 = vector.multi_reduction <add>, %344, %cst_120 [1] : vector<8x8xf32> to vector<8xf32>
    %346 = vector.shape_cast %345 : vector<8xf32> to vector<8x1xf32>
    %347 = tpu.reciprocal %346 {approx = true} : vector<8x1xf32> -> vector<8x1xf32>
    %348 = vector.broadcast %347 : vector<8x1xf32> to vector<8x8xf32>
    %349 = arith.mulf %344, %348 : vector<8x8xf32>
    %cst_121 = arith.constant dense<0.000000e+00> : vector<8x8xf32>
    %350 = tpu.matmul %349, %336, %cst_121 {dimension_numbers = #tpu.dot_dimension_numbers<[1], [0], [0], [1], [0, 0, 1, 1], [], []>} : vector<8x8xf32>, vector<8x8xf32>, vector<8x8xf32> -> vector<8x8xf32>
    %351 = vector.extract_strided_slice %274 {offsets = [24, 0], sizes = [8, 32], strides = [1, 1]} : vector<32x32xf32> to vector<8x32xf32>
    %cst_122 = arith.constant dense<0.000000e+00> : vector<8x32xf32>
    %352 = tpu.matmul %350, %351, %cst_122 {dimension_numbers = #tpu.dot_dimension_numbers<[1], [0], [0], [1], [0, 0, 1, 1], [], []>} : vector<8x8xf32>, vector<8x32xf32>, vector<8x32xf32> -> vector<8x32xf32>
    %353 = arith.addf %333, %352 : vector<8x32xf32>
    %354 = arith.addf %254, %353 : vector<8x32xf32>
    %c0_123 = arith.constant 0 : index
    %c0_124 = arith.constant 0 : index
    %355 = vector.load %arg21[%c0_123, %c0_124] : memref<1x32xf32, #tpu.memory_space<vmem>>, vector<1x32xf32>
    %356 = arith.mulf %354, %354 : vector<8x32xf32>
    %cst_125 = arith.constant dense<0.000000e+00> : vector<8xf32>
    %357 = vector.multi_reduction <add>, %356, %cst_125 [1] : vector<8x32xf32> to vector<8xf32>
    %358 = vector.shape_cast %357 : vector<8xf32> to vector<8x1xf32>
    %cst_126 = arith.constant 3.200000e+01 : f32
    %359 = vector.broadcast %cst_126 : f32 to vector<8x1xf32>
    %360 = arith.divf %358, %359 : vector<8x1xf32>
    %cst_127 = arith.constant 9.99999997E-7 : f32
    %361 = vector.broadcast %cst_127 : f32 to vector<8x1xf32>
    %362 = arith.addf %360, %361 : vector<8x1xf32>
    %363 = math.rsqrt %362 : vector<8x1xf32>
    %364 = vector.broadcast %363 : vector<8x1xf32> to vector<8x32xf32>
    %365 = arith.mulf %354, %364 : vector<8x32xf32>
    %366 = vector.broadcast %355 : vector<1x32xf32> to vector<8x32xf32>
    %367 = arith.mulf %365, %366 : vector<8x32xf32>
    %c0_128 = arith.constant 0 : index
    %c0_129 = arith.constant 0 : index
    %368 = vector.load %arg22[%c0_128, %c0_129] : memref<32x64xf32, #tpu.memory_space<vmem>>, vector<32x64xf32>
    %cst_130 = arith.constant dense<0.000000e+00> : vector<8x64xf32>
    %369 = tpu.matmul %367, %368, %cst_130 {dimension_numbers = #tpu.dot_dimension_numbers<[1], [0], [0], [1], [0, 0, 1, 1], [], []>} : vector<8x32xf32>, vector<32x64xf32>, vector<8x64xf32> -> vector<8x64xf32>
    %cst_131 = arith.constant 0.000000e+00 : f32
    %370 = vector.broadcast %cst_131 : f32 to vector<8x64xf32>
    %371 = arith.maximumf %369, %370 : vector<8x64xf32>
    %c0_132 = arith.constant 0 : index
    %c0_133 = arith.constant 0 : index
    %372 = vector.load %arg23[%c0_132, %c0_133] : memref<64x32xf32, #tpu.memory_space<vmem>>, vector<64x32xf32>
    %cst_134 = arith.constant dense<0.000000e+00> : vector<8x32xf32>
    %373 = tpu.matmul %371, %372, %cst_134 {dimension_numbers = #tpu.dot_dimension_numbers<[1], [0], [0], [1], [0, 0, 1, 1], [], []>} : vector<8x64xf32>, vector<64x32xf32>, vector<8x32xf32> -> vector<8x32xf32>
    %374 = arith.addf %354, %373 : vector<8x32xf32>
    %c0_135 = arith.constant 0 : index
    %c0_136 = arith.constant 0 : index
    %375 = vector.load %arg24[%c0_135, %c0_136] : memref<1x32xf32, #tpu.memory_space<vmem>>, vector<1x32xf32>
    %376 = arith.mulf %374, %374 : vector<8x32xf32>
    %cst_137 = arith.constant dense<0.000000e+00> : vector<8xf32>
    %377 = vector.multi_reduction <add>, %376, %cst_137 [1] : vector<8x32xf32> to vector<8xf32>
    %378 = vector.shape_cast %377 : vector<8xf32> to vector<8x1xf32>
    %cst_138 = arith.constant 3.200000e+01 : f32
    %379 = vector.broadcast %cst_138 : f32 to vector<8x1xf32>
    %380 = arith.divf %378, %379 : vector<8x1xf32>
    %cst_139 = arith.constant 9.99999997E-7 : f32
    %381 = vector.broadcast %cst_139 : f32 to vector<8x1xf32>
    %382 = arith.addf %380, %381 : vector<8x1xf32>
    %383 = math.rsqrt %382 : vector<8x1xf32>
    %384 = vector.broadcast %383 : vector<8x1xf32> to vector<8x32xf32>
    %385 = arith.mulf %374, %384 : vector<8x32xf32>
    %386 = vector.broadcast %375 : vector<1x32xf32> to vector<8x32xf32>
    %387 = arith.mulf %385, %386 : vector<8x32xf32>
    %c0_140 = arith.constant 0 : index
    %c0_141 = arith.constant 0 : index
    %388 = vector.load %arg25[%c0_140, %c0_141] : memref<32x256xf32, #tpu.memory_space<vmem>>, vector<32x256xf32>
    %cst_142 = arith.constant dense<0.000000e+00> : vector<8x256xf32>
    %389 = tpu.matmul %387, %388, %cst_142 {dimension_numbers = #tpu.dot_dimension_numbers<[1], [0], [0], [1], [0, 0, 1, 1], [], []>} : vector<8x32xf32>, vector<32x256xf32>, vector<8x256xf32> -> vector<8x256xf32>
    %c0_143 = arith.constant 0 : index
    %c0_144 = arith.constant 0 : index
    %c0_145 = arith.constant 0 : index
    %390 = vector.load %arg6[%c0_143, %c0_144, %c0_145] : memref<1x8x1xi32, #tpu.memory_space<vmem>>, vector<1x8x1xi32>
    %391 = vector.shape_cast %390 : vector<1x8x1xi32> to vector<8x1xi32>
    %cst_146 = arith.constant dense<0xFF800000> : vector<8xf32>
    %392 = vector.multi_reduction <maximumf>, %389, %cst_146 [1] : vector<8x256xf32> to vector<8xf32>
    %393 = vector.shape_cast %392 : vector<8xf32> to vector<8x1xf32>
    %394 = vector.broadcast %393 : vector<8x1xf32> to vector<8x256xf32>
    %395 = arith.subf %389, %394 : vector<8x256xf32>
    %396 = math.exp %395 : vector<8x256xf32>
    %cst_147 = arith.constant dense<0.000000e+00> : vector<8xf32>
    %397 = vector.multi_reduction <add>, %396, %cst_147 [1] : vector<8x256xf32> to vector<8xf32>
    %398 = vector.shape_cast %397 : vector<8xf32> to vector<8x1xf32>
    %399 = math.log %398 : vector<8x1xf32>
    %400 = vector.broadcast %399 : vector<8x1xf32> to vector<8x256xf32>
    %401 = arith.subf %395, %400 : vector<8x256xf32>
    %402 = tpu.iota {dimensions = array<i32: 1>} : vector<8x256xi32>
    %403 = vector.broadcast %391 : vector<8x1xi32> to vector<8x256xi32>
    %404 = arith.cmpi eq, %402, %403 : vector<8x256xi32>
    %405 = arith.extui %404 : vector<8x256xi1> to vector<8x256xi32>
    %406 = arith.sitofp %405 : vector<8x256xi32> to vector<8x256xf32>
    %407 = arith.mulf %401, %406 : vector<8x256xf32>
    %cst_148 = arith.constant dense<0.000000e+00> : vector<8xf32>
    %408 = vector.multi_reduction <add>, %407, %cst_148 [1] : vector<8x256xf32> to vector<8xf32>
    %409 = vector.shape_cast %408 : vector<8xf32> to vector<8x1xf32>
    %c-100_i32 = arith.constant -100 : i32
    %410 = vector.broadcast %c-100_i32 : i32 to vector<8x1xi32>
    %411 = arith.cmpi ne, %391, %410 : vector<8x1xi32>
    %412 = arith.extui %411 : vector<8x1xi1> to vector<8x1xi32>
    %413 = arith.sitofp %412 : vector<8x1xi32> to vector<8x1xf32>
    %cst_149 = arith.constant 0.000000e+00 : f32
    %414 = vector.broadcast %cst_149 : f32 to vector<8x1xf32>
    %415 = arith.subf %414, %409 : vector<8x1xf32>
    %416 = arith.mulf %415, %413 : vector<8x1xf32>
    %417 = vector.shape_cast %416 : vector<8x1xf32> to vector<1x8x1xf32>
    %cst_150 = arith.constant dense<0.000000e+00> : vector<1xf32>
    %418 = vector.multi_reduction <add>, %417, %cst_150 [1, 2] : vector<1x8x1xf32> to vector<1xf32>
    %419 = vector.shape_cast %418 : vector<1xf32> to vector<1x1x1xf32>
    %420 = vector.extract %419[0, 0, 0] : f32 from vector<1x1x1xf32>
    %421 = vector.broadcast %420 : f32 to vector<1x1x1xf32>
    %c0_151 = arith.constant 0 : index
    %c0_152 = arith.constant 0 : index
    %c0_153 = arith.constant 0 : index
    %422 = vector.load %arg26[%c0_151, %c0_152, %c0_153] : memref<1x1x1xf32, #tpu.memory_space<vmem>>, vector<1x1x1xf32>
    tpu.vector_store %arg26[%c0_151, %c0_152, %c0_153], %421 {strides = array<i32>} : memref<1x1x1xf32, #tpu.memory_space<vmem>>, vector<1x1x1xf32>,
    %423 = vector.shape_cast %413 : vector<8x1xf32> to vector<1x8x1xf32>
    %cst_154 = arith.constant dense<0.000000e+00> : vector<1xf32>
    %424 = vector.multi_reduction <add>, %423, %cst_154 [1, 2] : vector<1x8x1xf32> to vector<1xf32>
    %425 = vector.shape_cast %424 : vector<1xf32> to vector<1x1x1xf32>
    %426 = vector.extract %425[0, 0, 0] : f32 from vector<1x1x1xf32>
    %427 = vector.broadcast %426 : f32 to vector<1x1x1xf32>
    %c0_155 = arith.constant 0 : index
    %c0_156 = arith.constant 0 : index
    %c0_157 = arith.constant 0 : index
    %428 = vector.load %arg27[%c0_155, %c0_156, %c0_157] : memref<1x1x1xf32, #tpu.memory_space<vmem>>, vector<1x1x1xf32>
    tpu.vector_store %arg27[%c0_155, %c0_156, %c0_157], %427 {strides = array<i32>} : memref<1x1x1xf32, #tpu.memory_space<vmem>>, vector<1x1x1xf32>,
    return
  }
  func.func @transform_0(%arg0: i32) -> (i32, i32, i32) {
    %c0_i32 = arith.constant 0 : i32
    %c0_i32_0 = arith.constant 0 : i32
    %c0_i32_1 = arith.constant 0 : i32
    return %arg0, %c0_i32, %c0_i32_0 : i32, i32, i32
  }
  func.func @transform_1(%arg0: i32) -> (i32, i32, i32) {
    %c0_i32 = arith.constant 0 : i32
    %c0_i32_0 = arith.constant 0 : i32
    %c0_i32_1 = arith.constant 0 : i32
    return %arg0, %c0_i32, %c0_i32_0 : i32, i32, i32
  }
  func.func @transform_2(%arg0: i32) -> (i32, i32, i32) {
    %c0_i32 = arith.constant 0 : i32
    %c0_i32_0 = arith.constant 0 : i32
    %c0_i32_1 = arith.constant 0 : i32
    return %arg0, %c0_i32, %c0_i32_0 : i32, i32, i32
  }
  func.func @transform_3(%arg0: i32) -> (i32, i32, i32) {
    %c0_i32 = arith.constant 0 : i32
    %c0_i32_0 = arith.constant 0 : i32
    %c0_i32_1 = arith.constant 0 : i32
    %c0_i32_2 = arith.constant 0 : i32
    return %c0_i32, %c0_i32_0, %c0_i32_1 : i32, i32, i32
  }
  func.func @transform_4(%arg0: i32) -> (i32, i32, i32) {
    %c0_i32 = arith.constant 0 : i32
    %c0_i32_0 = arith.constant 0 : i32
    %c0_i32_1 = arith.constant 0 : i32
    %c0_i32_2 = arith.constant 0 : i32
    return %c0_i32, %c0_i32_0, %c0_i32_1 : i32, i32, i32
  }
  func.func @transform_5(%arg0: i32) -> (i32, i32, i32) {
    %c0_i32 = arith.constant 0 : i32
    %c0_i32_0 = arith.constant 0 : i32
    %c0_i32_1 = arith.constant 0 : i32
    return %arg0, %c0_i32, %c0_i32_0 : i32, i32, i32
  }
  func.func @transform_6(%arg0: i32) -> (i32, i32) {
    %c0_i32 = arith.constant 0 : i32
    %c0_i32_0 = arith.constant 0 : i32
    %c0_i32_1 = arith.constant 0 : i32
    return %c0_i32, %c0_i32_0 : i32, i32
  }
  func.func @transform_7(%arg0: i32) -> (i32, i32) {
    %c0_i32 = arith.constant 0 : i32
    %c0_i32_0 = arith.constant 0 : i32
    %c0_i32_1 = arith.constant 0 : i32
    return %c0_i32, %c0_i32_0 : i32, i32
  }
  func.func @transform_8(%arg0: i32) -> (i32, i32) {
    %c0_i32 = arith.constant 0 : i32
    %c0_i32_0 = arith.constant 0 : i32
    %c0_i32_1 = arith.constant 0 : i32
    return %c0_i32, %c0_i32_0 : i32, i32
  }
  func.func @transform_9(%arg0: i32) -> (i32, i32) {
    %c0_i32 = arith.constant 0 : i32
    %c0_i32_0 = arith.constant 0 : i32
    %c0_i32_1 = arith.constant 0 : i32
    return %c0_i32, %c0_i32_0 : i32, i32
  }
  func.func @transform_10(%arg0: i32) -> (i32, i32) {
    %c0_i32 = arith.constant 0 : i32
    %c0_i32_0 = arith.constant 0 : i32
    %c0_i32_1 = arith.constant 0 : i32
    return %c0_i32, %c0_i32_0 : i32, i32
  }
  func.func @transform_11(%arg0: i32) -> (i32, i32) {
    %c0_i32 = arith.constant 0 : i32
    %c0_i32_0 = arith.constant 0 : i32
    %c0_i32_1 = arith.constant 0 : i32
    return %c0_i32, %c0_i32_0 : i32, i32
  }
  func.func @transform_12(%arg0: i32) -> (i32, i32) {
    %c0_i32 = arith.constant 0 : i32
    %c0_i32_0 = arith.constant 0 : i32
    %c0_i32_1 = arith.constant 0 : i32
    return %c0_i32, %c0_i32_0 : i32, i32
  }
  func.func @transform_13(%arg0: i32) -> (i32, i32) {
    %c0_i32 = arith.constant 0 : i32
    %c0_i32_0 = arith.constant 0 : i32
    %c0_i32_1 = arith.constant 0 : i32
    return %c0_i32, %c0_i32_0 : i32, i32
  }
  func.func @transform_14(%arg0: i32) -> (i32, i32) {
    %c0_i32 = arith.constant 0 : i32
    %c0_i32_0 = arith.constant 0 : i32
    %c0_i32_1 = arith.constant 0 : i32
    return %c0_i32, %c0_i32_0 : i32, i32
  }
  func.func @transform_15(%arg0: i32) -> (i32, i32) {
    %c0_i32 = arith.constant 0 : i32
    %c0_i32_0 = arith.constant 0 : i32
    %c0_i32_1 = arith.constant 0 : i32
    return %c0_i32, %c0_i32_0 : i32, i32
  }
  func.func @transform_16(%arg0: i32) -> (i32, i32) {
    %c0_i32 = arith.constant 0 : i32
    %c0_i32_0 = arith.constant 0 : i32
    %c0_i32_1 = arith.constant 0 : i32
    return %c0_i32, %c0_i32_0 : i32, i32
  }
  func.func @transform_17(%arg0: i32) -> (i32, i32) {
    %c0_i32 = arith.constant 0 : i32
    %c0_i32_0 = arith.constant 0 : i32
    %c0_i32_1 = arith.constant 0 : i32
    return %c0_i32, %c0_i32_0 : i32, i32
  }
  func.func @transform_18(%arg0: i32) -> (i32, i32) {
    %c0_i32 = arith.constant 0 : i32
    %c0_i32_0 = arith.constant 0 : i32
    %c0_i32_1 = arith.constant 0 : i32
    return %c0_i32, %c0_i32_0 : i32, i32
  }
  func.func @transform_19(%arg0: i32) -> (i32, i32) {
    %c0_i32 = arith.constant 0 : i32
    %c0_i32_0 = arith.constant 0 : i32
    %c0_i32_1 = arith.constant 0 : i32
    return %c0_i32, %c0_i32_0 : i32, i32
  }
  func.func @transform_20(%arg0: i32) -> (i32, i32) {
    %c0_i32 = arith.constant 0 : i32
    %c0_i32_0 = arith.constant 0 : i32
    %c0_i32_1 = arith.constant 0 : i32
    return %c0_i32, %c0_i32_0 : i32, i32
  }
  func.func @transform_21(%arg0: i32) -> (i32, i32) {
    %c0_i32 = arith.constant 0 : i32
    %c0_i32_0 = arith.constant 0 : i32
    %c0_i32_1 = arith.constant 0 : i32
    return %c0_i32, %c0_i32_0 : i32, i32
  }
  func.func @transform_22(%arg0: i32) -> (i32, i32) {
    %c0_i32 = arith.constant 0 : i32
    %c0_i32_0 = arith.constant 0 : i32
    %c0_i32_1 = arith.constant 0 : i32
    return %c0_i32, %c0_i32_0 : i32, i32
  }
  func.func @transform_23(%arg0: i32) -> (i32, i32) {
    %c0_i32 = arith.constant 0 : i32
    %c0_i32_0 = arith.constant 0 : i32
    %c0_i32_1 = arith.constant 0 : i32
    return %c0_i32, %c0_i32_0 : i32, i32
  }
  func.func @transform_24(%arg0: i32) -> (i32, i32) {
    %c0_i32 = arith.constant 0 : i32
    %c0_i32_0 = arith.constant 0 : i32
    %c0_i32_1 = arith.constant 0 : i32
    return %c0_i32, %c0_i32_0 : i32, i32
  }
  func.func @transform_25(%arg0: i32) -> (i32, i32, i32) {
    %c0_i32 = arith.constant 0 : i32
    %c0_i32_0 = arith.constant 0 : i32
    %c0_i32_1 = arith.constant 0 : i32
    return %arg0, %c0_i32, %c0_i32_0 : i32, i32, i32
  }
  func.func @transform_26(%arg0: i32) -> (i32, i32, i32) {
    %c0_i32 = arith.constant 0 : i32
    %c0_i32_0 = arith.constant 0 : i32
    %c0_i32_1 = arith.constant 0 : i32
    return %arg0, %c0_i32, %c0_i32_0 : i32, i32, i32
  }
}

</mosaic_0001>

<llo_original>
// kernel: t5_forward.1
$region0: #{t5_forward.1}
  #allocation0 [shape = 'u32[]', space=smem, size = 0x4, offset = 0x4, fixed_abs, tag = 'smem constant byte address 0x4 - core index']
  #allocation1 [shape = 'u32[144,128]{1,0:T(1,128)}', space=vmem, size = 0x12000, scoped, tag = 'internal scratch']
  %s0 = inlined_call_operand.vmem [shape: f32[2,8,32], index: 0, kind: input, shape index: {}]
  %s1 = inlined_call_operand.vmem [shape: f32[2,8,32], index: 1, kind: input, shape index: {}]
  %s2 = inlined_call_operand.vmem [shape: f32[2,1,8], index: 2, kind: input, shape index: {}]
  %s3 = inlined_call_operand.vmem [shape: f32[4,8,8], index: 3, kind: input, shape index: {}]
  %s4 = inlined_call_operand.vmem [shape: f32[4,8,8], index: 4, kind: input, shape index: {}]
  %s5 = inlined_call_operand.vmem [shape: s32[2,8,1], index: 5, kind: input, shape index: {}]
  %s6 = inlined_call_operand.vmem [shape: f32[1,32], index: 6, kind: input, shape index: {}, may-alias: {6,9,12,13,16,20,23}]
  %s7 = inlined_call_operand.vmem [shape: f32[32,96], index: 7, kind: input, shape index: {}]
  %s8 = inlined_call_operand.vmem [shape: f32[32,32], index: 8, kind: input, shape index: {}]
  %s9 = inlined_call_operand.vmem [shape: f32[1,32], index: 9, kind: input, shape index: {}, may-alias: {6,9,12,13,16,20,23}]
  %s10 = inlined_call_operand.vmem [shape: f32[32,64], index: 10, kind: input, shape index: {}]
  %s11 = inlined_call_operand.vmem [shape: f32[64,32], index: 11, kind: input, shape index: {}]
  %s12 = inlined_call_operand.vmem [shape: f32[1,32], index: 12, kind: input, shape index: {}, may-alias: {6,9,12,13,16,20,23}]
  %s13 = inlined_call_operand.vmem [shape: f32[1,32], index: 13, kind: input, shape index: {}, may-alias: {6,9,12,13,16,20,23}]
  %s14 = inlined_call_operand.vmem [shape: f32[32,96], index: 14, kind: input, shape index: {}]
  %s15 = inlined_call_operand.vmem [shape: f32[32,32], index: 15, kind: input, shape index: {}]
  %s16 = inlined_call_operand.vmem [shape: f32[1,32], index: 16, kind: input, shape index: {}, may-alias: {6,9,12,13,16,20,23}]
  %s17 = inlined_call_operand.vmem [shape: f32[32,32], index: 17, kind: input, shape index: {}]
  %s18 = inlined_call_operand.vmem [shape: f32[32,64], index: 18, kind: input, shape index: {}]
  %s19 = inlined_call_operand.vmem [shape: f32[32,32], index: 19, kind: input, shape index: {}]
  %s20 = inlined_call_operand.vmem [shape: f32[1,32], index: 20, kind: input, shape index: {}, may-alias: {6,9,12,13,16,20,23}]
  %s21 = inlined_call_operand.vmem [shape: f32[32,64], index: 21, kind: input, shape index: {}]
  %s22 = inlined_call_operand.vmem [shape: f32[64,32], index: 22, kind: input, shape index: {}]
  %s23 = inlined_call_operand.vmem [shape: f32[1,32], index: 23, kind: input, shape index: {}, may-alias: {6,9,12,13,16,20,23}]
  %s24 = inlined_call_operand.vmem [shape: f32[32,256], index: 24, kind: input, shape index: {}]
  %s25 = inlined_call_operand.vmem [shape: f32[2,1,1], index: 25, kind: output, shape index: {0}]
  %s26 = inlined_call_operand.vmem [shape: f32[2,1,1], index: 26, kind: output, shape index: {1}]
  %27 = xla_tuple %s25, %s26
  %s28 = sld [smem:[#allocation0]]
  $region141: #{t5_forward.1} parent=0
    _
  %s30 = ssub.s32 1, %s28
  %s31 = scalar_select 0, %s30, %s28
  loop: start=0, step=1, limit=4
  $region2: #{t5_forward.1} parent=0 // loop_pre_header
    _
  $region3: #{t5_forward.1} parent=0 // loop_header
    %s33 = sphi 0, %s37
    %p34 = scmp.ge.s32.totalorder %s33, 4
    %s43 = sphi 0, %s45
    %s46 = sphi 0, %s43
    %s47 = sphi 0, %s46
    %s63 = sphi 0, %s47
    %s69 = sphi 0, %s71
    %s72 = sphi 0, %s69
    %s73 = sphi 0, %s72
    %s89 = sphi 0, %s73
    %s95 = sphi 0, %s97
    %s98 = sphi 0, %s95
    %s99 = sphi 0, %s98
    %s115 = sphi 0, %s99
    %s119 = sphi 0, %s119
    %s121 = sphi 0, %s119
    %s122 = sphi 0, %s121
    %s136 = sphi 0, %s122
    %s140 = sphi 0, %s140
    %s142 = sphi 0, %s140
    %s143 = sphi 0, %s142
    %s157 = sphi 0, %s143
    %s163 = sphi 0, %s165
    %s166 = sphi 0, %s163
    %s167 = sphi 0, %s166
    %s183 = sphi 0, %s167
    %s187 = sphi 0, %s187
    %s189 = sphi 0, %s187
    %s190 = sphi 0, %s189
    %s204 = sphi 0, %s190
    %s208 = sphi 0, %s208
    %s210 = sphi 0, %s208
    %s211 = sphi 0, %s210
    %s225 = sphi 0, %s211
    %s229 = sphi 0, %s229
    %s231 = sphi 0, %s229
    %s232 = sphi 0, %s231
    %s246 = sphi 0, %s232
    %s250 = sphi 0, %s250
    %s252 = sphi 0, %s250
    %s253 = sphi 0, %s252
    %s267 = sphi 0, %s253
    %s271 = sphi 0, %s271
    %s273 = sphi 0, %s271
    %s274 = sphi 0, %s273
    %s288 = sphi 0, %s274
    %s292 = sphi 0, %s292
    %s294 = sphi 0, %s292
    %s295 = sphi 0, %s294
    %s309 = sphi 0, %s295
    %s313 = sphi 0, %s313
    %s315 = sphi 0, %s313
    %s316 = sphi 0, %s315
    %s330 = sphi 0, %s316
    %s334 = sphi 0, %s334
    %s336 = sphi 0, %s334
    %s337 = sphi 0, %s336
    %s351 = sphi 0, %s337
    %s355 = sphi 0, %s355
    %s357 = sphi 0, %s355
    %s358 = sphi 0, %s357
    %s372 = sphi 0, %s358
    %s376 = sphi 0, %s376
    %s378 = sphi 0, %s376
    %s379 = sphi 0, %s378
    %s393 = sphi 0, %s379
    %s397 = sphi 0, %s397
    %s399 = sphi 0, %s397
    %s400 = sphi 0, %s399
    %s414 = sphi 0, %s400
    %s418 = sphi 0, %s418
    %s420 = sphi 0, %s418
    %s421 = sphi 0, %s420
    %s435 = sphi 0, %s421
    %s439 = sphi 0, %s439
    %s441 = sphi 0, %s439
    %s442 = sphi 0, %s441
    %s456 = sphi 0, %s442
    %s460 = sphi 0, %s460
    %s462 = sphi 0, %s460
    %s463 = sphi 0, %s462
    %s477 = sphi 0, %s463
    %s481 = sphi 0, %s481
    %s483 = sphi 0, %s481
    %s484 = sphi 0, %s483
    %s498 = sphi 0, %s484
    %s502 = sphi 0, %s502
    %s504 = sphi 0, %s502
    %s505 = sphi 0, %s504
    %s519 = sphi 0, %s505
    %s523 = sphi 0, %s523
    %s525 = sphi 0, %s523
    %s526 = sphi 0, %s525
    %s540 = sphi 0, %s526
    %s544 = sphi 0, %s544
    %s546 = sphi 0, %s544
    %s547 = sphi 0, %s546
    %s561 = sphi 0, %s547
    %s565 = sphi 0, %s565
    %s567 = sphi 0, %s565
    %s568 = sphi 0, %s567
    %s582 = sphi 0, %s568
    %s588 = sphi 0, %s590
    %s591 = sphi 0, %s588
    %s592 = sphi 0, %s591
    %s608 = sphi 0, %s592
    %s614 = sphi 0, %s616
    %s617 = sphi 0, %s614
    %s618 = sphi 0, %s617
    %s634 = sphi 0, %s618
  $region4: #{t5_forward.1} parent=0 // loop_header_branch
    %36 = sbr.rel (%p34) target = $region8
  $region5: #{t5_forward.1} parent=0 // loop_body
    %s38 = ssub.s32 %s33, 1
    %s39 = ssub.s32 %s33, 2
    %s40 = sadd.s32 %s33, 1
    %s41 = ssub.s32 %s33, %s40
    %p42 = scmp.eq.s32.totalorder %s41, 0
    %s44 = sadd.s32 %s43, 1
    %s45 = scalar_select %p42, %s43, %s44
    %p48 = pneg %p42
    %p49 = scmp.eq.s32.totalorder %s33, 1
    %p50 = por %p48, %p49
    %p51 = scmp.ne.s32.totalorder %s43, %s46
    %p52 = scmp.eq.s32.totalorder %s33, 0
    %p53 = por %p51, %p52
    %p54 = scmp.ne.s32.totalorder %s43, %s46
    %p55 = scmp.eq.s32.totalorder %s38, 1
    %p56 = por %p54, %p55
    %p57 = scmp.ne.s32.totalorder %s46, %s47
    %p58 = scmp.eq.s32.totalorder %s38, 0
    %p59 = por %p57, %p58
    %p60 = scmp.ne.s32.totalorder %s46, %s47
    %p61 = scmp.eq.s32.totalorder %s39, 1
    %p62 = por %p60, %p61
    %p64 = scmp.ne.s32.totalorder %s47, %s63
    %p65 = scmp.eq.s32.totalorder %s39, 0
    %p66 = por %p64, %p65
    %s67 = ssub.s32 %s33, %s40
    %p68 = scmp.eq.s32.totalorder %s67, 0
    %s70 = sadd.s32 %s69, 1
    %s71 = scalar_select %p68, %s69, %s70
    %p74 = pneg %p68
    %p75 = scmp.eq.s32.totalorder %s33, 1
    %p76 = por %p74, %p75
    %p77 = scmp.ne.s32.totalorder %s69, %s72
    %p78 = scmp.eq.s32.totalorder %s33, 0
    %p79 = por %p77, %p78
    %p80 = scmp.ne.s32.totalorder %s69, %s72
    %p81 = scmp.eq.s32.totalorder %s38, 1
    %p82 = por %p80, %p81
    %p83 = scmp.ne.s32.totalorder %s72, %s73
    %p84 = scmp.eq.s32.totalorder %s38, 0
    %p85 = por %p83, %p84
    %p86 = scmp.ne.s32.totalorder %s72, %s73
    %p87 = scmp.eq.s32.totalorder %s39, 1
    %p88 = por %p86, %p87
    %p90 = scmp.ne.s32.totalorder %s73, %s89
    %p91 = scmp.eq.s32.totalorder %s39, 0
    %p92 = por %p90, %p91
    %s93 = ssub.s32 %s33, %s40
    %p94 = scmp.eq.s32.totalorder %s93, 0
    %s96 = sadd.s32 %s95, 1
    %s97 = scalar_select %p94, %s95, %s96
    %p100 = pneg %p94
    %p101 = scmp.eq.s32.totalorder %s33, 1
    %p102 = por %p100, %p101
    %p103 = scmp.ne.s32.totalorder %s95, %s98
    %p104 = scmp.eq.s32.totalorder %s33, 0
    %p105 = por %p103, %p104
    %p106 = scmp.ne.s32.totalorder %s95, %s98
    %p107 = scmp.eq.s32.totalorder %s38, 1
    %p108 = por %p106, %p107
    %p109 = scmp.ne.s32.totalorder %s98, %s99
    %p110 = scmp.eq.s32.totalorder %s38, 0
    %p111 = por %p109, %p110
    %p112 = scmp.ne.s32.totalorder %s98, %s99
    %p113 = scmp.eq.s32.totalorder %s39, 1
    %p114 = por %p112, %p113
    %p116 = scmp.ne.s32.totalorder %s99, %s115
    %p117 = scmp.eq.s32.totalorder %s39, 0
    %p118 = por %p116, %p117
    %s120 = sadd.s32 %s119, 1
    %p123 = scmp.eq.s32.totalorder %s33, 1
    %p124 = scmp.ne.s32.totalorder %s119, %s121
    %p125 = scmp.eq.s32.totalorder %s33, 0
    %p126 = por %p124, %p125
    %p127 = scmp.ne.s32.totalorder %s119, %s121
    %p128 = scmp.eq.s32.totalorder %s38, 1
    %p129 = por %p127, %p128
    %p130 = scmp.ne.s32.totalorder %s121, %s122
    %p131 = scmp.eq.s32.totalorder %s38, 0
    %p132 = por %p130, %p131
    %p133 = scmp.ne.s32.totalorder %s121, %s122
    %p134 = scmp.eq.s32.totalorder %s39, 1
    %p135 = por %p133, %p134
    %p137 = scmp.ne.s32.totalorder %s122, %s136
    %p138 = scmp.eq.s32.totalorder %s39, 0
    %p139 = por %p137, %p138
    %s141 = sadd.s32 %s140, 1
    %p144 = scmp.eq.s32.totalorder %s33, 1
    %p145 = scmp.ne.s32.totalorder %s140, %s142
    %p146 = scmp.eq.s32.totalorder %s33, 0
    %p147 = por %p145, %p146
    %p148 = scmp.ne.s32.totalorder %s140, %s142
    %p149 = scmp.eq.s32.totalorder %s38, 1
    %p150 = por %p148, %p149
    %p151 = scmp.ne.s32.totalorder %s142, %s143
    %p152 = scmp.eq.s32.totalorder %s38, 0
    %p153 = por %p151, %p152
    %p154 = scmp.ne.s32.totalorder %s142, %s143
    %p155 = scmp.eq.s32.totalorder %s39, 1
    %p156 = por %p154, %p155
    %p158 = scmp.ne.s32.totalorder %s143, %s157
    %p159 = scmp.eq.s32.totalorder %s39, 0
    %p160 = por %p158, %p159
    %s161 = ssub.s32 %s33, %s40
    %p162 = scmp.eq.s32.totalorder %s161, 0
    %s164 = sadd.s32 %s163, 1
    %s165 = scalar_select %p162, %s163, %s164
    %p168 = pneg %p162
    %p169 = scmp.eq.s32.totalorder %s33, 1
    %p170 = por %p168, %p169
    %p171 = scmp.ne.s32.totalorder %s163, %s166
    %p172 = scmp.eq.s32.totalorder %s33, 0
    %p173 = por %p171, %p172
    %p174 = scmp.ne.s32.totalorder %s163, %s166
    %p175 = scmp.eq.s32.totalorder %s38, 1
    %p176 = por %p174, %p175
    %p177 = scmp.ne.s32.totalorder %s166, %s167
    %p178 = scmp.eq.s32.totalorder %s38, 0
    %p179 = por %p177, %p178
    %p180 = scmp.ne.s32.totalorder %s166, %s167
    %p181 = scmp.eq.s32.totalorder %s39, 1
    %p182 = por %p180, %p181
    %p184 = scmp.ne.s32.totalorder %s167, %s183
    %p185 = scmp.eq.s32.totalorder %s39, 0
    %p186 = por %p184, %p185
    %s188 = sadd.s32 %s187, 1
    %p191 = scmp.eq.s32.totalorder %s33, 1
    %p192 = scmp.ne.s32.totalorder %s187, %s189
    %p193 = scmp.eq.s32.totalorder %s33, 0
    %p194 = por %p192, %p193
    %p195 = scmp.ne.s32.totalorder %s187, %s189
    %p196 = scmp.eq.s32.totalorder %s38, 1
    %p197 = por %p195, %p196
    %p198 = scmp.ne.s32.totalorder %s189, %s190
    %p199 = scmp.eq.s32.totalorder %s38, 0
    %p200 = por %p198, %p199
    %p201 = scmp.ne.s32.totalorder %s189, %s190
    %p202 = scmp.eq.s32.totalorder %s39, 1
    %p203 = por %p201, %p202
    %p205 = scmp.ne.s32.totalorder %s190, %s204
    %p206 = scmp.eq.s32.totalorder %s39, 0
    %p207 = por %p205, %p206
    %s209 = sadd.s32 %s208, 1
    %p212 = scmp.eq.s32.totalorder %s33, 1
    %p213 = scmp.ne.s32.totalorder %s208, %s210
    %p214 = scmp.eq.s32.totalorder %s33, 0
    %p215 = por %p213, %p214
    %p216 = scmp.ne.s32.totalorder %s208, %s210
    %p217 = scmp.eq.s32.totalorder %s38, 1
    %p218 = por %p216, %p217
    %p219 = scmp.ne.s32.totalorder %s210, %s211
    %p220 = scmp.eq.s32.totalorder %s38, 0
    %p221 = por %p219, %p220
    %p222 = scmp.ne.s32.totalorder %s210, %s211
    %p223 = scmp.eq.s32.totalorder %s39, 1
    %p224 = por %p222, %p223
    %p226 = scmp.ne.s32.totalorder %s211, %s225
    %p227 = scmp.eq.s32.totalorder %s39, 0
    %p228 = por %p226, %p227
    %s230 = sadd.s32 %s229, 1
    %p233 = scmp.eq.s32.totalorder %s33, 1
    %p234 = scmp.ne.s32.totalorder %s229, %s231
    %p235 = scmp.eq.s32.totalorder %s33, 0
    %p236 = por %p234, %p235
    %p237 = scmp.ne.s32.totalorder %s229, %s231
    %p238 = scmp.eq.s32.totalorder %s38, 1
    %p239 = por %p237, %p238
    %p240 = scmp.ne.s32.totalorder %s231, %s232
    %p241 = scmp.eq.s32.totalorder %s38, 0
    %p242 = por %p240, %p241
    %p243 = scmp.ne.s32.totalorder %s231, %s232
    %p244 = scmp.eq.s32.totalorder %s39, 1
    %p245 = por %p243, %p244
    %p247 = scmp.ne.s32.totalorder %s232, %s246
    %p248 = scmp.eq.s32.totalorder %s39, 0
    %p249 = por %p247, %p248
    %s251 = sadd.s32 %s250, 1
    %p254 = scmp.eq.s32.totalorder %s33, 1
    %p255 = scmp.ne.s32.totalorder %s250, %s252
    %p256 = scmp.eq.s32.totalorder %s33, 0
    %p257 = por %p255, %p256
    %p258 = scmp.ne.s32.totalorder %s250, %s252
    %p259 = scmp.eq.s32.totalorder %s38, 1
    %p260 = por %p258, %p259
    %p261 = scmp.ne.s32.totalorder %s252, %s253
    %p262 = scmp.eq.s32.totalorder %s38, 0
    %p263 = por %p261, %p262
    %p264 = scmp.ne.s32.totalorder %s252, %s253
    %p265 = scmp.eq.s32.totalorder %s39, 1
    %p266 = por %p264, %p265
    %p268 = scmp.ne.s32.totalorder %s253, %s267
    %p269 = scmp.eq.s32.totalorder %s39, 0
    %p270 = por %p268, %p269
    %s272 = sadd.s32 %s271, 1
    %p275 = scmp.eq.s32.totalorder %s33, 1
    %p276 = scmp.ne.s32.totalorder %s271, %s273
    %p277 = scmp.eq.s32.totalorder %s33, 0
    %p278 = por %p276, %p277
    %p279 = scmp.ne.s32.totalorder %s271, %s273
    %p280 = scmp.eq.s32.totalorder %s38, 1
    %p281 = por %p279, %p280
    %p282 = scmp.ne.s32.totalorder %s273, %s274
    %p283 = scmp.eq.s32.totalorder %s38, 0
    %p284 = por %p282, %p283
    %p285 = scmp.ne.s32.totalorder %s273, %s274
    %p286 = scmp.eq.s32.totalorder %s39, 1
    %p287 = por %p285, %p286
    %p289 = scmp.ne.s32.totalorder %s274, %s288
    %p290 = scmp.eq.s32.totalorder %s39, 0
    %p291 = por %p289, %p290
    %s293 = sadd.s32 %s292, 1
    %p296 = scmp.eq.s32.totalorder %s33, 1
    %p297 = scmp.ne.s32.totalorder %s292, %s294
    %p298 = scmp.eq.s32.totalorder %s33, 0
    %p299 = por %p297, %p298
    %p300 = scmp.ne.s32.totalorder %s292, %s294
    %p301 = scmp.eq.s32.totalorder %s38, 1
    %p302 = por %p300, %p301
    %p303 = scmp.ne.s32.totalorder %s294, %s295
    %p304 = scmp.eq.s32.totalorder %s38, 0
    %p305 = por %p303, %p304
    %p306 = scmp.ne.s32.totalorder %s294, %s295
    %p307 = scmp.eq.s32.totalorder %s39, 1
    %p308 = por %p306, %p307
    %p310 = scmp.ne.s32.totalorder %s295, %s309
    %p311 = scmp.eq.s32.totalorder %s39, 0
    %p312 = por %p310, %p311
    %s314 = sadd.s32 %s313, 1
    %p317 = scmp.eq.s32.totalorder %s33, 1
    %p318 = scmp.ne.s32.totalorder %s313, %s315
    %p319 = scmp.eq.s32.totalorder %s33, 0
    %p320 = por %p318, %p319
    %p321 = scmp.ne.s32.totalorder %s313, %s315
    %p322 = scmp.eq.s32.totalorder %s38, 1
    %p323 = por %p321, %p322
    %p324 = scmp.ne.s32.totalorder %s315, %s316
    %p325 = scmp.eq.s32.totalorder %s38, 0
    %p326 = por %p324, %p325
    %p327 = scmp.ne.s32.totalorder %s315, %s316
    %p328 = scmp.eq.s32.totalorder %s39, 1
    %p329 = por %p327, %p328
    %p331 = scmp.ne.s32.totalorder %s316, %s330
    %p332 = scmp.eq.s32.totalorder %s39, 0
    %p333 = por %p331, %p332
    %s335 = sadd.s32 %s334, 1
    %p338 = scmp.eq.s32.totalorder %s33, 1
    %p339 = scmp.ne.s32.totalorder %s334, %s336
    %p340 = scmp.eq.s32.totalorder %s33, 0
    %p341 = por %p339, %p340
    %p342 = scmp.ne.s32.totalorder %s334, %s336
    %p343 = scmp.eq.s32.totalorder %s38, 1
    %p344 = por %p342, %p343
    %p345 = scmp.ne.s32.totalorder %s336, %s337
    %p346 = scmp.eq.s32.totalorder %s38, 0
    %p347 = por %p345, %p346
    %p348 = scmp.ne.s32.totalorder %s336, %s337
    %p349 = scmp.eq.s32.totalorder %s39, 1
    %p350 = por %p348, %p349
    %p352 = scmp.ne.s32.totalorder %s337, %s351
    %p353 = scmp.eq.s32.totalorder %s39, 0
    %p354 = por %p352, %p353
    %s356 = sadd.s32 %s355, 1
    %p359 = scmp.eq.s32.totalorder %s33, 1
    %p360 = scmp.ne.s32.totalorder %s355, %s357
    %p361 = scmp.eq.s32.totalorder %s33, 0
    %p362 = por %p360, %p361
    %p363 = scmp.ne.s32.totalorder %s355, %s357
    %p364 = scmp.eq.s32.totalorder %s38, 1
    %p365 = por %p363, %p364
    %p366 = scmp.ne.s32.totalorder %s357, %s358
    %p367 = scmp.eq.s32.totalorder %s38, 0
    %p368 = por %p366, %p367
    %p369 = scmp.ne.s32.totalorder %s357, %s358
    %p370 = scmp.eq.s32.totalorder %s39, 1
    %p371 = por %p369, %p370
    %p373 = scmp.ne.s32.totalorder %s358, %s372
    %p374 = scmp.eq.s32.totalorder %s39, 0
    %p375 = por %p373, %p374
    %s377 = sadd.s32 %s376, 1
    %p380 = scmp.eq.s32.totalorder %s33, 1
    %p381 = scmp.ne.s32.totalorder %s376, %s378
    %p382 = scmp.eq.s32.totalorder %s33, 0
    %p383 = por %p381, %p382
    %p384 = scmp.ne.s32.totalorder %s376, %s378
    %p385 = scmp.eq.s32.totalorder %s38, 1
    %p386 = por %p384, %p385
    %p387 = scmp.ne.s32.totalorder %s378, %s379
    %p388 = scmp.eq.s32.totalorder %s38, 0
    %p389 = por %p387, %p388
    %p390 = scmp.ne.s32.totalorder %s378, %s379
    %p391 = scmp.eq.s32.totalorder %s39, 1
    %p392 = por %p390, %p391
    %p394 = scmp.ne.s32.totalorder %s379, %s393
    %p395 = scmp.eq.s32.totalorder %s39, 0
    %p396 = por %p394, %p395
    %s398 = sadd.s32 %s397, 1
    %p401 = scmp.eq.s32.totalorder %s33, 1
    %p402 = scmp.ne.s32.totalorder %s397, %s399
    %p403 = scmp.eq.s32.totalorder %s33, 0
    %p404 = por %p402, %p403
    %p405 = scmp.ne.s32.totalorder %s397, %s399
    %p406 = scmp.eq.s32.totalorder %s38, 1
    %p407 = por %p405, %p406
    %p408 = scmp.ne.s32.totalorder %s399, %s400
    %p409 = scmp.eq.s32.totalorder %s38, 0
    %p410 = por %p408, %p409
    %p411 = scmp.ne.s32.totalorder %s399, %s400
    %p412 = scmp.eq.s32.totalorder %s39, 1
    %p413 = por %p411, %p412
    %p415 = scmp.ne.s32.totalorder %s400, %s414
    %p416 = scmp.eq.s32.totalorder %s39, 0
    %p417 = por %p415, %p416
    %s419 = sadd.s32 %s418, 1
    %p422 = scmp.eq.s32.totalorder %s33, 1
    %p423 = scmp.ne.s32.totalorder %s418, %s420
    %p424 = scmp.eq.s32.totalorder %s33, 0
    %p425 = por %p423, %p424
    %p426 = scmp.ne.s32.totalorder %s418, %s420
    %p427 = scmp.eq.s32.totalorder %s38, 1
    %p428 = por %p426, %p427
    %p429 = scmp.ne.s32.totalorder %s420, %s421
    %p430 = scmp.eq.s32.totalorder %s38, 0
    %p431 = por %p429, %p430
    %p432 = scmp.ne.s32.totalorder %s420, %s421
    %p433 = scmp.eq.s32.totalorder %s39, 1
    %p434 = por %p432, %p433
    %p436 = scmp.ne.s32.totalorder %s421, %s435
    %p437 = scmp.eq.s32.totalorder %s39, 0
    %p438 = por %p436, %p437
    %s440 = sadd.s32 %s439, 1
    %p443 = scmp.eq.s32.totalorder %s33, 1
    %p444 = scmp.ne.s32.totalorder %s439, %s441
    %p445 = scmp.eq.s32.totalorder %s33, 0
    %p446 = por %p444, %p445
    %p447 = scmp.ne.s32.totalorder %s439, %s441
    %p448 = scmp.eq.s32.totalorder %s38, 1
    %p449 = por %p447, %p448
    %p450 = scmp.ne.s32.totalorder %s441, %s442
    %p451 = scmp.eq.s32.totalorder %s38, 0
    %p452 = por %p450, %p451
    %p453 = scmp.ne.s32.totalorder %s441, %s442
    %p454 = scmp.eq.s32.totalorder %s39, 1
    %p455 = por %p453, %p454
    %p457 = scmp.ne.s32.totalorder %s442, %s456
    %p458 = scmp.eq.s32.totalorder %s39, 0
    %p459 = por %p457, %p458
    %s461 = sadd.s32 %s460, 1
    %p464 = scmp.eq.s32.totalorder %s33, 1
    %p465 = scmp.ne.s32.totalorder %s460, %s462
    %p466 = scmp.eq.s32.totalorder %s33, 0
    %p467 = por %p465, %p466
    %p468 = scmp.ne.s32.totalorder %s460, %s462
    %p469 = scmp.eq.s32.totalorder %s38, 1
    %p470 = por %p468, %p469
    %p471 = scmp.ne.s32.totalorder %s462, %s463
    %p472 = scmp.eq.s32.totalorder %s38, 0
    %p473 = por %p471, %p472
    %p474 = scmp.ne.s32.totalorder %s462, %s463
    %p475 = scmp.eq.s32.totalorder %s39, 1
    %p476 = por %p474, %p475
    %p478 = scmp.ne.s32.totalorder %s463, %s477
    %p479 = scmp.eq.s32.totalorder %s39, 0
    %p480 = por %p478, %p479
    %s482 = sadd.s32 %s481, 1
    %p485 = scmp.eq.s32.totalorder %s33, 1
    %p486 = scmp.ne.s32.totalorder %s481, %s483
    %p487 = scmp.eq.s32.totalorder %s33, 0
    %p488 = por %p486, %p487
    %p489 = scmp.ne.s32.totalorder %s481, %s483
    %p490 = scmp.eq.s32.totalorder %s38, 1
    %p491 = por %p489, %p490
    %p492 = scmp.ne.s32.totalorder %s483, %s484
    %p493 = scmp.eq.s32.totalorder %s38, 0
    %p494 = por %p492, %p493
    %p495 = scmp.ne.s32.totalorder %s483, %s484
    %p496 = scmp.eq.s32.totalorder %s39, 1
    %p497 = por %p495, %p496
    %p499 = scmp.ne.s32.totalorder %s484, %s498
    %p500 = scmp.eq.s32.totalorder %s39, 0
    %p501 = por %p499, %p500
    %s503 = sadd.s32 %s502, 1
    %p506 = scmp.eq.s32.totalorder %s33, 1
    %p507 = scmp.ne.s32.totalorder %s502, %s504
    %p508 = scmp.eq.s32.totalorder %s33, 0
    %p509 = por %p507, %p508
    %p510 = scmp.ne.s32.totalorder %s502, %s504
    %p511 = scmp.eq.s32.totalorder %s38, 1
    %p512 = por %p510, %p511
    %p513 = scmp.ne.s32.totalorder %s504, %s505
    %p514 = scmp.eq.s32.totalorder %s38, 0
    %p515 = por %p513, %p514
    %p516 = scmp.ne.s32.totalorder %s504, %s505
    %p517 = scmp.eq.s32.totalorder %s39, 1
    %p518 = por %p516, %p517
    %p520 = scmp.ne.s32.totalorder %s505, %s519
    %p521 = scmp.eq.s32.totalorder %s39, 0
    %p522 = por %p520, %p521
    %s524 = sadd.s32 %s523, 1
    %p527 = scmp.eq.s32.totalorder %s33, 1
    %p528 = scmp.ne.s32.totalorder %s523, %s525
    %p529 = scmp.eq.s32.totalorder %s33, 0
    %p530 = por %p528, %p529
    %p531 = scmp.ne.s32.totalorder %s523, %s525
    %p532 = scmp.eq.s32.totalorder %s38, 1
    %p533 = por %p531, %p532
    %p534 = scmp.ne.s32.totalorder %s525, %s526
    %p535 = scmp.eq.s32.totalorder %s38, 0
    %p536 = por %p534, %p535
    %p537 = scmp.ne.s32.totalorder %s525, %s526
    %p538 = scmp.eq.s32.totalorder %s39, 1
    %p539 = por %p537, %p538
    %p541 = scmp.ne.s32.totalorder %s526, %s540
    %p542 = scmp.eq.s32.totalorder %s39, 0
    %p543 = por %p541, %p542
    %s545 = sadd.s32 %s544, 1
    %p548 = scmp.eq.s32.totalorder %s33, 1
    %p549 = scmp.ne.s32.totalorder %s544, %s546
    %p550 = scmp.eq.s32.totalorder %s33, 0
    %p551 = por %p549, %p550
    %p552 = scmp.ne.s32.totalorder %s544, %s546
    %p553 = scmp.eq.s32.totalorder %s38, 1
    %p554 = por %p552, %p553
    %p555 = scmp.ne.s32.totalorder %s546, %s547
    %p556 = scmp.eq.s32.totalorder %s38, 0
    %p557 = por %p555, %p556
    %p558 = scmp.ne.s32.totalorder %s546, %s547
    %p559 = scmp.eq.s32.totalorder %s39, 1
    %p560 = por %p558, %p559
    %p562 = scmp.ne.s32.totalorder %s547, %s561
    %p563 = scmp.eq.s32.totalorder %s39, 0
    %p564 = por %p562, %p563
    %s566 = sadd.s32 %s565, 1
    %p569 = scmp.eq.s32.totalorder %s33, 1
    %p570 = scmp.ne.s32.totalorder %s565, %s567
    %p571 = scmp.eq.s32.totalorder %s33, 0
    %p572 = por %p570, %p571
    %p573 = scmp.ne.s32.totalorder %s565, %s567
    %p574 = scmp.eq.s32.totalorder %s38, 1
    %p575 = por %p573, %p574
    %p576 = scmp.ne.s32.totalorder %s567, %s568
    %p577 = scmp.eq.s32.totalorder %s38, 0
    %p578 = por %p576, %p577
    %p579 = scmp.ne.s32.totalorder %s567, %s568
    %p580 = scmp.eq.s32.totalorder %s39, 1
    %p581 = por %p579, %p580
    %p583 = scmp.ne.s32.totalorder %s568, %s582
    %p584 = scmp.eq.s32.totalorder %s39, 0
    %p585 = por %p583, %p584
    %s586 = ssub.s32 %s33, %s40
    %p587 = scmp.eq.s32.totalorder %s586, 0
    %s589 = sadd.s32 %s588, 1
    %s590 = scalar_select %p587, %s588, %s589
    %p593 = pneg %p587
    %p594 = scmp.eq.s32.totalorder %s33, 1
    %p595 = por %p593, %p594
    %p596 = scmp.ne.s32.totalorder %s588, %s591
    %p597 = scmp.eq.s32.totalorder %s33, 0
    %p598 = por %p596, %p597
    %p599 = scmp.ne.s32.totalorder %s588, %s591
    %p600 = scmp.eq.s32.totalorder %s38, 1
    %p601 = por %p599, %p600
    %p602 = scmp.ne.s32.totalorder %s591, %s592
    %p603 = scmp.eq.s32.totalorder %s38, 0
    %p604 = por %p602, %p603
    %p605 = scmp.ne.s32.totalorder %s591, %s592
    %p606 = scmp.eq.s32.totalorder %s39, 1
    %p607 = por %p605, %p606
    %p609 = scmp.ne.s32.totalorder %s592, %s608
    %p610 = scmp.eq.s32.totalorder %s39, 0
    %p611 = por %p609, %p610
    %s612 = ssub.s32 %s33, %s40
    %p613 = scmp.eq.s32.totalorder %s612, 0
    %s615 = sadd.s32 %s614, 1
    %s616 = scalar_select %p613, %s614, %s615
    %p619 = pneg %p613
    %p620 = scmp.eq.s32.totalorder %s33, 1
    %p621 = por %p619, %p620
    %p622 = scmp.ne.s32.totalorder %s614, %s617
    %p623 = scmp.eq.s32.totalorder %s33, 0
    %p624 = por %p622, %p623
    %p625 = scmp.ne.s32.totalorder %s614, %s617
    %p626 = scmp.eq.s32.totalorder %s38, 1
    %p627 = por %p625, %p626
    %p628 = scmp.ne.s32.totalorder %s617, %s618
    %p629 = scmp.eq.s32.totalorder %s38, 0
    %p630 = por %p628, %p629
    %p631 = scmp.ne.s32.totalorder %s617, %s618
    %p632 = scmp.eq.s32.totalorder %s39, 1
    %p633 = por %p631, %p632
    %p635 = scmp.ne.s32.totalorder %s618, %s634
    %p636 = scmp.eq.s32.totalorder %s39, 0
    %p637 = por %p635, %p636
    %p638 = scmp.le.s32.totalorder 1, %s33
    %p639 = scmp.lt.s32.totalorder %s33, 3
    %p640 = pnand %p638, %p639
    %p641 = pneg %p640
    // Predicated region
    $region9: #{t5_forward.1} parent=5 // pred_check
      _
    $region10: #{t5_forward.1} parent=5 // pred_check_branch
      %643 = sbr.rel (%p640) target = $region12
    $region11: #{t5_forward.1} parent=5 // pred_region
      %s644 = ssub.s32 %s33, 1
      // Predicated region
      $region13: #{t5_forward.1} parent=11 // pred_check
        %p645 = pneg %p132
      $region14: #{t5_forward.1} parent=11 // pred_check_branch
        %647 = sbr.rel (%p645) target = $region16
      $region15: #{t5_forward.1} parent=11 // pred_region
        _
      $region16: #{t5_forward.1} parent=11 // pred_fallthru
        _
      // Predicated region
      $region17: #{t5_forward.1} parent=11 // pred_check
        %p648 = pneg %p153
      $region18: #{t5_forward.1} parent=11 // pred_check_branch
        %650 = sbr.rel (%p648) target = $region20
      $region19: #{t5_forward.1} parent=11 // pred_region
        _
      $region20: #{t5_forward.1} parent=11 // pred_fallthru
        _
      // Predicated region
      $region21: #{t5_forward.1} parent=11 // pred_check
        %p651 = pneg %p200
      $region22: #{t5_forward.1} parent=11 // pred_check_branch
        %653 = sbr.rel (%p651) target = $region24
      $region23: #{t5_forward.1} parent=11 // pred_region
        _
      $region24: #{t5_forward.1} parent=11 // pred_fallthru
        _
      // Predicated region
      $region25: #{t5_forward.1} parent=11 // pred_check
        %p654 = pneg %p221
      $region26: #{t5_forward.1} parent=11 // pred_check_branch
        %656 = sbr.rel (%p654) target = $region28
      $region27: #{t5_forward.1} parent=11 // pred_region
        _
      $region28: #{t5_forward.1} parent=11 // pred_fallthru
        _
      // Predicated region
      $region29: #{t5_forward.1} parent=11 // pred_check
        %p657 = pneg %p242
      $region30: #{t5_forward.1} parent=11 // pred_check_branch
        %659 = sbr.rel (%p657) target = $region32
      $region31: #{t5_forward.1} parent=11 // pred_region
        _
      $region32: #{t5_forward.1} parent=11 // pred_fallthru
        _
      // Predicated region
      $region33: #{t5_forward.1} parent=11 // pred_check
        %p660 = pneg %p263
      $region34: #{t5_forward.1} parent=11 // pred_check_branch
        %662 = sbr.rel (%p660) target = $region36
      $region35: #{t5_forward.1} parent=11 // pred_region
        _
      $region36: #{t5_forward.1} parent=11 // pred_fallthru
        _
      // Predicated region
      $region37: #{t5_forward.1} parent=11 // pred_check
        %p663 = pneg %p284
      $region38: #{t5_forward.1} parent=11 // pred_check_branch
        %665 = sbr.rel (%p663) target = $region40
      $region39: #{t5_forward.1} parent=11 // pred_region
        _
      $region40: #{t5_forward.1} parent=11 // pred_fallthru
        _
      // Predicated region
      $region41: #{t5_forward.1} parent=11 // pred_check
        %p666 = pneg %p305
      $region42: #{t5_forward.1} parent=11 // pred_check_branch
        %668 = sbr.rel (%p666) target = $region44
      $region43: #{t5_forward.1} parent=11 // pred_region
        _
      $region44: #{t5_forward.1} parent=11 // pred_fallthru
        _
      // Predicated region
      $region45: #{t5_forward.1} parent=11 // pred_check
        %p669 = pneg %p326
      $region46: #{t5_forward.1} parent=11 // pred_check_branch
        %671 = sbr.rel (%p669) target = $region48
      $region47: #{t5_forward.1} parent=11 // pred_region
        _
      $region48: #{t5_forward.1} parent=11 // pred_fallthru
        _
      // Predicated region
      $region49: #{t5_forward.1} parent=11 // pred_check
        %p672 = pneg %p347
      $region50: #{t5_forward.1} parent=11 // pred_check_branch
        %674 = sbr.rel (%p672) target = $region52
      $region51: #{t5_forward.1} parent=11 // pred_region
        _
      $region52: #{t5_forward.1} parent=11 // pred_fallthru
        _
      // Predicated region
      $region53: #{t5_forward.1} parent=11 // pred_check
        %p675 = pneg %p368
      $region54: #{t5_forward.1} parent=11 // pred_check_branch
        %677 = sbr.rel (%p675) target = $region56
      $region55: #{t5_forward.1} parent=11 // pred_region
        _
      $region56: #{t5_forward.1} parent=11 // pred_fallthru
        _
      // Predicated region
      $region57: #{t5_forward.1} parent=11 // pred_check
        %p678 = pneg %p389
      $region58: #{t5_forward.1} parent=11 // pred_check_branch
        %680 = sbr.rel (%p678) target = $region60
      $region59: #{t5_forward.1} parent=11 // pred_region
        _
      $region60: #{t5_forward.1} parent=11 // pred_fallthru
        _
      // Predicated region
      $region61: #{t5_forward.1} parent=11 // pred_check
        %p681 = pneg %p410
      $region62: #{t5_forward.1} parent=11 // pred_check_branch
        %683 = sbr.rel (%p681) target = $region64
      $region63: #{t5_forward.1} parent=11 // pred_region
        _
      $region64: #{t5_forward.1} parent=11 // pred_fallthru
        _
      // Predicated region
      $region65: #{t5_forward.1} parent=11 // pred_check
        %p684 = pneg %p431
      $region66: #{t5_forward.1} parent=11 // pred_check_branch
        %686 = sbr.rel (%p684) target = $region68
      $region67: #{t5_forward.1} parent=11 // pred_region
        _
      $region68: #{t5_forward.1} parent=11 // pred_fallthru
        _
      // Predicated region
      $region69: #{t5_forward.1} parent=11 // pred_check
        %p687 = pneg %p452
      $region70: #{t5_forward.1} parent=11 // pred_check_branch
        %689 = sbr.rel (%p687) target = $region72
      $region71: #{t5_forward.1} parent=11 // pred_region
        _
      $region72: #{t5_forward.1} parent=11 // pred_fallthru
        _
      // Predicated region
      $region73: #{t5_forward.1} parent=11 // pred_check
        %p690 = pneg %p473
      $region74: #{t5_forward.1} parent=11 // pred_check_branch
        %692 = sbr.rel (%p690) target = $region76
      $region75: #{t5_forward.1} parent=11 // pred_region
        _
      $region76: #{t5_forward.1} parent=11 // pred_fallthru
        _
      // Predicated region
      $region77: #{t5_forward.1} parent=11 // pred_check
        %p693 = pneg %p494
      $region78: #{t5_forward.1} parent=11 // pred_check_branch
        %695 = sbr.rel (%p693) target = $region80
      $region79: #{t5_forward.1} parent=11 // pred_region
        _
      $region80: #{t5_forward.1} parent=11 // pred_fallthru
        _
      // Predicated region
      $region81: #{t5_forward.1} parent=11 // pred_check
        %p696 = pneg %p515
      $region82: #{t5_forward.1} parent=11 // pred_check_branch
        %698 = sbr.rel (%p696) target = $region84
      $region83: #{t5_forward.1} parent=11 // pred_region
        _
      $region84: #{t5_forward.1} parent=11 // pred_fallthru
        _
      // Predicated region
      $region85: #{t5_forward.1} parent=11 // pred_check
        %p699 = pneg %p536
      $region86: #{t5_forward.1} parent=11 // pred_check_branch
        %701 = sbr.rel (%p699) target = $region88
      $region87: #{t5_forward.1} parent=11 // pred_region
        _
      $region88: #{t5_forward.1} parent=11 // pred_fallthru
        _
      // Predicated region
      $region89: #{t5_forward.1} parent=11 // pred_check
        %p702 = pneg %p557
      $region90: #{t5_forward.1} parent=11 // pred_check_branch
        %704 = sbr.rel (%p702) target = $region92
      $region91: #{t5_forward.1} parent=11 // pred_region
        _
      $region92: #{t5_forward.1} parent=11 // pred_fallthru
        _
      // Predicated region
      $region93: #{t5_forward.1} parent=11 // pred_check
        %p705 = pneg %p578
      $region94: #{t5_forward.1} parent=11 // pred_check_branch
        %707 = sbr.rel (%p705) target = $region96
      $region95: #{t5_forward.1} parent=11 // pred_region
        _
      $region96: #{t5_forward.1} parent=11 // pred_fallthru
        _
    $region12: #{t5_forward.1} parent=5 // pred_fallthru
      _
    %p708 = scmp.lt.s32.totalorder %s33, 2
    // Predicated region
    $region97: #{t5_forward.1} parent=5 // pred_check
      %p709 = pneg %p708
    $region98: #{t5_forward.1} parent=5 // pred_check_branch
      %711 = sbr.rel (%p709) target = $region100
    $region99: #{t5_forward.1} parent=5 // pred_region
      // Predicated region
      $region101: #{t5_forward.1} parent=99 // pred_check
        %p712 = pneg %p53
      $region102: #{t5_forward.1} parent=99 // pred_check_branch
        %714 = sbr.rel (%p712) target = $region104
      $region103: #{t5_forward.1} parent=99 // pred_region
        %p715 = scmp.lt.s32.totalorder %s33, 1
        %s716 = scalar_select %p715, %s33, 1
        %s717 = smul.addr %s716, 8
        %s718 = scalar_lea.vmem %s0, %s717
      $region104: #{t5_forward.1} parent=99 // pred_fallthru
        _
      // Predicated region
      $region105: #{t5_forward.1} parent=99 // pred_check
        %p719 = pneg %p79
      $region106: #{t5_forward.1} parent=99 // pred_check_branch
        %721 = sbr.rel (%p719) target = $region108
      $region107: #{t5_forward.1} parent=99 // pred_region
        %p722 = scmp.lt.s32.totalorder %s33, 1
        %s723 = scalar_select %p722, %s33, 1
        %s724 = smul.addr %s723, 8
        %s725 = scalar_lea.vmem %s1, %s724
      $region108: #{t5_forward.1} parent=99 // pred_fallthru
        _
      // Predicated region
      $region109: #{t5_forward.1} parent=99 // pred_check
        %p726 = pneg %p105
      $region110: #{t5_forward.1} parent=99 // pred_check_branch
        %728 = sbr.rel (%p726) target = $region112
      $region111: #{t5_forward.1} parent=99 // pred_region
        %p729 = scmp.lt.s32.totalorder %s33, 1
        %s730 = scalar_select %p729, %s33, 1
        %s731 = scalar_lea.vmem %s2, %s730
      $region112: #{t5_forward.1} parent=99 // pred_fallthru
        _
      // Predicated region
      $region113: #{t5_forward.1} parent=99 // pred_check
        %p732 = pneg %p173
      $region114: #{t5_forward.1} parent=99 // pred_check_branch
        %734 = sbr.rel (%p732) target = $region116
      $region115: #{t5_forward.1} parent=99 // pred_region
        %p735 = scmp.lt.s32.totalorder %s33, 1
        %s736 = scalar_select %p735, %s33, 1
        %s737 = smul.addr %s736, 8
        %s738 = scalar_lea.vmem %s5, %s737
      $region116: #{t5_forward.1} parent=99 // pred_fallthru
        _
    $region100: #{t5_forward.1} parent=5 // pred_fallthru
      _
    %p739 = scmp.le.s32.totalorder 1, %s33
    %p740 = scmp.lt.s32.totalorder %s33, 3
    %p741 = pnand %p739, %p740
    %p742 = pneg %p741
    // Predicated region
    $region117: #{t5_forward.1} parent=5 // pred_check
      _
    $region118: #{t5_forward.1} parent=5 // pred_check_branch
      %744 = sbr.rel (%p741) target = $region120
    $region119: #{t5_forward.1} parent=5 // pred_region
      %s745 = ssub.s32 %s33, 1
      %p746 = scmp.lt.s32.totalorder %s38, 1
      %s747 = scalar_select %p746, %s38, 1
      %s748 = smul.addr %s747, 8
      %s749 = scalar_lea.vmem %s0, %s748
      %p750 = pneg %p59
      %p751 = pneg %p56
      %p752 = scmp.lt.s32.totalorder %s38, 1
      %s753 = scalar_select %p752, %s38, 1
      %s754 = smul.addr %s753, 8
      %s755 = scalar_lea.vmem %s1, %s754
      %p756 = pneg %p85
      %p757 = pneg %p82
      %p758 = scmp.lt.s32.totalorder %s38, 1
      %s759 = scalar_select %p758, %s38, 1
      %s760 = scalar_lea.vmem %s2, %s759
      %p761 = pneg %p111
      %p762 = pneg %p108
      %p763 = pneg %p132
      %p764 = pneg %p129
      %p765 = pneg %p153
      %p766 = pneg %p150
      %p767 = scmp.lt.s32.totalorder %s38, 1
      %s768 = scalar_select %p767, %s38, 1
      %s769 = smul.addr %s768, 8
      %s770 = scalar_lea.vmem %s5, %s769
      %p771 = pneg %p179
      %p772 = pneg %p176
      %p773 = pneg %p200
      %p774 = pneg %p197
      %p775 = pneg %p221
      %p776 = pneg %p218
      %p777 = pneg %p242
      %p778 = pneg %p239
      %p779 = pneg %p263
      %p780 = pneg %p260
      %p781 = pneg %p284
      %p782 = pneg %p281
      %p783 = pneg %p305
      %p784 = pneg %p302
      %p785 = pneg %p326
      %p786 = pneg %p323
      %p787 = pneg %p347
      %p788 = pneg %p344
      %p789 = pneg %p368
      %p790 = pneg %p365
      %p791 = pneg %p389
      %p792 = pneg %p386
      %p793 = pneg %p410
      %p794 = pneg %p407
      %p795 = pneg %p431
      %p796 = pneg %p428
      %p797 = pneg %p452
      %p798 = pneg %p449
      %p799 = pneg %p473
      %p800 = pneg %p470
      %p801 = pneg %p494
      %p802 = pneg %p491
      %p803 = pneg %p515
      %p804 = pneg %p512
      %p805 = pneg %p536
      %p806 = pneg %p533
      %p807 = pneg %p557
      %p808 = pneg %p554
      %p809 = pneg %p578
      %p810 = pneg %p575
      %p811 = pneg %p604
      %p812 = pneg %p601
      %p813 = scmp.lt.s32.totalorder %s38, 1
      %s814 = scalar_select %p813, %s38, 1
      %s815 = scalar_lea.vmem %s25, %s814
      %p816 = pneg %p630
      %p817 = pneg %p627
      %p818 = scmp.lt.s32.totalorder %s38, 1
      %s819 = scalar_select %p818, %s38, 1
      %s820 = scalar_lea.vmem %s26, %s819
      %p821 = scmp.lt.s32.totalorder %s38, 1
      %s822 = scalar_select %p821, %s38, 1
      %s823 = smul.addr %s822, 8
      %s824 = scalar_lea.vmem %s0, %s823
      %p825 = scmp.lt.s32.totalorder %s38, 1
      %s826 = scalar_select %p825, %s38, 1
      %s827 = smul.addr %s826, 8
      %s828 = scalar_lea.vmem %s1, %s827
      %p829 = scmp.lt.s32.totalorder %s38, 1
      %s830 = scalar_select %p829, %s38, 1
      %s831 = scalar_lea.vmem %s2, %s830
      %p832 = scmp.lt.s32.totalorder %s38, 1
      %s833 = scalar_select %p832, %s38, 1
      %s834 = smul.addr %s833, 8
      %s835 = scalar_lea.vmem %s5, %s834
      %p836 = scmp.lt.s32.totalorder %s38, 1
      %s837 = scalar_select %p836, %s38, 1
      %s838 = scalar_lea.vmem %s25, %s837
      %p839 = scmp.lt.s32.totalorder %s38, 1
      %s840 = scalar_select %p839, %s38, 1
      %s841 = scalar_lea.vmem %s26, %s840
      %v842 = vld [vmem:[%s831] sm:$0x1]
      %v843 = vld [vmem:[%s824] sm:$0xff]
      %v844 = vld [vmem:[%s6] sm:$0x1]
      %v845 = vmul.f32 %v843, %v843
      %vm846 = vcmask 261120
      %v847 = vsel %vm846, %v845, 0.0
      %848 = vadd.xlane.f32.xlu0 %v847
      %v849 = vpop.xlane.xlu0 %848
      %v850 = vrcp.pop 32.0
      %v851 = vmul.f32 %v849, %v850
      %v852 = vadd.f32 %v851, 1e-06
      %v853 = vrsqrt.pop %v852
      %v854 = vmul.f32 %v843, %v853
      %v856 = vlaneseq
      %v857 = vshrl.u32 %v856, 7
      %v858 = vsub.s32 0, %v857
      %v859 = vrot.slane %v844, %v858
      %v861 = vmul.f32 %v854, %v859
      %v862 = vld [vmem:[%s7] sm:$0xff]
      %v863 = vld [vmem:[%s7 + $0x8] sm:$0xff]
      %v864 = vld [vmem:[%s7 + $0x10] sm:$0xff]
      %v865 = vld [vmem:[%s7 + $0x18] sm:$0xff]
      %v867 = vsel %vm846, %v861, 0
      %869 = vmatprep.subr.mxu0 0.0
      %870 = vmatpush1.msra.mxu0 %v862
      %871 = vmatprep.subr.mxu0 0.0
      %872 = vmatpush1.msra.mxu0 %v863
      %873 = vmatprep.subr.mxu0 0.0
      %874 = vmatpush1.msra.mxu0 %v864
      %875 = vmatprep.subr.mxu0 0.0
      %876 = vmatpush1.msra.mxu0 %v865
      %877 = vmatprep.subr.mxu0 0.0
      %878 = vmatpush1.msra.mxu0 0.0
      %879 = vmatprep.subr.mxu0 0.0
      %880 = vmatpush1.msra.mxu0 0.0
      %881 = vmatprep.subr.mxu0 0.0
      %882 = vmatpush1.msra.mxu0 0.0
      %883 = vmatprep.subr.mxu0 0.0
      %884 = vmatpush1.msra.mxu0 0.0
      %885 = vmatprep.subr.mxu0 0.0
      %886 = vmatpush1.msra.mxu0 0.0
      %887 = vmatprep.subr.mxu0 0.0
      %888 = vmatpush1.msra.mxu0 0.0
      %889 = vmatprep.subr.mxu0 0.0
      %890 = vmatpush1.msra.mxu0 0.0
      %891 = vmatprep.subr.mxu0 0.0
      %892 = vmatpush1.msra.mxu0 0.0
      %893 = vmatprep.subr.mxu0 0.0
      %894 = vmatpush1.msra.mxu0 0.0
      %895 = vmatprep.subr.mxu0 0.0
      %896 = vmatpush1.msra.mxu0 0.0
      %897 = vmatprep.subr.mxu0 0.0
      %898 = vmatpush1.msra.mxu0 0.0
      %899 = vmatprep.subr.mxu0 0.0
      %900 = vmatpush1.msra.mxu0 0.0
      %901 = vmatprep.subr.mxu0 0.0
      %902 = vmatpush1.msra.mxu0 0.0
      %903 = vmatprep.subr.mxu0 0.0
      %904 = vmatpush1.msra.mxu0 0.0
      %905 = vmatprep.subr.mxu0 0.0
      %906 = vmatpush1.msra.mxu0 0.0
      %907 = vmatprep.subr.mxu0 0.0
      %908 = vmatpush1.msra.mxu0 0.0
      %909 = vmatprep.subr.mxu0 0.0
      %910 = vmatpush1.msra.mxu0 0.0
      %911 = vmatprep.subr.mxu0 0.0
      %912 = vmatpush1.msra.mxu0 0.0
      %913 = vmatprep.subr.mxu0 0.0
      %914 = vmatpush1.msra.mxu0 0.0
      %915 = vmatprep.subr.mxu0 0.0
      %916 = vmatpush1.msra.mxu0 0.0
      %917 = vmatprep.subr.mxu0 0.0
      %918 = vmatpush1.msra.mxu0 0.0
      %919 = vmatprep.subr.mxu0 0.0
      %920 = vmatpush1.msra.mxu0 0.0
      %921 = vmatprep.subr.mxu0 0.0
      %922 = vmatpush1.msra.mxu0 0.0
      %923 = vmatprep.subr.mxu0 0.0
      %924 = vmatpush1.msra.mxu0 0.0
      %925 = vmatprep.subr.mxu0 0.0
      %926 = vmatpush1.msra.mxu0 0.0
      %927 = vmatprep.subr.mxu0 0.0
      %928 = vmatpush1.msra.mxu0 0.0
      %929 = vmatprep.subr.mxu0 0.0
      %930 = vmatpush1.msra.mxu0 0.0
      %931 = vmatprep.subr.mxu0 0.0
      %932 = vmatpush1.msra.mxu0 0.0
      %933 = vmatprep.mubr.f32.mxu0 0.0
      %934 = vmatmul.mubr.f32.gmra.mrb[0].mxu0 %v867
      %v935 = vpop.f32.mrb[0].mxu0
      %v936 = vadd.f32 0.0, %v935
      %v937 = vpop.f32.mrb[0].mxu0
      %938 = vdwg.mxu0
      %v939 = vld [vmem:[%s8] sm:$0xff]
      %v940 = vld [vmem:[%s8 + $0x8] sm:$0xff]
      %v941 = vld [vmem:[%s8 + $0x10] sm:$0xff]
      %v942 = vld [vmem:[%s8 + $0x18] sm:$0xff]
      %v943 = vld [vmem:[%s3] sm:$0xff]
      %v944 = vld [vmem:[%s3 + $0x8] sm:$0xff]
      %v945 = vld [vmem:[%s3 + $0x10] sm:$0xff]
      %v946 = vld [vmem:[%s3 + $0x18] sm:$0xff]
      %948 = vrot.lane.b32.xlu0 %v936, 96
      %v949 = vpop.permute.xlu0 %948
      %vm950 = vcmask 64512
      %v951 = vsel %vm950, %v936, 0
      %v953 = vsel %vm950, %v949, 0
      %955 = vmatprep.subr.mxu0 0.0
      %956 = vmatpush1.xpose.msra.mxu0 %v953
      %957 = vmatprep.subr.mxu0 0.0
      %958 = vmatpush1.xpose.msra.mxu0 0.0
      %959 = vmatprep.subr.mxu0 0.0
      %960 = vmatpush1.xpose.msra.mxu0 0.0
      %961 = vmatprep.subr.mxu0 0.0
      %962 = vmatpush1.xpose.msra.mxu0 0.0
      %963 = vmatprep.subr.mxu0 0.0
      %964 = vmatpush1.xpose.msra.mxu0 0.0
      %965 = vmatprep.subr.mxu0 0.0
      %966 = vmatpush1.xpose.msra.mxu0 0.0
      %967 = vmatprep.subr.mxu0 0.0
      %968 = vmatpush1.xpose.msra.mxu0 0.0
      %969 = vmatprep.subr.mxu0 0.0
      %970 = vmatpush1.xpose.msra.mxu0 0.0
      %971 = vmatprep.subr.mxu0 0.0
      %972 = vmatpush1.xpose.msra.mxu0 0.0
      %973 = vmatprep.subr.mxu0 0.0
      %974 = vmatpush1.xpose.msra.mxu0 0.0
      %975 = vmatprep.subr.mxu0 0.0
      %976 = vmatpush1.xpose.msra.mxu0 0.0
      %977 = vmatprep.subr.mxu0 0.0
      %978 = vmatpush1.xpose.msra.mxu0 0.0
      %979 = vmatprep.subr.mxu0 0.0
      %980 = vmatpush1.xpose.msra.mxu0 0.0
      %981 = vmatprep.subr.mxu0 0.0
      %982 = vmatpush1.xpose.msra.mxu0 0.0
      %983 = vmatprep.subr.mxu0 0.0
      %984 = vmatpush1.xpose.msra.mxu0 0.0
      %985 = vmatprep.subr.mxu0 0.0
      %986 = vmatpush1.xpose.msra.mxu0 0.0
      %987 = vmatprep.subr.mxu0 0.0
      %988 = vmatpush1.xpose.msra.mxu0 0.0
      %989 = vmatprep.subr.mxu0 0.0
      %990 = vmatpush1.xpose.msra.mxu0 0.0
      %991 = vmatprep.subr.mxu0 0.0
      %992 = vmatpush1.xpose.msra.mxu0 0.0
      %993 = vmatprep.subr.mxu0 0.0
      %994 = vmatpush1.xpose.msra.mxu0 0.0
      %995 = vmatprep.subr.mxu0 0.0
      %996 = vmatpush1.xpose.msra.mxu0 0.0
      %997 = vmatprep.subr.mxu0 0.0
      %998 = vmatpush1.xpose.msra.mxu0 0.0
      %999 = vmatprep.subr.mxu0 0.0
      %1000 = vmatpush1.xpose.msra.mxu0 0.0
      %1001 = vmatprep.subr.mxu0 0.0
      %1002 = vmatpush1.xpose.msra.mxu0 0.0
      %1003 = vmatprep.subr.mxu0 0.0
      %1004 = vmatpush1.xpose.msra.mxu0 0.0
      %1005 = vmatprep.subr.mxu0 0.0
      %1006 = vmatpush1.xpose.msra.mxu0 0.0
      %1007 = vmatprep.subr.mxu0 0.0
      %1008 = vmatpush1.xpose.msra.mxu0 0.0
      %1009 = vmatprep.subr.mxu0 0.0
      %1010 = vmatpush1.xpose.msra.mxu0 0.0
      %1011 = vmatprep.subr.mxu0 0.0
      %1012 = vmatpush1.xpose.msra.mxu0 0.0
      %1013 = vmatprep.subr.mxu0 0.0
      %1014 = vmatpush1.xpose.msra.mxu0 0.0
      %1015 = vmatprep.subr.mxu0 0.0
      %1016 = vmatpush1.xpose.msra.mxu0 0.0
      %1017 = vmatprep.subr.mxu0 0.0
      %1018 = vmatpush1.xpose.msra.mxu0 0.0
      %1019 = vmatprep.mubr.f32.mxu0 0.0
      %1020 = vmatmul.mubr.f32.gmra.mrb[0].mxu0 %v951
      %v1021 = vpop.f32.mrb[0].mxu0
      %v1022 = vadd.f32 %v943, %v1021
      %v1023 = vpop.f32.mrb[0].mxu0
      %1024 = vdwg.mxu0
      %v1026 = vlaneseq
      %v1027 = vshrl.u32 %v1026, 7
      %v1028 = vsub.s32 0, %v1027
      %v1029 = vrot.slane %v842, %v1028
      %v1031 = vadd.f32 %v1022, %v1029
      %v1032 = vsel %vm950, %v1031, -inf
      %1033 = vmax.xlane.f32.xlu0 %v1032
      %v1034 = vpop.xlane.xlu0 %1033
      %v1035 = vsub.f32 %v1031, %v1034
      %v1036 = vmul.f32 %v1035, 1.442695
      %v1037 = vpow.pop %v1036
      %v1038 = vsel %vm950, %v1037, 0.0
      %1039 = vadd.xlane.f32.xlu0 %v1038
      %v1040 = vpop.xlane.xlu0 %1039
      %v1041 = vrcp.pop %v1040
      %v1042 = vmul.f32 %v1037, %v1041
      %1043 = vrot.lane.b32.xlu0 %v936, 64
      %v1044 = vpop.permute.xlu0 %1043
      %v1047 = vsel %vm950, %v1042, 0
      %1049 = vmatprep.subr.mxu0 0.0
      %1050 = vmatpush1.msra.mxu0 %v1044
      %1051 = vmatprep.subr.mxu0 0.0
      %1052 = vmatpush1.msra.mxu0 0.0
      %1053 = vmatprep.subr.mxu0 0.0
      %1054 = vmatpush1.msra.mxu0 0.0
      %1055 = vmatprep.subr.mxu0 0.0
      %1056 = vmatpush1.msra.mxu0 0.0
      %1057 = vmatprep.subr.mxu0 0.0
      %1058 = vmatpush1.msra.mxu0 0.0
      %1059 = vmatprep.subr.mxu0 0.0
      %1060 = vmatpush1.msra.mxu0 0.0
      %1061 = vmatprep.subr.mxu0 0.0
      %1062 = vmatpush1.msra.mxu0 0.0
      %1063 = vmatprep.subr.mxu0 0.0
      %1064 = vmatpush1.msra.mxu0 0.0
      %1065 = vmatprep.subr.mxu0 0.0
      %1066 = vmatpush1.msra.mxu0 0.0
      %1067 = vmatprep.subr.mxu0 0.0
      %1068 = vmatpush1.msra.mxu0 0.0
      %1069 = vmatprep.subr.mxu0 0.0
      %1070 = vmatpush1.msra.mxu0 0.0
      %1071 = vmatprep.subr.mxu0 0.0
      %1072 = vmatpush1.msra.mxu0 0.0
      %1073 = vmatprep.subr.mxu0 0.0
      %1074 = vmatpush1.msra.mxu0 0.0
      %1075 = vmatprep.subr.mxu0 0.0
      %1076 = vmatpush1.msra.mxu0 0.0
      %1077 = vmatprep.subr.mxu0 0.0
      %1078 = vmatpush1.msra.mxu0 0.0
      %1079 = vmatprep.subr.mxu0 0.0
      %1080 = vmatpush1.msra.mxu0 0.0
      %1081 = vmatprep.subr.mxu0 0.0
      %1082 = vmatpush1.msra.mxu0 0.0
      %1083 = vmatprep.subr.mxu0 0.0
      %1084 = vmatpush1.msra.mxu0 0.0
      %1085 = vmatprep.subr.mxu0 0.0
      %1086 = vmatpush1.msra.mxu0 0.0
      %1087 = vmatprep.subr.mxu0 0.0
      %1088 = vmatpush1.msra.mxu0 0.0
      %1089 = vmatprep.subr.mxu0 0.0
      %1090 = vmatpush1.msra.mxu0 0.0
      %1091 = vmatprep.subr.mxu0 0.0
      %1092 = vmatpush1.msra.mxu0 0.0
      %1093 = vmatprep.subr.mxu0 0.0
      %1094 = vmatpush1.msra.mxu0 0.0
      %1095 = vmatprep.subr.mxu0 0.0
      %1096 = vmatpush1.msra.mxu0 0.0
      %1097 = vmatprep.subr.mxu0 0.0
      %1098 = vmatpush1.msra.mxu0 0.0
      %1099 = vmatprep.subr.mxu0 0.0
      %1100 = vmatpush1.msra.mxu0 0.0
      %1101 = vmatprep.subr.mxu0 0.0
      %1102 = vmatpush1.msra.mxu0 0.0
      %1103 = vmatprep.subr.mxu0 0.0
      %1104 = vmatpush1.msra.mxu0 0.0
      %1105 = vmatprep.subr.mxu0 0.0
      %1106 = vmatpush1.msra.mxu0 0.0
      %1107 = vmatprep.subr.mxu0 0.0
      %1108 = vmatpush1.msra.mxu0 0.0
      %1109 = vmatprep.subr.mxu0 0.0
      %1110 = vmatpush1.msra.mxu0 0.0
      %1111 = vmatprep.subr.mxu0 0.0
      %1112 = vmatpush1.msra.mxu0 0.0
      %1113 = vmatprep.mubr.f32.mxu0 0.0
      %1114 = vmatmul.mubr.f32.gmra.mrb[0].mxu0 %v1047
      %v1115 = vpop.f32.mrb[0].mxu0
      %v1116 = vadd.f32 0.0, %v1115
      %v1117 = vpop.f32.mrb[0].mxu0
      %1118 = vdwg.mxu0
      %1119 = vrot.lane.b32.xlu0 %v936, 120
      %v1120 = vpop.permute.xlu0 %1119
      %1121 = vrot.lane.b32.xlu0 %v936, 88
      %v1122 = vpop.permute.xlu0 %1121
      %v1123 = vsel %vm950, %v1120, 0
      %v1125 = vsel %vm950, %v1122, 0
      %1127 = vmatprep.subr.mxu0 0.0
      %1128 = vmatpush1.xpose.msra.mxu0 %v1125
      %1129 = vmatprep.subr.mxu0 0.0
      %1130 = vmatpush1.xpose.msra.mxu0 0.0
      %1131 = vmatprep.subr.mxu0 0.0
      %1132 = vmatpush1.xpose.msra.mxu0 0.0
      %1133 = vmatprep.subr.mxu0 0.0
      %1134 = vmatpush1.xpose.msra.mxu0 0.0
      %1135 = vmatprep.subr.mxu0 0.0
      %1136 = vmatpush1.xpose.msra.mxu0 0.0
      %1137 = vmatprep.subr.mxu0 0.0
      %1138 = vmatpush1.xpose.msra.mxu0 0.0
      %1139 = vmatprep.subr.mxu0 0.0
      %1140 = vmatpush1.xpose.msra.mxu0 0.0
      %1141 = vmatprep.subr.mxu0 0.0
      %1142 = vmatpush1.xpose.msra.mxu0 0.0
      %1143 = vmatprep.subr.mxu0 0.0
      %1144 = vmatpush1.xpose.msra.mxu0 0.0
      %1145 = vmatprep.subr.mxu0 0.0
      %1146 = vmatpush1.xpose.msra.mxu0 0.0
      %1147 = vmatprep.subr.mxu0 0.0
      %1148 = vmatpush1.xpose.msra.mxu0 0.0
      %1149 = vmatprep.subr.mxu0 0.0
      %1150 = vmatpush1.xpose.msra.mxu0 0.0
      %1151 = vmatprep.subr.mxu0 0.0
      %1152 = vmatpush1.xpose.msra.mxu0 0.0
      %1153 = vmatprep.subr.mxu0 0.0
      %1154 = vmatpush1.xpose.msra.mxu0 0.0
      %1155 = vmatprep.subr.mxu0 0.0
      %1156 = vmatpush1.xpose.msra.mxu0 0.0
      %1157 = vmatprep.subr.mxu0 0.0
      %1158 = vmatpush1.xpose.msra.mxu0 0.0
      %1159 = vmatprep.subr.mxu0 0.0
      %1160 = vmatpush1.xpose.msra.mxu0 0.0
      %1161 = vmatprep.subr.mxu0 0.0
      %1162 = vmatpush1.xpose.msra.mxu0 0.0
      %1163 = vmatprep.subr.mxu0 0.0
      %1164 = vmatpush1.xpose.msra.mxu0 0.0
      %1165 = vmatprep.subr.mxu0 0.0
      %1166 = vmatpush1.xpose.msra.mxu0 0.0
      %1167 = vmatprep.subr.mxu0 0.0
      %1168 = vmatpush1.xpose.msra.mxu0 0.0
      %1169 = vmatprep.subr.mxu0 0.0
      %1170 = vmatpush1.xpose.msra.mxu0 0.0
      %1171 = vmatprep.subr.mxu0 0.0
      %1172 = vmatpush1.xpose.msra.mxu0 0.0
      %1173 = vmatprep.subr.mxu0 0.0
      %1174 = vmatpush1.xpose.msra.mxu0 0.0
      %1175 = vmatprep.subr.mxu0 0.0
      %1176 = vmatpush1.xpose.msra.mxu0 0.0
      %1177 = vmatprep.subr.mxu0 0.0
      %1178 = vmatpush1.xpose.msra.mxu0 0.0
      %1179 = vmatprep.subr.mxu0 0.0
      %1180 = vmatpush1.xpose.msra.mxu0 0.0
      %1181 = vmatprep.subr.mxu0 0.0
      %1182 = vmatpush1.xpose.msra.mxu0 0.0
      %1183 = vmatprep.subr.mxu0 0.0
      %1184 = vmatpush1.xpose.msra.mxu0 0.0
      %1185 = vmatprep.subr.mxu0 0.0
      %1186 = vmatpush1.xpose.msra.mxu0 0.0
      %1187 = vmatprep.subr.mxu0 0.0
      %1188 = vmatpush1.xpose.msra.mxu0 0.0
      %1189 = vmatprep.subr.mxu0 0.0
      %1190 = vmatpush1.xpose.msra.mxu0 0.0
      %1191 = vmatprep.mubr.f32.mxu0 0.0
      %1192 = vmatmul.mubr.f32.gmra.mrb[0].mxu0 %v1123
      %v1193 = vpop.f32.mrb[0].mxu0
      %v1194 = vadd.f32 %v944, %v1193
      %v1195 = vpop.f32.mrb[0].mxu0
      %1196 = vdwg.mxu0
      %v1197 = vadd.f32 %v1194, %v1029
      %v1198 = vsel %vm950, %v1197, -inf
      %1199 = vmax.xlane.f32.xlu0 %v1198
      %v1200 = vpop.xlane.xlu0 %1199
      %v1201 = vsub.f32 %v1197, %v1200
      %v1202 = vmul.f32 %v1201, 1.442695
      %v1203 = vpow.pop %v1202
      %v1204 = vsel %vm950, %v1203, 0.0
      %1205 = vadd.xlane.f32.xlu0 %v1204
      %v1206 = vpop.xlane.xlu0 %1205
      %v1207 = vrcp.pop %v1206
      %v1208 = vmul.f32 %v1203, %v1207
      %1209 = vrot.lane.b32.xlu0 %v936, 56
      %v1210 = vpop.permute.xlu0 %1209
      %v1213 = vsel %vm950, %v1208, 0
      %1215 = vmatprep.subr.mxu0 0.0
      %1216 = vmatpush1.msra.mxu0 %v1210
      %1217 = vmatprep.subr.mxu0 0.0
      %1218 = vmatpush1.msra.mxu0 0.0
      %1219 = vmatprep.subr.mxu0 0.0
      %1220 = vmatpush1.msra.mxu0 0.0
      %1221 = vmatprep.subr.mxu0 0.0
      %1222 = vmatpush1.msra.mxu0 0.0
      %1223 = vmatprep.subr.mxu0 0.0
      %1224 = vmatpush1.msra.mxu0 0.0
      %1225 = vmatprep.subr.mxu0 0.0
      %1226 = vmatpush1.msra.mxu0 0.0
      %1227 = vmatprep.subr.mxu0 0.0
      %1228 = vmatpush1.msra.mxu0 0.0
      %1229 = vmatprep.subr.mxu0 0.0
      %1230 = vmatpush1.msra.mxu0 0.0
      %1231 = vmatprep.subr.mxu0 0.0
      %1232 = vmatpush1.msra.mxu0 0.0
      %1233 = vmatprep.subr.mxu0 0.0
      %1234 = vmatpush1.msra.mxu0 0.0
      %1235 = vmatprep.subr.mxu0 0.0
      %1236 = vmatpush1.msra.mxu0 0.0
      %1237 = vmatprep.subr.mxu0 0.0
      %1238 = vmatpush1.msra.mxu0 0.0
      %1239 = vmatprep.subr.mxu0 0.0
      %1240 = vmatpush1.msra.mxu0 0.0
      %1241 = vmatprep.subr.mxu0 0.0
      %1242 = vmatpush1.msra.mxu0 0.0
      %1243 = vmatprep.subr.mxu0 0.0
      %1244 = vmatpush1.msra.mxu0 0.0
      %1245 = vmatprep.subr.mxu0 0.0
      %1246 = vmatpush1.msra.mxu0 0.0
      %1247 = vmatprep.subr.mxu0 0.0
      %1248 = vmatpush1.msra.mxu0 0.0
      %1249 = vmatprep.subr.mxu0 0.0
      %1250 = vmatpush1.msra.mxu0 0.0
      %1251 = vmatprep.subr.mxu0 0.0
      %1252 = vmatpush1.msra.mxu0 0.0
      %1253 = vmatprep.subr.mxu0 0.0
      %1254 = vmatpush1.msra.mxu0 0.0
      %1255 = vmatprep.subr.mxu0 0.0
      %1256 = vmatpush1.msra.mxu0 0.0
      %1257 = vmatprep.subr.mxu0 0.0
      %1258 = vmatpush1.msra.mxu0 0.0
      %1259 = vmatprep.subr.mxu0 0.0
      %1260 = vmatpush1.msra.mxu0 0.0
      %1261 = vmatprep.subr.mxu0 0.0
      %1262 = vmatpush1.msra.mxu0 0.0
      %1263 = vmatprep.subr.mxu0 0.0
      %1264 = vmatpush1.msra.mxu0 0.0
      %1265 = vmatprep.subr.mxu0 0.0
      %1266 = vmatpush1.msra.mxu0 0.0
      %1267 = vmatprep.subr.mxu0 0.0
      %1268 = vmatpush1.msra.mxu0 0.0
      %1269 = vmatprep.subr.mxu0 0.0
      %1270 = vmatpush1.msra.mxu0 0.0
      %1271 = vmatprep.subr.mxu0 0.0
      %1272 = vmatpush1.msra.mxu0 0.0
      %1273 = vmatprep.subr.mxu0 0.0
      %1274 = vmatpush1.msra.mxu0 0.0
      %1275 = vmatprep.subr.mxu0 0.0
      %1276 = vmatpush1.msra.mxu0 0.0
      %1277 = vmatprep.subr.mxu0 0.0
      %1278 = vmatpush1.msra.mxu0 0.0
      %1279 = vmatprep.mubr.f32.mxu0 0.0
      %1280 = vmatmul.mubr.f32.gmra.mrb[0].mxu0 %v1213
      %v1281 = vpop.f32.mrb[0].mxu0
      %v1282 = vadd.f32 0.0, %v1281
      %v1283 = vpop.f32.mrb[0].mxu0
      %1284 = vdwg.mxu0
      %v1286 = vsel %vm950, %v1282, 0
      %1288 = vmatprep.subr.mxu0 0.0
      %1289 = vmatpush1.msra.mxu0 %v940
      %1290 = vmatprep.subr.mxu0 0.0
      %1291 = vmatpush1.msra.mxu0 0.0
      %1292 = vmatprep.subr.mxu0 0.0
      %1293 = vmatpush1.msra.mxu0 0.0
      %1294 = vmatprep.subr.mxu0 0.0
      %1295 = vmatpush1.msra.mxu0 0.0
      %1296 = vmatprep.subr.mxu0 0.0
      %1297 = vmatpush1.msra.mxu0 0.0
      %1298 = vmatprep.subr.mxu0 0.0
      %1299 = vmatpush1.msra.mxu0 0.0
      %1300 = vmatprep.subr.mxu0 0.0
      %1301 = vmatpush1.msra.mxu0 0.0
      %1302 = vmatprep.subr.mxu0 0.0
      %1303 = vmatpush1.msra.mxu0 0.0
      %1304 = vmatprep.subr.mxu0 0.0
      %1305 = vmatpush1.msra.mxu0 0.0
      %1306 = vmatprep.subr.mxu0 0.0
      %1307 = vmatpush1.msra.mxu0 0.0
      %1308 = vmatprep.subr.mxu0 0.0
      %1309 = vmatpush1.msra.mxu0 0.0
      %1310 = vmatprep.subr.mxu0 0.0
      %1311 = vmatpush1.msra.mxu0 0.0
      %1312 = vmatprep.subr.mxu0 0.0
      %1313 = vmatpush1.msra.mxu0 0.0
      %1314 = vmatprep.subr.mxu0 0.0
      %1315 = vmatpush1.msra.mxu0 0.0
      %1316 = vmatprep.subr.mxu0 0.0
      %1317 = vmatpush1.msra.mxu0 0.0
      %1318 = vmatprep.subr.mxu0 0.0
      %1319 = vmatpush1.msra.mxu0 0.0
      %1320 = vmatprep.subr.mxu0 0.0
      %1321 = vmatpush1.msra.mxu0 0.0
      %1322 = vmatprep.subr.mxu0 0.0
      %1323 = vmatpush1.msra.mxu0 0.0
      %1324 = vmatprep.subr.mxu0 0.0
      %1325 = vmatpush1.msra.mxu0 0.0
      %1326 = vmatprep.subr.mxu0 0.0
      %1327 = vmatpush1.msra.mxu0 0.0
      %1328 = vmatprep.subr.mxu0 0.0
      %1329 = vmatpush1.msra.mxu0 0.0
      %1330 = vmatprep.subr.mxu0 0.0
      %1331 = vmatpush1.msra.mxu0 0.0
      %1332 = vmatprep.subr.mxu0 0.0
      %1333 = vmatpush1.msra.mxu0 0.0
      %1334 = vmatprep.subr.mxu0 0.0
      %1335 = vmatpush1.msra.mxu0 0.0
      %1336 = vmatprep.subr.mxu0 0.0
      %1337 = vmatpush1.msra.mxu0 0.0
      %1338 = vmatprep.subr.mxu0 0.0
      %1339 = vmatpush1.msra.mxu0 0.0
      %1340 = vmatprep.subr.mxu0 0.0
      %1341 = vmatpush1.msra.mxu0 0.0
      %1342 = vmatprep.subr.mxu0 0.0
      %1343 = vmatpush1.msra.mxu0 0.0
      %1344 = vmatprep.subr.mxu0 0.0
      %1345 = vmatpush1.msra.mxu0 0.0
      %1346 = vmatprep.subr.mxu0 0.0
      %1347 = vmatpush1.msra.mxu0 0.0
      %1348 = vmatprep.subr.mxu0 0.0
      %1349 = vmatpush1.msra.mxu0 0.0
      %1350 = vmatprep.subr.mxu0 0.0
      %1351 = vmatpush1.msra.mxu0 0.0
      %1352 = vmatprep.mubr.f32.mxu0 0.0
      %1353 = vmatmul.mubr.f32.gmra.mrb[0].mxu0 %v1286
      %v1354 = vpop.f32.mrb[0].mxu0
      %v1355 = vadd.f32 0.0, %v1354
      %v1356 = vpop.f32.mrb[0].mxu0
      %1357 = vdwg.mxu0
      %v1359 = vsel %vm950, %v1116, 0
      %1361 = vmatprep.subr.mxu0 0.0
      %1362 = vmatpush1.msra.mxu0 %v939
      %1363 = vmatprep.subr.mxu0 0.0
      %1364 = vmatpush1.msra.mxu0 0.0
      %1365 = vmatprep.subr.mxu0 0.0
      %1366 = vmatpush1.msra.mxu0 0.0
      %1367 = vmatprep.subr.mxu0 0.0
      %1368 = vmatpush1.msra.mxu0 0.0
      %1369 = vmatprep.subr.mxu0 0.0
      %1370 = vmatpush1.msra.mxu0 0.0
      %1371 = vmatprep.subr.mxu0 0.0
      %1372 = vmatpush1.msra.mxu0 0.0
      %1373 = vmatprep.subr.mxu0 0.0
      %1374 = vmatpush1.msra.mxu0 0.0
      %1375 = vmatprep.subr.mxu0 0.0
      %1376 = vmatpush1.msra.mxu0 0.0
      %1377 = vmatprep.subr.mxu0 0.0
      %1378 = vmatpush1.msra.mxu0 0.0
      %1379 = vmatprep.subr.mxu0 0.0
      %1380 = vmatpush1.msra.mxu0 0.0
      %1381 = vmatprep.subr.mxu0 0.0
      %1382 = vmatpush1.msra.mxu0 0.0
      %1383 = vmatprep.subr.mxu0 0.0
      %1384 = vmatpush1.msra.mxu0 0.0
      %1385 = vmatprep.subr.mxu0 0.0
      %1386 = vmatpush1.msra.mxu0 0.0
      %1387 = vmatprep.subr.mxu0 0.0
      %1388 = vmatpush1.msra.mxu0 0.0
      %1389 = vmatprep.subr.mxu0 0.0
      %1390 = vmatpush1.msra.mxu0 0.0
      %1391 = vmatprep.subr.mxu0 0.0
      %1392 = vmatpush1.msra.mxu0 0.0
      %1393 = vmatprep.subr.mxu0 0.0
      %1394 = vmatpush1.msra.mxu0 0.0
      %1395 = vmatprep.subr.mxu0 0.0
      %1396 = vmatpush1.msra.mxu0 0.0
      %1397 = vmatprep.subr.mxu0 0.0
      %1398 = vmatpush1.msra.mxu0 0.0
      %1399 = vmatprep.subr.mxu0 0.0
      %1400 = vmatpush1.msra.mxu0 0.0
      %1401 = vmatprep.subr.mxu0 0.0
      %1402 = vmatpush1.msra.mxu0 0.0
      %1403 = vmatprep.subr.mxu0 0.0
      %1404 = vmatpush1.msra.mxu0 0.0
      %1405 = vmatprep.subr.mxu0 0.0
      %1406 = vmatpush1.msra.mxu0 0.0
      %1407 = vmatprep.subr.mxu0 0.0
      %1408 = vmatpush1.msra.mxu0 0.0
      %1409 = vmatprep.subr.mxu0 0.0
      %1410 = vmatpush1.msra.mxu0 0.0
      %1411 = vmatprep.subr.mxu0 0.0
      %1412 = vmatpush1.msra.mxu0 0.0
      %1413 = vmatprep.subr.mxu0 0.0
      %1414 = vmatpush1.msra.mxu0 0.0
      %1415 = vmatprep.subr.mxu0 0.0
      %1416 = vmatpush1.msra.mxu0 0.0
      %1417 = vmatprep.subr.mxu0 0.0
      %1418 = vmatpush1.msra.mxu0 0.0
      %1419 = vmatprep.subr.mxu0 0.0
      %1420 = vmatpush1.msra.mxu0 0.0
      %1421 = vmatprep.subr.mxu0 0.0
      %1422 = vmatpush1.msra.mxu0 0.0
      %1423 = vmatprep.subr.mxu0 0.0
      %1424 = vmatpush1.msra.mxu0 0.0
      %1425 = vmatprep.mubr.f32.mxu0 0.0
      %1426 = vmatmul.mubr.f32.gmra.mrb[0].mxu0 %v1359
      %v1427 = vpop.f32.mrb[0].mxu0
      %v1428 = vadd.f32 %v1355, %v1427
      %v1429 = vpop.f32.mrb[0].mxu0
      %1430 = vdwg.mxu0
      %1431 = vrot.lane.b32.xlu0 %v936, 112
      %v1432 = vpop.permute.xlu0 %1431
      %1433 = vrot.lane.b32.xlu0 %v936, 80
      %v1434 = vpop.permute.xlu0 %1433
      %v1435 = vsel %vm950, %v1432, 0
      %v1437 = vsel %vm950, %v1434, 0
      %1439 = vmatprep.subr.mxu0 0.0
      %1440 = vmatpush1.xpose.msra.mxu0 %v1437
      %1441 = vmatprep.subr.mxu0 0.0
      %1442 = vmatpush1.xpose.msra.mxu0 0.0
      %1443 = vmatprep.subr.mxu0 0.0
      %1444 = vmatpush1.xpose.msra.mxu0 0.0
      %1445 = vmatprep.subr.mxu0 0.0
      %1446 = vmatpush1.xpose.msra.mxu0 0.0
      %1447 = vmatprep.subr.mxu0 0.0
      %1448 = vmatpush1.xpose.msra.mxu0 0.0
      %1449 = vmatprep.subr.mxu0 0.0
      %1450 = vmatpush1.xpose.msra.mxu0 0.0
      %1451 = vmatprep.subr.mxu0 0.0
      %1452 = vmatpush1.xpose.msra.mxu0 0.0
      %1453 = vmatprep.subr.mxu0 0.0
      %1454 = vmatpush1.xpose.msra.mxu0 0.0
      %1455 = vmatprep.subr.mxu0 0.0
      %1456 = vmatpush1.xpose.msra.mxu0 0.0
      %1457 = vmatprep.subr.mxu0 0.0
      %1458 = vmatpush1.xpose.msra.mxu0 0.0
      %1459 = vmatprep.subr.mxu0 0.0
      %1460 = vmatpush1.xpose.msra.mxu0 0.0
      %1461 = vmatprep.subr.mxu0 0.0
      %1462 = vmatpush1.xpose.msra.mxu0 0.0
      %1463 = vmatprep.subr.mxu0 0.0
      %1464 = vmatpush1.xpose.msra.mxu0 0.0
      %1465 = vmatprep.subr.mxu0 0.0
      %1466 = vmatpush1.xpose.msra.mxu0 0.0
      %1467 = vmatprep.subr.mxu0 0.0
      %1468 = vmatpush1.xpose.msra.mxu0 0.0
      %1469 = vmatprep.subr.mxu0 0.0
      %1470 = vmatpush1.xpose.msra.mxu0 0.0
      %1471 = vmatprep.subr.mxu0 0.0
      %1472 = vmatpush1.xpose.msra.mxu0 0.0
      %1473 = vmatprep.subr.mxu0 0.0
      %1474 = vmatpush1.xpose.msra.mxu0 0.0
      %1475 = vmatprep.subr.mxu0 0.0
      %1476 = vmatpush1.xpose.msra.mxu0 0.0
      %1477 = vmatprep.subr.mxu0 0.0
      %1478 = vmatpush1.xpose.msra.mxu0 0.0
      %1479 = vmatprep.subr.mxu0 0.0
      %1480 = vmatpush1.xpose.msra.mxu0 0.0
      %1481 = vmatprep.subr.mxu0 0.0
      %1482 = vmatpush1.xpose.msra.mxu0 0.0
      %1483 = vmatprep.subr.mxu0 0.0
      %1484 = vmatpush1.xpose.msra.mxu0 0.0
      %1485 = vmatprep.subr.mxu0 0.0
      %1486 = vmatpush1.xpose.msra.mxu0 0.0
      %1487 = vmatprep.subr.mxu0 0.0
      %1488 = vmatpush1.xpose.msra.mxu0 0.0
      %1489 = vmatprep.subr.mxu0 0.0
      %1490 = vmatpush1.xpose.msra.mxu0 0.0
      %1491 = vmatprep.subr.mxu0 0.0
      %1492 = vmatpush1.xpose.msra.mxu0 0.0
      %1493 = vmatprep.subr.mxu0 0.0
      %1494 = vmatpush1.xpose.msra.mxu0 0.0
      %1495 = vmatprep.subr.mxu0 0.0
      %1496 = vmatpush1.xpose.msra.mxu0 0.0
      %1497 = vmatprep.subr.mxu0 0.0
      %1498 = vmatpush1.xpose.msra.mxu0 0.0
      %1499 = vmatprep.subr.mxu0 0.0
      %1500 = vmatpush1.xpose.msra.mxu0 0.0
      %1501 = vmatprep.subr.mxu0 0.0
      %1502 = vmatpush1.xpose.msra.mxu0 0.0
      %1503 = vmatprep.mubr.f32.mxu0 0.0
      %1504 = vmatmul.mubr.f32.gmra.mrb[0].mxu0 %v1435
      %v1505 = vpop.f32.mrb[0].mxu0
      %v1506 = vadd.f32 %v945, %v1505
      %v1507 = vpop.f32.mrb[0].mxu0
      %1508 = vdwg.mxu0
      %v1509 = vadd.f32 %v1506, %v1029
      %v1510 = vsel %vm950, %v1509, -inf
      %1511 = vmax.xlane.f32.xlu0 %v1510
      %v1512 = vpop.xlane.xlu0 %1511
      %v1513 = vsub.f32 %v1509, %v1512
      %v1514 = vmul.f32 %v1513, 1.442695
      %v1515 = vpow.pop %v1514
      %v1516 = vsel %vm950, %v1515, 0.0
      %1517 = vadd.xlane.f32.xlu0 %v1516
      %v1518 = vpop.xlane.xlu0 %1517
      %v1519 = vrcp.pop %v1518
      %v1520 = vmul.f32 %v1515, %v1519
      %1521 = vrot.lane.b32.xlu0 %v936, 48
      %v1522 = vpop.permute.xlu0 %1521
      %v1525 = vsel %vm950, %v1520, 0
      %1527 = vmatprep.subr.mxu0 0.0
      %1528 = vmatpush1.msra.mxu0 %v1522
      %1529 = vmatprep.subr.mxu0 0.0
      %1530 = vmatpush1.msra.mxu0 0.0
      %1531 = vmatprep.subr.mxu0 0.0
      %1532 = vmatpush1.msra.mxu0 0.0
      %1533 = vmatprep.subr.mxu0 0.0
      %1534 = vmatpush1.msra.mxu0 0.0
      %1535 = vmatprep.subr.mxu0 0.0
      %1536 = vmatpush1.msra.mxu0 0.0
      %1537 = vmatprep.subr.mxu0 0.0
      %1538 = vmatpush1.msra.mxu0 0.0
      %1539 = vmatprep.subr.mxu0 0.0
      %1540 = vmatpush1.msra.mxu0 0.0
      %1541 = vmatprep.subr.mxu0 0.0
      %1542 = vmatpush1.msra.mxu0 0.0
      %1543 = vmatprep.subr.mxu0 0.0
      %1544 = vmatpush1.msra.mxu0 0.0
      %1545 = vmatprep.subr.mxu0 0.0
      %1546 = vmatpush1.msra.mxu0 0.0
      %1547 = vmatprep.subr.mxu0 0.0
      %1548 = vmatpush1.msra.mxu0 0.0
      %1549 = vmatprep.subr.mxu0 0.0
      %1550 = vmatpush1.msra.mxu0 0.0
      %1551 = vmatprep.subr.mxu0 0.0
      %1552 = vmatpush1.msra.mxu0 0.0
      %1553 = vmatprep.subr.mxu0 0.0
      %1554 = vmatpush1.msra.mxu0 0.0
      %1555 = vmatprep.subr.mxu0 0.0
      %1556 = vmatpush1.msra.mxu0 0.0
      %1557 = vmatprep.subr.mxu0 0.0
      %1558 = vmatpush1.msra.mxu0 0.0
      %1559 = vmatprep.subr.mxu0 0.0
      %1560 = vmatpush1.msra.mxu0 0.0
      %1561 = vmatprep.subr.mxu0 0.0
      %1562 = vmatpush1.msra.mxu0 0.0
      %1563 = vmatprep.subr.mxu0 0.0
      %1564 = vmatpush1.msra.mxu0 0.0
      %1565 = vmatprep.subr.mxu0 0.0
      %1566 = vmatpush1.msra.mxu0 0.0
      %1567 = vmatprep.subr.mxu0 0.0
      %1568 = vmatpush1.msra.mxu0 0.0
      %1569 = vmatprep.subr.mxu0 0.0
      %1570 = vmatpush1.msra.mxu0 0.0
      %1571 = vmatprep.subr.mxu0 0.0
      %1572 = vmatpush1.msra.mxu0 0.0
      %1573 = vmatprep.subr.mxu0 0.0
      %1574 = vmatpush1.msra.mxu0 0.0
      %1575 = vmatprep.subr.mxu0 0.0
      %1576 = vmatpush1.msra.mxu0 0.0
      %1577 = vmatprep.subr.mxu0 0.0
      %1578 = vmatpush1.msra.mxu0 0.0
      %1579 = vmatprep.subr.mxu0 0.0
      %1580 = vmatpush1.msra.mxu0 0.0
      %1581 = vmatprep.subr.mxu0 0.0
      %1582 = vmatpush1.msra.mxu0 0.0
      %1583 = vmatprep.subr.mxu0 0.0
      %1584 = vmatpush1.msra.mxu0 0.0
      %1585 = vmatprep.subr.mxu0 0.0
      %1586 = vmatpush1.msra.mxu0 0.0
      %1587 = vmatprep.subr.mxu0 0.0
      %1588 = vmatpush1.msra.mxu0 0.0
      %1589 = vmatprep.subr.mxu0 0.0
      %1590 = vmatpush1.msra.mxu0 0.0
      %1591 = vmatprep.mubr.f32.mxu0 0.0
      %1592 = vmatmul.mubr.f32.gmra.mrb[0].mxu0 %v1525
      %v1593 = vpop.f32.mrb[0].mxu0
      %v1594 = vadd.f32 0.0, %v1593
      %v1595 = vpop.f32.mrb[0].mxu0
      %1596 = vdwg.mxu0
      %v1598 = vsel %vm950, %v1594, 0
      %1600 = vmatprep.subr.mxu0 0.0
      %1601 = vmatpush1.msra.mxu0 %v941
      %1602 = vmatprep.subr.mxu0 0.0
      %1603 = vmatpush1.msra.mxu0 0.0
      %1604 = vmatprep.subr.mxu0 0.0
      %1605 = vmatpush1.msra.mxu0 0.0
      %1606 = vmatprep.subr.mxu0 0.0
      %1607 = vmatpush1.msra.mxu0 0.0
      %1608 = vmatprep.subr.mxu0 0.0
      %1609 = vmatpush1.msra.mxu0 0.0
      %1610 = vmatprep.subr.mxu0 0.0
      %1611 = vmatpush1.msra.mxu0 0.0
      %1612 = vmatprep.subr.mxu0 0.0
      %1613 = vmatpush1.msra.mxu0 0.0
      %1614 = vmatprep.subr.mxu0 0.0
      %1615 = vmatpush1.msra.mxu0 0.0
      %1616 = vmatprep.subr.mxu0 0.0
      %1617 = vmatpush1.msra.mxu0 0.0
      %1618 = vmatprep.subr.mxu0 0.0
      %1619 = vmatpush1.msra.mxu0 0.0
      %1620 = vmatprep.subr.mxu0 0.0
      %1621 = vmatpush1.msra.mxu0 0.0
      %1622 = vmatprep.subr.mxu0 0.0
      %1623 = vmatpush1.msra.mxu0 0.0
      %1624 = vmatprep.subr.mxu0 0.0
      %1625 = vmatpush1.msra.mxu0 0.0
      %1626 = vmatprep.subr.mxu0 0.0
      %1627 = vmatpush1.msra.mxu0 0.0
      %1628 = vmatprep.subr.mxu0 0.0
      %1629 = vmatpush1.msra.mxu0 0.0
      %1630 = vmatprep.subr.mxu0 0.0
      %1631 = vmatpush1.msra.mxu0 0.0
      %1632 = vmatprep.subr.mxu0 0.0
      %1633 = vmatpush1.msra.mxu0 0.0
      %1634 = vmatprep.subr.mxu0 0.0
      %1635 = vmatpush1.msra.mxu0 0.0
      %1636 = vmatprep.subr.mxu0 0.0
      %1637 = vmatpush1.msra.mxu0 0.0
      %1638 = vmatprep.subr.mxu0 0.0
      %1639 = vmatpush1.msra.mxu0 0.0
      %1640 = vmatprep.subr.mxu0 0.0
      %1641 = vmatpush1.msra.mxu0 0.0
      %1642 = vmatprep.subr.mxu0 0.0
      %1643 = vmatpush1.msra.mxu0 0.0
      %1644 = vmatprep.subr.mxu0 0.0
      %1645 = vmatpush1.msra.mxu0 0.0
      %1646 = vmatprep.subr.mxu0 0.0
      %1647 = vmatpush1.msra.mxu0 0.0
      %1648 = vmatprep.subr.mxu0 0.0
      %1649 = vmatpush1.msra.mxu0 0.0
      %1650 = vmatprep.subr.mxu0 0.0
      %1651 = vmatpush1.msra.mxu0 0.0
      %1652 = vmatprep.subr.mxu0 0.0
      %1653 = vmatpush1.msra.mxu0 0.0
      %1654 = vmatprep.subr.mxu0 0.0
      %1655 = vmatpush1.msra.mxu0 0.0
      %1656 = vmatprep.subr.mxu0 0.0
      %1657 = vmatpush1.msra.mxu0 0.0
      %1658 = vmatprep.subr.mxu0 0.0
      %1659 = vmatpush1.msra.mxu0 0.0
      %1660 = vmatprep.subr.mxu0 0.0
      %1661 = vmatpush1.msra.mxu0 0.0
      %1662 = vmatprep.subr.mxu0 0.0
      %1663 = vmatpush1.msra.mxu0 0.0
      %1664 = vmatprep.mubr.f32.mxu0 0.0
      %1665 = vmatmul.mubr.f32.gmra.mrb[0].mxu0 %v1598
      %v1666 = vpop.f32.mrb[0].mxu0
      %v1667 = vadd.f32 0.0, %v1666
      %v1668 = vpop.f32.mrb[0].mxu0
      %1669 = vdwg.mxu0
      %v1670 = vadd.f32 %v1428, %v1667
      %1671 = vrot.lane.b32.xlu0 %v936, 104
      %v1672 = vpop.permute.xlu0 %1671
      %1673 = vrot.lane.b32.xlu0 %v936, 72
      %v1674 = vpop.permute.xlu0 %1673
      %v1675 = vsel %vm950, %v1672, 0
      %v1677 = vsel %vm950, %v1674, 0
      %1679 = vmatprep.subr.mxu0 0.0
      %1680 = vmatpush1.xpose.msra.mxu0 %v1677
      %1681 = vmatprep.subr.mxu0 0.0
      %1682 = vmatpush1.xpose.msra.mxu0 0.0
      %1683 = vmatprep.subr.mxu0 0.0
      %1684 = vmatpush1.xpose.msra.mxu0 0.0
      %1685 = vmatprep.subr.mxu0 0.0
      %1686 = vmatpush1.xpose.msra.mxu0 0.0
      %1687 = vmatprep.subr.mxu0 0.0
      %1688 = vmatpush1.xpose.msra.mxu0 0.0
      %1689 = vmatprep.subr.mxu0 0.0
      %1690 = vmatpush1.xpose.msra.mxu0 0.0
      %1691 = vmatprep.subr.mxu0 0.0
      %1692 = vmatpush1.xpose.msra.mxu0 0.0
      %1693 = vmatprep.subr.mxu0 0.0
      %1694 = vmatpush1.xpose.msra.mxu0 0.0
      %1695 = vmatprep.subr.mxu0 0.0
      %1696 = vmatpush1.xpose.msra.mxu0 0.0
      %1697 = vmatprep.subr.mxu0 0.0
      %1698 = vmatpush1.xpose.msra.mxu0 0.0
      %1699 = vmatprep.subr.mxu0 0.0
      %1700 = vmatpush1.xpose.msra.mxu0 0.0
      %1701 = vmatprep.subr.mxu0 0.0
      %1702 = vmatpush1.xpose.msra.mxu0 0.0
      %1703 = vmatprep.subr.mxu0 0.0
      %1704 = vmatpush1.xpose.msra.mxu0 0.0
      %1705 = vmatprep.subr.mxu0 0.0
      %1706 = vmatpush1.xpose.msra.mxu0 0.0
      %1707 = vmatprep.subr.mxu0 0.0
      %1708 = vmatpush1.xpose.msra.mxu0 0.0
      %1709 = vmatprep.subr.mxu0 0.0
      %1710 = vmatpush1.xpose.msra.mxu0 0.0
      %1711 = vmatprep.subr.mxu0 0.0
      %1712 = vmatpush1.xpose.msra.mxu0 0.0
      %1713 = vmatprep.subr.mxu0 0.0
      %1714 = vmatpush1.xpose.msra.mxu0 0.0
      %1715 = vmatprep.subr.mxu0 0.0
      %1716 = vmatpush1.xpose.msra.mxu0 0.0
      %1717 = vmatprep.subr.mxu0 0.0
      %1718 = vmatpush1.xpose.msra.mxu0 0.0
      %1719 = vmatprep.subr.mxu0 0.0
      %1720 = vmatpush1.xpose.msra.mxu0 0.0
      %1721 = vmatprep.subr.mxu0 0.0
      %1722 = vmatpush1.xpose.msra.mxu0 0.0
      %1723 = vmatprep.subr.mxu0 0.0
      %1724 = vmatpush1.xpose.msra.mxu0 0.0
      %1725 = vmatprep.subr.mxu0 0.0
      %1726 = vmatpush1.xpose.msra.mxu0 0.0
      %1727 = vmatprep.subr.mxu0 0.0
      %1728 = vmatpush1.xpose.msra.mxu0 0.0
      %1729 = vmatprep.subr.mxu0 0.0
      %1730 = vmatpush1.xpose.msra.mxu0 0.0
      %1731 = vmatprep.subr.mxu0 0.0
      %1732 = vmatpush1.xpose.msra.mxu0 0.0
      %1733 = vmatprep.subr.mxu0 0.0
      %1734 = vmatpush1.xpose.msra.mxu0 0.0
      %1735 = vmatprep.subr.mxu0 0.0
      %1736 = vmatpush1.xpose.msra.mxu0 0.0
      %1737 = vmatprep.subr.mxu0 0.0
      %1738 = vmatpush1.xpose.msra.mxu0 0.0
      %1739 = vmatprep.subr.mxu0 0.0
      %1740 = vmatpush1.xpose.msra.mxu0 0.0
      %1741 = vmatprep.subr.mxu0 0.0
      %1742 = vmatpush1.xpose.msra.mxu0 0.0
      %1743 = vmatprep.mubr.f32.mxu0 0.0
      %1744 = vmatmul.mubr.f32.gmra.mrb[0].mxu0 %v1675
      %v1745 = vpop.f32.mrb[0].mxu0
      %v1746 = vadd.f32 %v946, %v1745
      %v1747 = vpop.f32.mrb[0].mxu0
      %1748 = vdwg.mxu0
      %v1749 = vadd.f32 %v1746, %v1029
      %v1750 = vsel %vm950, %v1749, -inf
      %1751 = vmax.xlane.f32.xlu0 %v1750
      %v1752 = vpop.xlane.xlu0 %1751
      %v1753 = vsub.f32 %v1749, %v1752
      %v1754 = vmul.f32 %v1753, 1.442695
      %v1755 = vpow.pop %v1754
      %v1756 = vsel %vm950, %v1755, 0.0
      %1757 = vadd.xlane.f32.xlu0 %v1756
      %v1758 = vpop.xlane.xlu0 %1757
      %v1759 = vrcp.pop %v1758
      %v1760 = vmul.f32 %v1755, %v1759
      %1761 = vrot.lane.b32.xlu0 %v936, 40
      %v1762 = vpop.permute.xlu0 %1761
      %v1765 = vsel %vm950, %v1760, 0
      %1767 = vmatprep.subr.mxu0 0.0
      %1768 = vmatpush1.msra.mxu0 %v1762
      %1769 = vmatprep.subr.mxu0 0.0
      %1770 = vmatpush1.msra.mxu0 0.0
      %1771 = vmatprep.subr.mxu0 0.0
      %1772 = vmatpush1.msra.mxu0 0.0
      %1773 = vmatprep.subr.mxu0 0.0
      %1774 = vmatpush1.msra.mxu0 0.0
      %1775 = vmatprep.subr.mxu0 0.0
      %1776 = vmatpush1.msra.mxu0 0.0
      %1777 = vmatprep.subr.mxu0 0.0
      %1778 = vmatpush1.msra.mxu0 0.0
      %1779 = vmatprep.subr.mxu0 0.0
      %1780 = vmatpush1.msra.mxu0 0.0
      %1781 = vmatprep.subr.mxu0 0.0
      %1782 = vmatpush1.msra.mxu0 0.0
      %1783 = vmatprep.subr.mxu0 0.0
      %1784 = vmatpush1.msra.mxu0 0.0
      %1785 = vmatprep.subr.mxu0 0.0
      %1786 = vmatpush1.msra.mxu0 0.0
      %1787 = vmatprep.subr.mxu0 0.0
      %1788 = vmatpush1.msra.mxu0 0.0
      %1789 = vmatprep.subr.mxu0 0.0
      %1790 = vmatpush1.msra.mxu0 0.0
      %1791 = vmatprep.subr.mxu0 0.0
      %1792 = vmatpush1.msra.mxu0 0.0
      %1793 = vmatprep.subr.mxu0 0.0
      %1794 = vmatpush1.msra.mxu0 0.0
      %1795 = vmatprep.subr.mxu0 0.0
      %1796 = vmatpush1.msra.mxu0 0.0
      %1797 = vmatprep.subr.mxu0 0.0
      %1798 = vmatpush1.msra.mxu0 0.0
      %1799 = vmatprep.subr.mxu0 0.0
      %1800 = vmatpush1.msra.mxu0 0.0
      %1801 = vmatprep.subr.mxu0 0.0
      %1802 = vmatpush1.msra.mxu0 0.0
      %1803 = vmatprep.subr.mxu0 0.0
      %1804 = vmatpush1.msra.mxu0 0.0
      %1805 = vmatprep.subr.mxu0 0.0
      %1806 = vmatpush1.msra.mxu0 0.0
      %1807 = vmatprep.subr.mxu0 0.0
      %1808 = vmatpush1.msra.mxu0 0.0
      %1809 = vmatprep.subr.mxu0 0.0
      %1810 = vmatpush1.msra.mxu0 0.0
      %1811 = vmatprep.subr.mxu0 0.0
      %1812 = vmatpush1.msra.mxu0 0.0
      %1813 = vmatprep.subr.mxu0 0.0
      %1814 = vmatpush1.msra.mxu0 0.0
      %1815 = vmatprep.subr.mxu0 0.0
      %1816 = vmatpush1.msra.mxu0 0.0
      %1817 = vmatprep.subr.mxu0 0.0
      %1818 = vmatpush1.msra.mxu0 0.0
      %1819 = vmatprep.subr.mxu0 0.0
      %1820 = vmatpush1.msra.mxu0 0.0
      %1821 = vmatprep.subr.mxu0 0.0
      %1822 = vmatpush1.msra.mxu0 0.0
      %1823 = vmatprep.subr.mxu0 0.0
      %1824 = vmatpush1.msra.mxu0 0.0
      %1825 = vmatprep.subr.mxu0 0.0
      %1826 = vmatpush1.msra.mxu0 0.0
      %1827 = vmatprep.subr.mxu0 0.0
      %1828 = vmatpush1.msra.mxu0 0.0
      %1829 = vmatprep.subr.mxu0 0.0
      %1830 = vmatpush1.msra.mxu0 0.0
      %1831 = vmatprep.mubr.f32.mxu0 0.0
      %1832 = vmatmul.mubr.f32.gmra.mrb[0].mxu0 %v1765
      %v1833 = vpop.f32.mrb[0].mxu0
      %v1834 = vadd.f32 0.0, %v1833
      %v1835 = vpop.f32.mrb[0].mxu0
      %1836 = vdwg.mxu0
      %v1838 = vsel %vm950, %v1834, 0
      %1840 = vmatprep.subr.mxu0 0.0
      %1841 = vmatpush1.msra.mxu0 %v942
      %1842 = vmatprep.subr.mxu0 0.0
      %1843 = vmatpush1.msra.mxu0 0.0
      %1844 = vmatprep.subr.mxu0 0.0
      %1845 = vmatpush1.msra.mxu0 0.0
      %1846 = vmatprep.subr.mxu0 0.0
      %1847 = vmatpush1.msra.mxu0 0.0
      %1848 = vmatprep.subr.mxu0 0.0
      %1849 = vmatpush1.msra.mxu0 0.0
      %1850 = vmatprep.subr.mxu0 0.0
      %1851 = vmatpush1.msra.mxu0 0.0
      %1852 = vmatprep.subr.mxu0 0.0
      %1853 = vmatpush1.msra.mxu0 0.0
      %1854 = vmatprep.subr.mxu0 0.0
      %1855 = vmatpush1.msra.mxu0 0.0
      %1856 = vmatprep.subr.mxu0 0.0
      %1857 = vmatpush1.msra.mxu0 0.0
      %1858 = vmatprep.subr.mxu0 0.0
      %1859 = vmatpush1.msra.mxu0 0.0
      %1860 = vmatprep.subr.mxu0 0.0
      %1861 = vmatpush1.msra.mxu0 0.0
      %1862 = vmatprep.subr.mxu0 0.0
      %1863 = vmatpush1.msra.mxu0 0.0
      %1864 = vmatprep.subr.mxu0 0.0
      %1865 = vmatpush1.msra.mxu0 0.0
      %1866 = vmatprep.subr.mxu0 0.0
      %1867 = vmatpush1.msra.mxu0 0.0
      %1868 = vmatprep.subr.mxu0 0.0
      %1869 = vmatpush1.msra.mxu0 0.0
      %1870 = vmatprep.subr.mxu0 0.0
      %1871 = vmatpush1.msra.mxu0 0.0
      %1872 = vmatprep.subr.mxu0 0.0
      %1873 = vmatpush1.msra.mxu0 0.0
      %1874 = vmatprep.subr.mxu0 0.0
      %1875 = vmatpush1.msra.mxu0 0.0
      %1876 = vmatprep.subr.mxu0 0.0
      %1877 = vmatpush1.msra.mxu0 0.0
      %1878 = vmatprep.subr.mxu0 0.0
      %1879 = vmatpush1.msra.mxu0 0.0
      %1880 = vmatprep.subr.mxu0 0.0
      %1881 = vmatpush1.msra.mxu0 0.0
      %1882 = vmatprep.subr.mxu0 0.0
      %1883 = vmatpush1.msra.mxu0 0.0
      %1884 = vmatprep.subr.mxu0 0.0
      %1885 = vmatpush1.msra.mxu0 0.0
      %1886 = vmatprep.subr.mxu0 0.0
      %1887 = vmatpush1.msra.mxu0 0.0
      %1888 = vmatprep.subr.mxu0 0.0
      %1889 = vmatpush1.msra.mxu0 0.0
      %1890 = vmatprep.subr.mxu0 0.0
      %1891 = vmatpush1.msra.mxu0 0.0
      %1892 = vmatprep.subr.mxu0 0.0
      %1893 = vmatpush1.msra.mxu0 0.0
      %1894 = vmatprep.subr.mxu0 0.0
      %1895 = vmatpush1.msra.mxu0 0.0
      %1896 = vmatprep.subr.mxu0 0.0
      %1897 = vmatpush1.msra.mxu0 0.0
      %1898 = vmatprep.subr.mxu0 0.0
      %1899 = vmatpush1.msra.mxu0 0.0
      %1900 = vmatprep.subr.mxu0 0.0
      %1901 = vmatpush1.msra.mxu0 0.0
      %1902 = vmatprep.subr.mxu0 0.0
      %1903 = vmatpush1.msra.mxu0 0.0
      %1904 = vmatprep.mubr.f32.mxu0 0.0
      %1905 = vmatmul.mubr.f32.gmra.mrb[0].mxu0 %v1838
      %v1906 = vpop.f32.mrb[0].mxu0
      %v1907 = vadd.f32 0.0, %v1906
      %v1908 = vpop.f32.mrb[0].mxu0
      %1909 = vdwg.mxu0
      %v1910 = vadd.f32 %v1670, %v1907
      %v1911 = vadd.f32 %v843, %v1910
      %v1912 = vld [vmem:[%s9] sm:$0x1]
      %v1913 = vmul.f32 %v1911, %v1911
      %v1914 = vsel %vm846, %v1913, 0.0
      %1915 = vadd.xlane.f32.xlu0 %v1914
      %v1916 = vpop.xlane.xlu0 %1915
      %v1917 = vmul.f32 %v1916, %v850
      %v1918 = vadd.f32 %v1917, 1e-06
      %v1919 = vrsqrt.pop %v1918
      %v1920 = vmul.f32 %v1911, %v1919
      %v1922 = vlaneseq
      %v1923 = vshrl.u32 %v1922, 7
      %v1924 = vsub.s32 0, %v1923
      %v1925 = vrot.slane %v1912, %v1924
      %v1927 = vmul.f32 %v1920, %v1925
      %v1928 = vld [vmem:[%s10] sm:$0xff]
      %v1929 = vld [vmem:[%s10 + $0x8] sm:$0xff]
      %v1930 = vld [vmem:[%s10 + $0x10] sm:$0xff]
      %v1931 = vld [vmem:[%s10 + $0x18] sm:$0xff]
      %v1933 = vsel %vm846, %v1927, 0
      %1935 = vmatprep.subr.mxu0 0.0
      %1936 = vmatpush1.msra.mxu0 %v1928
      %1937 = vmatprep.subr.mxu0 0.0
      %1938 = vmatpush1.msra.mxu0 %v1929
      %1939 = vmatprep.subr.mxu0 0.0
      %1940 = vmatpush1.msra.mxu0 %v1930
      %1941 = vmatprep.subr.mxu0 0.0
      %1942 = vmatpush1.msra.mxu0 %v1931
      %1943 = vmatprep.subr.mxu0 0.0
      %1944 = vmatpush1.msra.mxu0 0.0
      %1945 = vmatprep.subr.mxu0 0.0
      %1946 = vmatpush1.msra.mxu0 0.0
      %1947 = vmatprep.subr.mxu0 0.0
      %1948 = vmatpush1.msra.mxu0 0.0
      %1949 = vmatprep.subr.mxu0 0.0
      %1950 = vmatpush1.msra.mxu0 0.0
      %1951 = vmatprep.subr.mxu0 0.0
      %1952 = vmatpush1.msra.mxu0 0.0
      %1953 = vmatprep.subr.mxu0 0.0
      %1954 = vmatpush1.msra.mxu0 0.0
      %1955 = vmatprep.subr.mxu0 0.0
      %1956 = vmatpush1.msra.mxu0 0.0
      %1957 = vmatprep.subr.mxu0 0.0
      %1958 = vmatpush1.msra.mxu0 0.0
      %1959 = vmatprep.subr.mxu0 0.0
      %1960 = vmatpush1.msra.mxu0 0.0
      %1961 = vmatprep.subr.mxu0 0.0
      %1962 = vmatpush1.msra.mxu0 0.0
      %1963 = vmatprep.subr.mxu0 0.0
      %1964 = vmatpush1.msra.mxu0 0.0
      %1965 = vmatprep.subr.mxu0 0.0
      %1966 = vmatpush1.msra.mxu0 0.0
      %1967 = vmatprep.subr.mxu0 0.0
      %1968 = vmatpush1.msra.mxu0 0.0
      %1969 = vmatprep.subr.mxu0 0.0
      %1970 = vmatpush1.msra.mxu0 0.0
      %1971 = vmatprep.subr.mxu0 0.0
      %1972 = vmatpush1.msra.mxu0 0.0
      %1973 = vmatprep.subr.mxu0 0.0
      %1974 = vmatpush1.msra.mxu0 0.0
      %1975 = vmatprep.subr.mxu0 0.0
      %1976 = vmatpush1.msra.mxu0 0.0
      %1977 = vmatprep.subr.mxu0 0.0
      %1978 = vmatpush1.msra.mxu0 0.0
      %1979 = vmatprep.subr.mxu0 0.0
      %1980 = vmatpush1.msra.mxu0 0.0
      %1981 = vmatprep.subr.mxu0 0.0
      %1982 = vmatpush1.msra.mxu0 0.0
      %1983 = vmatprep.subr.mxu0 0.0
      %1984 = vmatpush1.msra.mxu0 0.0
      %1985 = vmatprep.subr.mxu0 0.0
      %1986 = vmatpush1.msra.mxu0 0.0
      %1987 = vmatprep.subr.mxu0 0.0
      %1988 = vmatpush1.msra.mxu0 0.0
      %1989 = vmatprep.subr.mxu0 0.0
      %1990 = vmatpush1.msra.mxu0 0.0
      %1991 = vmatprep.subr.mxu0 0.0
      %1992 = vmatpush1.msra.mxu0 0.0
      %1993 = vmatprep.subr.mxu0 0.0
      %1994 = vmatpush1.msra.mxu0 0.0
      %1995 = vmatprep.subr.mxu0 0.0
      %1996 = vmatpush1.msra.mxu0 0.0
      %1997 = vmatprep.subr.mxu0 0.0
      %1998 = vmatpush1.msra.mxu0 0.0
      %1999 = vmatprep.mubr.f32.mxu0 0.0
      %2000 = vmatmul.mubr.f32.gmra.mrb[0].mxu0 %v1933
      %v2001 = vpop.f32.mrb[0].mxu0
      %v2002 = vadd.f32 0.0, %v2001
      %v2003 = vpop.f32.mrb[0].mxu0
      %2004 = vdwg.mxu0
      %v2005 = vmax.f32 %v2002, 0.0
      %v2006 = vld [vmem:[%s11] sm:$0xff]
      %v2007 = vld [vmem:[%s11 + $0x8] sm:$0xff]
      %v2008 = vld [vmem:[%s11 + $0x10] sm:$0xff]
      %v2009 = vld [vmem:[%s11 + $0x18] sm:$0xff]
      %v2010 = vld [vmem:[%s11 + $0x20] sm:$0xff]
      %v2011 = vld [vmem:[%s11 + $0x28] sm:$0xff]
      %v2012 = vld [vmem:[%s11 + $0x30] sm:$0xff]
      %v2013 = vld [vmem:[%s11 + $0x38] sm:$0xff]
      %vm2014 = vcmask 523264
      %v2016 = vsel %vm2014, %v2005, 0
      %2018 = vmatprep.subr.mxu0 0.0
      %2019 = vmatpush1.msra.mxu0 %v2006
      %2020 = vmatprep.subr.mxu0 0.0
      %2021 = vmatpush1.msra.mxu0 %v2007
      %2022 = vmatprep.subr.mxu0 0.0
      %2023 = vmatpush1.msra.mxu0 %v2008
      %2024 = vmatprep.subr.mxu0 0.0
      %2025 = vmatpush1.msra.mxu0 %v2009
      %2026 = vmatprep.subr.mxu0 0.0
      %2027 = vmatpush1.msra.mxu0 %v2010
      %2028 = vmatprep.subr.mxu0 0.0
      %2029 = vmatpush1.msra.mxu0 %v2011
      %2030 = vmatprep.subr.mxu0 0.0
      %2031 = vmatpush1.msra.mxu0 %v2012
      %2032 = vmatprep.subr.mxu0 0.0
      %2033 = vmatpush1.msra.mxu0 %v2013
      %2034 = vmatprep.subr.mxu0 0.0
      %2035 = vmatpush1.msra.mxu0 0.0
      %2036 = vmatprep.subr.mxu0 0.0
      %2037 = vmatpush1.msra.mxu0 0.0
      %2038 = vmatprep.subr.mxu0 0.0
      %2039 = vmatpush1.msra.mxu0 0.0
      %2040 = vmatprep.subr.mxu0 0.0
      %2041 = vmatpush1.msra.mxu0 0.0
      %2042 = vmatprep.subr.mxu0 0.0
      %2043 = vmatpush1.msra.mxu0 0.0
      %2044 = vmatprep.subr.mxu0 0.0
      %2045 = vmatpush1.msra.mxu0 0.0
      %2046 = vmatprep.subr.mxu0 0.0
      %2047 = vmatpush1.msra.mxu0 0.0
      %2048 = vmatprep.subr.mxu0 0.0
      %2049 = vmatpush1.msra.mxu0 0.0
      %2050 = vmatprep.subr.mxu0 0.0
      %2051 = vmatpush1.msra.mxu0 0.0
      %2052 = vmatprep.subr.mxu0 0.0
      %2053 = vmatpush1.msra.mxu0 0.0
      %2054 = vmatprep.subr.mxu0 0.0
      %2055 = vmatpush1.msra.mxu0 0.0
      %2056 = vmatprep.subr.mxu0 0.0
      %2057 = vmatpush1.msra.mxu0 0.0
      %2058 = vmatprep.subr.mxu0 0.0
      %2059 = vmatpush1.msra.mxu0 0.0
      %2060 = vmatprep.subr.mxu0 0.0
      %2061 = vmatpush1.msra.mxu0 0.0
      %2062 = vmatprep.subr.mxu0 0.0
      %2063 = vmatpush1.msra.mxu0 0.0
      %2064 = vmatprep.subr.mxu0 0.0
      %2065 = vmatpush1.msra.mxu0 0.0
      %2066 = vmatprep.subr.mxu0 0.0
      %2067 = vmatpush1.msra.mxu0 0.0
      %2068 = vmatprep.subr.mxu0 0.0
      %2069 = vmatpush1.msra.mxu0 0.0
      %2070 = vmatprep.subr.mxu0 0.0
      %2071 = vmatpush1.msra.mxu0 0.0
      %2072 = vmatprep.subr.mxu0 0.0
      %2073 = vmatpush1.msra.mxu0 0.0
      %2074 = vmatprep.subr.mxu0 0.0
      %2075 = vmatpush1.msra.mxu0 0.0
      %2076 = vmatprep.subr.mxu0 0.0
      %2077 = vmatpush1.msra.mxu0 0.0
      %2078 = vmatprep.subr.mxu0 0.0
      %2079 = vmatpush1.msra.mxu0 0.0
      %2080 = vmatprep.subr.mxu0 0.0
      %2081 = vmatpush1.msra.mxu0 0.0
      %2082 = vmatprep.mubr.f32.mxu0 0.0
      %2083 = vmatmul.mubr.f32.gmra.mrb[0].mxu0 %v2016
      %v2084 = vpop.f32.mrb[0].mxu0
      %v2085 = vadd.f32 0.0, %v2084
      %v2086 = vpop.f32.mrb[0].mxu0
      %2087 = vdwg.mxu0
      %v2088 = vadd.f32 %v1911, %v2085
      %v2089 = vld [vmem:[%s12] sm:$0x1]
      %v2090 = vmul.f32 %v2088, %v2088
      %v2091 = vsel %vm846, %v2090, 0.0
      %2092 = vadd.xlane.f32.xlu0 %v2091
      %v2093 = vpop.xlane.xlu0 %2092
      %v2094 = vmul.f32 %v2093, %v850
      %v2095 = vadd.f32 %v2094, 1e-06
      %v2096 = vrsqrt.pop %v2095
      %v2097 = vmul.f32 %v2088, %v2096
      %v2099 = vlaneseq
      %v2100 = vshrl.u32 %v2099, 7
      %v2101 = vsub.s32 0, %v2100
      %v2102 = vrot.slane %v2089, %v2101
      %v2104 = vmul.f32 %v2097, %v2102
      %v2105 = vld [vmem:[%s828] sm:$0xff]
      %v2106 = vld [vmem:[%s13] sm:$0x1]
      %v2107 = vmul.f32 %v2105, %v2105
      %v2108 = vsel %vm846, %v2107, 0.0
      %2109 = vadd.xlane.f32.xlu0 %v2108
      %v2110 = vpop.xlane.xlu0 %2109
      %v2111 = vmul.f32 %v2110, %v850
      %v2112 = vadd.f32 %v2111, 1e-06
      %v2113 = vrsqrt.pop %v2112
      %v2114 = vmul.f32 %v2105, %v2113
      %v2116 = vlaneseq
      %v2117 = vshrl.u32 %v2116, 7
      %v2118 = vsub.s32 0, %v2117
      %v2119 = vrot.slane %v2106, %v2118
      %v2121 = vmul.f32 %v2114, %v2119
      %v2122 = vld [vmem:[%s14] sm:$0xff]
      %v2123 = vld [vmem:[%s14 + $0x8] sm:$0xff]
      %v2124 = vld [vmem:[%s14 + $0x10] sm:$0xff]
      %v2125 = vld [vmem:[%s14 + $0x18] sm:$0xff]
      %v2127 = vsel %vm846, %v2121, 0
      %2129 = vmatprep.subr.mxu0 0.0
      %2130 = vmatpush1.msra.mxu0 %v2122
      %2131 = vmatprep.subr.mxu0 0.0
      %2132 = vmatpush1.msra.mxu0 %v2123
      %2133 = vmatprep.subr.mxu0 0.0
      %2134 = vmatpush1.msra.mxu0 %v2124
      %2135 = vmatprep.subr.mxu0 0.0
      %2136 = vmatpush1.msra.mxu0 %v2125
      %2137 = vmatprep.subr.mxu0 0.0
      %2138 = vmatpush1.msra.mxu0 0.0
      %2139 = vmatprep.subr.mxu0 0.0
      %2140 = vmatpush1.msra.mxu0 0.0
      %2141 = vmatprep.subr.mxu0 0.0
      %2142 = vmatpush1.msra.mxu0 0.0
      %2143 = vmatprep.subr.mxu0 0.0
      %2144 = vmatpush1.msra.mxu0 0.0
      %2145 = vmatprep.subr.mxu0 0.0
      %2146 = vmatpush1.msra.mxu0 0.0
      %2147 = vmatprep.subr.mxu0 0.0
      %2148 = vmatpush1.msra.mxu0 0.0
      %2149 = vmatprep.subr.mxu0 0.0
      %2150 = vmatpush1.msra.mxu0 0.0
      %2151 = vmatprep.subr.mxu0 0.0
      %2152 = vmatpush1.msra.mxu0 0.0
      %2153 = vmatprep.subr.mxu0 0.0
      %2154 = vmatpush1.msra.mxu0 0.0
      %2155 = vmatprep.subr.mxu0 0.0
      %2156 = vmatpush1.msra.mxu0 0.0
      %2157 = vmatprep.subr.mxu0 0.0
      %2158 = vmatpush1.msra.mxu0 0.0
      %2159 = vmatprep.subr.mxu0 0.0
      %2160 = vmatpush1.msra.mxu0 0.0
      %2161 = vmatprep.subr.mxu0 0.0
      %2162 = vmatpush1.msra.mxu0 0.0
      %2163 = vmatprep.subr.mxu0 0.0
      %2164 = vmatpush1.msra.mxu0 0.0
      %2165 = vmatprep.subr.mxu0 0.0
      %2166 = vmatpush1.msra.mxu0 0.0
      %2167 = vmatprep.subr.mxu0 0.0
      %2168 = vmatpush1.msra.mxu0 0.0
      %2169 = vmatprep.subr.mxu0 0.0
      %2170 = vmatpush1.msra.mxu0 0.0
      %2171 = vmatprep.subr.mxu0 0.0
      %2172 = vmatpush1.msra.mxu0 0.0
      %2173 = vmatprep.subr.mxu0 0.0
      %2174 = vmatpush1.msra.mxu0 0.0
      %2175 = vmatprep.subr.mxu0 0.0
      %2176 = vmatpush1.msra.mxu0 0.0
      %2177 = vmatprep.subr.mxu0 0.0
      %2178 = vmatpush1.msra.mxu0 0.0
      %2179 = vmatprep.subr.mxu0 0.0
      %2180 = vmatpush1.msra.mxu0 0.0
      %2181 = vmatprep.subr.mxu0 0.0
      %2182 = vmatpush1.msra.mxu0 0.0
      %2183 = vmatprep.subr.mxu0 0.0
      %2184 = vmatpush1.msra.mxu0 0.0
      %2185 = vmatprep.subr.mxu0 0.0
      %2186 = vmatpush1.msra.mxu0 0.0
      %2187 = vmatprep.subr.mxu0 0.0
      %2188 = vmatpush1.msra.mxu0 0.0
      %2189 = vmatprep.subr.mxu0 0.0
      %2190 = vmatpush1.msra.mxu0 0.0
      %2191 = vmatprep.subr.mxu0 0.0
      %2192 = vmatpush1.msra.mxu0 0.0
      %2193 = vmatprep.mubr.f32.mxu0 0.0
      %2194 = vmatmul.mubr.f32.gmra.mrb[0].mxu0 %v2127
      %v2195 = vpop.f32.mrb[0].mxu0
      %v2196 = vadd.f32 0.0, %v2195
      %v2197 = vpop.f32.mrb[0].mxu0
      %2198 = vdwg.mxu0
      %v2199 = vld [vmem:[%s15] sm:$0xff]
      %v2200 = vld [vmem:[%s15 + $0x8] sm:$0xff]
      %v2201 = vld [vmem:[%s15 + $0x10] sm:$0xff]
      %v2202 = vld [vmem:[%s15 + $0x18] sm:$0xff]
      %v2203 = vld [vmem:[%s4] sm:$0xff]
      %v2204 = vld [vmem:[%s4 + $0x8] sm:$0xff]
      %v2205 = vld [vmem:[%s4 + $0x10] sm:$0xff]
      %v2206 = vld [vmem:[%s4 + $0x18] sm:$0xff]
      %2208 = vrot.lane.b32.xlu0 %v2196, 96
      %v2209 = vpop.permute.xlu0 %2208
      %v2210 = vsel %vm950, %v2196, 0
      %v2212 = vsel %vm950, %v2209, 0
      %2214 = vmatprep.subr.mxu0 0.0
      %2215 = vmatpush1.xpose.msra.mxu0 %v2212
      %2216 = vmatprep.subr.mxu0 0.0
      %2217 = vmatpush1.xpose.msra.mxu0 0.0
      %2218 = vmatprep.subr.mxu0 0.0
      %2219 = vmatpush1.xpose.msra.mxu0 0.0
      %2220 = vmatprep.subr.mxu0 0.0
      %2221 = vmatpush1.xpose.msra.mxu0 0.0
      %2222 = vmatprep.subr.mxu0 0.0
      %2223 = vmatpush1.xpose.msra.mxu0 0.0
      %2224 = vmatprep.subr.mxu0 0.0
      %2225 = vmatpush1.xpose.msra.mxu0 0.0
      %2226 = vmatprep.subr.mxu0 0.0
      %2227 = vmatpush1.xpose.msra.mxu0 0.0
      %2228 = vmatprep.subr.mxu0 0.0
      %2229 = vmatpush1.xpose.msra.mxu0 0.0
      %2230 = vmatprep.subr.mxu0 0.0
      %2231 = vmatpush1.xpose.msra.mxu0 0.0
      %2232 = vmatprep.subr.mxu0 0.0
      %2233 = vmatpush1.xpose.msra.mxu0 0.0
      %2234 = vmatprep.subr.mxu0 0.0
      %2235 = vmatpush1.xpose.msra.mxu0 0.0
      %2236 = vmatprep.subr.mxu0 0.0
      %2237 = vmatpush1.xpose.msra.mxu0 0.0
      %2238 = vmatprep.subr.mxu0 0.0
      %2239 = vmatpush1.xpose.msra.mxu0 0.0
      %2240 = vmatprep.subr.mxu0 0.0
      %2241 = vmatpush1.xpose.msra.mxu0 0.0
      %2242 = vmatprep.subr.mxu0 0.0
      %2243 = vmatpush1.xpose.msra.mxu0 0.0
      %2244 = vmatprep.subr.mxu0 0.0
      %2245 = vmatpush1.xpose.msra.mxu0 0.0
      %2246 = vmatprep.subr.mxu0 0.0
      %2247 = vmatpush1.xpose.msra.mxu0 0.0
      %2248 = vmatprep.subr.mxu0 0.0
      %2249 = vmatpush1.xpose.msra.mxu0 0.0
      %2250 = vmatprep.subr.mxu0 0.0
      %2251 = vmatpush1.xpose.msra.mxu0 0.0
      %2252 = vmatprep.subr.mxu0 0.0
      %2253 = vmatpush1.xpose.msra.mxu0 0.0
      %2254 = vmatprep.subr.mxu0 0.0
      %2255 = vmatpush1.xpose.msra.mxu0 0.0
      %2256 = vmatprep.subr.mxu0 0.0
      %2257 = vmatpush1.xpose.msra.mxu0 0.0
      %2258 = vmatprep.subr.mxu0 0.0
      %2259 = vmatpush1.xpose.msra.mxu0 0.0
      %2260 = vmatprep.subr.mxu0 0.0
      %2261 = vmatpush1.xpose.msra.mxu0 0.0
      %2262 = vmatprep.subr.mxu0 0.0
      %2263 = vmatpush1.xpose.msra.mxu0 0.0
      %2264 = vmatprep.subr.mxu0 0.0
      %2265 = vmatpush1.xpose.msra.mxu0 0.0
      %2266 = vmatprep.subr.mxu0 0.0
      %2267 = vmatpush1.xpose.msra.mxu0 0.0
      %2268 = vmatprep.subr.mxu0 0.0
      %2269 = vmatpush1.xpose.msra.mxu0 0.0
      %2270 = vmatprep.subr.mxu0 0.0
      %2271 = vmatpush1.xpose.msra.mxu0 0.0
      %2272 = vmatprep.subr.mxu0 0.0
      %2273 = vmatpush1.xpose.msra.mxu0 0.0
      %2274 = vmatprep.subr.mxu0 0.0
      %2275 = vmatpush1.xpose.msra.mxu0 0.0
      %2276 = vmatprep.subr.mxu0 0.0
      %2277 = vmatpush1.xpose.msra.mxu0 0.0
      %2278 = vmatprep.mubr.f32.mxu0 0.0
      %2279 = vmatmul.mubr.f32.gmra.mrb[0].mxu0 %v2210
      %v2280 = vpop.f32.mrb[0].mxu0
      %v2281 = vadd.f32 %v2203, %v2280
      %v2282 = vpop.f32.mrb[0].mxu0
      %2283 = vdwg.mxu0
      %v2284 = vsel %vm950, %v2281, -inf
      %2285 = vmax.xlane.f32.xlu0 %v2284
      %v2286 = vpop.xlane.xlu0 %2285
      %v2287 = vsub.f32 %v2281, %v2286
      %v2288 = vmul.f32 %v2287, 1.442695
      %v2289 = vpow.pop %v2288
      %v2290 = vsel %vm950, %v2289, 0.0
      %2291 = vadd.xlane.f32.xlu0 %v2290
      %v2292 = vpop.xlane.xlu0 %2291
      %v2293 = vrcp.pop %v2292
      %v2294 = vmul.f32 %v2289, %v2293
      %2295 = vrot.lane.b32.xlu0 %v2196, 64
      %v2296 = vpop.permute.xlu0 %2295
      %v2299 = vsel %vm950, %v2294, 0
      %2301 = vmatprep.subr.mxu0 0.0
      %2302 = vmatpush1.msra.mxu0 %v2296
      %2303 = vmatprep.subr.mxu0 0.0
      %2304 = vmatpush1.msra.mxu0 0.0
      %2305 = vmatprep.subr.mxu0 0.0
      %2306 = vmatpush1.msra.mxu0 0.0
      %2307 = vmatprep.subr.mxu0 0.0
      %2308 = vmatpush1.msra.mxu0 0.0
      %2309 = vmatprep.subr.mxu0 0.0
      %2310 = vmatpush1.msra.mxu0 0.0
      %2311 = vmatprep.subr.mxu0 0.0
      %2312 = vmatpush1.msra.mxu0 0.0
      %2313 = vmatprep.subr.mxu0 0.0
      %2314 = vmatpush1.msra.mxu0 0.0
      %2315 = vmatprep.subr.mxu0 0.0
      %2316 = vmatpush1.msra.mxu0 0.0
      %2317 = vmatprep.subr.mxu0 0.0
      %2318 = vmatpush1.msra.mxu0 0.0
      %2319 = vmatprep.subr.mxu0 0.0
      %2320 = vmatpush1.msra.mxu0 0.0
      %2321 = vmatprep.subr.mxu0 0.0
      %2322 = vmatpush1.msra.mxu0 0.0
      %2323 = vmatprep.subr.mxu0 0.0
      %2324 = vmatpush1.msra.mxu0 0.0
      %2325 = vmatprep.subr.mxu0 0.0
      %2326 = vmatpush1.msra.mxu0 0.0
      %2327 = vmatprep.subr.mxu0 0.0
      %2328 = vmatpush1.msra.mxu0 0.0
      %2329 = vmatprep.subr.mxu0 0.0
      %2330 = vmatpush1.msra.mxu0 0.0
      %2331 = vmatprep.subr.mxu0 0.0
      %2332 = vmatpush1.msra.mxu0 0.0
      %2333 = vmatprep.subr.mxu0 0.0
      %2334 = vmatpush1.msra.mxu0 0.0
      %2335 = vmatprep.subr.mxu0 0.0
      %2336 = vmatpush1.msra.mxu0 0.0
      %2337 = vmatprep.subr.mxu0 0.0
      %2338 = vmatpush1.msra.mxu0 0.0
      %2339 = vmatprep.subr.mxu0 0.0
      %2340 = vmatpush1.msra.mxu0 0.0
      %2341 = vmatprep.subr.mxu0 0.0
      %2342 = vmatpush1.msra.mxu0 0.0
      %2343 = vmatprep.subr.mxu0 0.0
      %2344 = vmatpush1.msra.mxu0 0.0
      %2345 = vmatprep.subr.mxu0 0.0
      %2346 = vmatpush1.msra.mxu0 0.0
      %2347 = vmatprep.subr.mxu0 0.0
      %2348 = vmatpush1.msra.mxu0 0.0
      %2349 = vmatprep.subr.mxu0 0.0
      %2350 = vmatpush1.msra.mxu0 0.0
      %2351 = vmatprep.subr.mxu0 0.0
      %2352 = vmatpush1.msra.mxu0 0.0
      %2353 = vmatprep.subr.mxu0 0.0
      %2354 = vmatpush1.msra.mxu0 0.0
      %2355 = vmatprep.subr.mxu0 0.0
      %2356 = vmatpush1.msra.mxu0 0.0
      %2357 = vmatprep.subr.mxu0 0.0
      %2358 = vmatpush1.msra.mxu0 0.0
      %2359 = vmatprep.subr.mxu0 0.0
      %2360 = vmatpush1.msra.mxu0 0.0
      %2361 = vmatprep.subr.mxu0 0.0
      %2362 = vmatpush1.msra.mxu0 0.0
      %2363 = vmatprep.subr.mxu0 0.0
      %2364 = vmatpush1.msra.mxu0 0.0
      %2365 = vmatprep.mubr.f32.mxu0 0.0
      %2366 = vmatmul.mubr.f32.gmra.mrb[0].mxu0 %v2299
      %v2367 = vpop.f32.mrb[0].mxu0
      %v2368 = vadd.f32 0.0, %v2367
      %v2369 = vpop.f32.mrb[0].mxu0
      %2370 = vdwg.mxu0
      %2371 = vrot.lane.b32.xlu0 %v2196, 120
      %v2372 = vpop.permute.xlu0 %2371
      %2373 = vrot.lane.b32.xlu0 %v2196, 88
      %v2374 = vpop.permute.xlu0 %2373
      %v2375 = vsel %vm950, %v2372, 0
      %v2377 = vsel %vm950, %v2374, 0
      %2379 = vmatprep.subr.mxu0 0.0
      %2380 = vmatpush1.xpose.msra.mxu0 %v2377
      %2381 = vmatprep.subr.mxu0 0.0
      %2382 = vmatpush1.xpose.msra.mxu0 0.0
      %2383 = vmatprep.subr.mxu0 0.0
      %2384 = vmatpush1.xpose.msra.mxu0 0.0
      %2385 = vmatprep.subr.mxu0 0.0
      %2386 = vmatpush1.xpose.msra.mxu0 0.0
      %2387 = vmatprep.subr.mxu0 0.0
      %2388 = vmatpush1.xpose.msra.mxu0 0.0
      %2389 = vmatprep.subr.mxu0 0.0
      %2390 = vmatpush1.xpose.msra.mxu0 0.0
      %2391 = vmatprep.subr.mxu0 0.0
      %2392 = vmatpush1.xpose.msra.mxu0 0.0
      %2393 = vmatprep.subr.mxu0 0.0
      %2394 = vmatpush1.xpose.msra.mxu0 0.0
      %2395 = vmatprep.subr.mxu0 0.0
      %2396 = vmatpush1.xpose.msra.mxu0 0.0
      %2397 = vmatprep.subr.mxu0 0.0
      %2398 = vmatpush1.xpose.msra.mxu0 0.0
      %2399 = vmatprep.subr.mxu0 0.0
      %2400 = vmatpush1.xpose.msra.mxu0 0.0
      %2401 = vmatprep.subr.mxu0 0.0
      %2402 = vmatpush1.xpose.msra.mxu0 0.0
      %2403 = vmatprep.subr.mxu0 0.0
      %2404 = vmatpush1.xpose.msra.mxu0 0.0
      %2405 = vmatprep.subr.mxu0 0.0
      %2406 = vmatpush1.xpose.msra.mxu0 0.0
      %2407 = vmatprep.subr.mxu0 0.0
      %2408 = vmatpush1.xpose.msra.mxu0 0.0
      %2409 = vmatprep.subr.mxu0 0.0
      %2410 = vmatpush1.xpose.msra.mxu0 0.0
      %2411 = vmatprep.subr.mxu0 0.0
      %2412 = vmatpush1.xpose.msra.mxu0 0.0
      %2413 = vmatprep.subr.mxu0 0.0
      %2414 = vmatpush1.xpose.msra.mxu0 0.0
      %2415 = vmatprep.subr.mxu0 0.0
      %2416 = vmatpush1.xpose.msra.mxu0 0.0
      %2417 = vmatprep.subr.mxu0 0.0
      %2418 = vmatpush1.xpose.msra.mxu0 0.0
      %2419 = vmatprep.subr.mxu0 0.0
      %2420 = vmatpush1.xpose.msra.mxu0 0.0
      %2421 = vmatprep.subr.mxu0 0.0
      %2422 = vmatpush1.xpose.msra.mxu0 0.0
      %2423 = vmatprep.subr.mxu0 0.0
      %2424 = vmatpush1.xpose.msra.mxu0 0.0
      %2425 = vmatprep.subr.mxu0 0.0
      %2426 = vmatpush1.xpose.msra.mxu0 0.0
      %2427 = vmatprep.subr.mxu0 0.0
      %2428 = vmatpush1.xpose.msra.mxu0 0.0
      %2429 = vmatprep.subr.mxu0 0.0
      %2430 = vmatpush1.xpose.msra.mxu0 0.0
      %2431 = vmatprep.subr.mxu0 0.0
      %2432 = vmatpush1.xpose.msra.mxu0 0.0
      %2433 = vmatprep.subr.mxu0 0.0
      %2434 = vmatpush1.xpose.msra.mxu0 0.0
      %2435 = vmatprep.subr.mxu0 0.0
      %2436 = vmatpush1.xpose.msra.mxu0 0.0
      %2437 = vmatprep.subr.mxu0 0.0
      %2438 = vmatpush1.xpose.msra.mxu0 0.0
      %2439 = vmatprep.subr.mxu0 0.0
      %2440 = vmatpush1.xpose.msra.mxu0 0.0
      %2441 = vmatprep.subr.mxu0 0.0
      %2442 = vmatpush1.xpose.msra.mxu0 0.0
      %2443 = vmatprep.mubr.f32.mxu0 0.0
      %2444 = vmatmul.mubr.f32.gmra.mrb[0].mxu0 %v2375
      %v2445 = vpop.f32.mrb[0].mxu0
      %v2446 = vadd.f32 %v2204, %v2445
      %v2447 = vpop.f32.mrb[0].mxu0
      %2448 = vdwg.mxu0
      %v2449 = vsel %vm950, %v2446, -inf
      %2450 = vmax.xlane.f32.xlu0 %v2449
      %v2451 = vpop.xlane.xlu0 %2450
      %v2452 = vsub.f32 %v2446, %v2451
      %v2453 = vmul.f32 %v2452, 1.442695
      %v2454 = vpow.pop %v2453
      %v2455 = vsel %vm950, %v2454, 0.0
      %2456 = vadd.xlane.f32.xlu0 %v2455
      %v2457 = vpop.xlane.xlu0 %2456
      %v2458 = vrcp.pop %v2457
      %v2459 = vmul.f32 %v2454, %v2458
      %2460 = vrot.lane.b32.xlu0 %v2196, 56
      %v2461 = vpop.permute.xlu0 %2460
      %v2464 = vsel %vm950, %v2459, 0
      %2466 = vmatprep.subr.mxu0 0.0
      %2467 = vmatpush1.msra.mxu0 %v2461
      %2468 = vmatprep.subr.mxu0 0.0
      %2469 = vmatpush1.msra.mxu0 0.0
      %2470 = vmatprep.subr.mxu0 0.0
      %2471 = vmatpush1.msra.mxu0 0.0
      %2472 = vmatprep.subr.mxu0 0.0
      %2473 = vmatpush1.msra.mxu0 0.0
      %2474 = vmatprep.subr.mxu0 0.0
      %2475 = vmatpush1.msra.mxu0 0.0
      %2476 = vmatprep.subr.mxu0 0.0
      %2477 = vmatpush1.msra.mxu0 0.0
      %2478 = vmatprep.subr.mxu0 0.0
      %2479 = vmatpush1.msra.mxu0 0.0
      %2480 = vmatprep.subr.mxu0 0.0
      %2481 = vmatpush1.msra.mxu0 0.0
      %2482 = vmatprep.subr.mxu0 0.0
      %2483 = vmatpush1.msra.mxu0 0.0
      %2484 = vmatprep.subr.mxu0 0.0
      %2485 = vmatpush1.msra.mxu0 0.0
      %2486 = vmatprep.subr.mxu0 0.0
      %2487 = vmatpush1.msra.mxu0 0.0
      %2488 = vmatprep.subr.mxu0 0.0
      %2489 = vmatpush1.msra.mxu0 0.0
      %2490 = vmatprep.subr.mxu0 0.0
      %2491 = vmatpush1.msra.mxu0 0.0
      %2492 = vmatprep.subr.mxu0 0.0
      %2493 = vmatpush1.msra.mxu0 0.0
      %2494 = vmatprep.subr.mxu0 0.0
      %2495 = vmatpush1.msra.mxu0 0.0
      %2496 = vmatprep.subr.mxu0 0.0
      %2497 = vmatpush1.msra.mxu0 0.0
      %2498 = vmatprep.subr.mxu0 0.0
      %2499 = vmatpush1.msra.mxu0 0.0
      %2500 = vmatprep.subr.mxu0 0.0
      %2501 = vmatpush1.msra.mxu0 0.0
      %2502 = vmatprep.subr.mxu0 0.0
      %2503 = vmatpush1.msra.mxu0 0.0
      %2504 = vmatprep.subr.mxu0 0.0
      %2505 = vmatpush1.msra.mxu0 0.0
      %2506 = vmatprep.subr.mxu0 0.0
      %2507 = vmatpush1.msra.mxu0 0.0
      %2508 = vmatprep.subr.mxu0 0.0
      %2509 = vmatpush1.msra.mxu0 0.0
      %2510 = vmatprep.subr.mxu0 0.0
      %2511 = vmatpush1.msra.mxu0 0.0
      %2512 = vmatprep.subr.mxu0 0.0
      %2513 = vmatpush1.msra.mxu0 0.0
      %2514 = vmatprep.subr.mxu0 0.0
      %2515 = vmatpush1.msra.mxu0 0.0
      %2516 = vmatprep.subr.mxu0 0.0
      %2517 = vmatpush1.msra.mxu0 0.0
      %2518 = vmatprep.subr.mxu0 0.0
      %2519 = vmatpush1.msra.mxu0 0.0
      %2520 = vmatprep.subr.mxu0 0.0
      %2521 = vmatpush1.msra.mxu0 0.0
      %2522 = vmatprep.subr.mxu0 0.0
      %2523 = vmatpush1.msra.mxu0 0.0
      %2524 = vmatprep.subr.mxu0 0.0
      %2525 = vmatpush1.msra.mxu0 0.0
      %2526 = vmatprep.subr.mxu0 0.0
      %2527 = vmatpush1.msra.mxu0 0.0
      %2528 = vmatprep.subr.mxu0 0.0
      %2529 = vmatpush1.msra.mxu0 0.0
      %2530 = vmatprep.mubr.f32.mxu0 0.0
      %2531 = vmatmul.mubr.f32.gmra.mrb[0].mxu0 %v2464
      %v2532 = vpop.f32.mrb[0].mxu0
      %v2533 = vadd.f32 0.0, %v2532
      %v2534 = vpop.f32.mrb[0].mxu0
      %2535 = vdwg.mxu0
      %v2537 = vsel %vm950, %v2533, 0
      %2539 = vmatprep.subr.mxu0 0.0
      %2540 = vmatpush1.msra.mxu0 %v2200
      %2541 = vmatprep.subr.mxu0 0.0
      %2542 = vmatpush1.msra.mxu0 0.0
      %2543 = vmatprep.subr.mxu0 0.0
      %2544 = vmatpush1.msra.mxu0 0.0
      %2545 = vmatprep.subr.mxu0 0.0
      %2546 = vmatpush1.msra.mxu0 0.0
      %2547 = vmatprep.subr.mxu0 0.0
      %2548 = vmatpush1.msra.mxu0 0.0
      %2549 = vmatprep.subr.mxu0 0.0
      %2550 = vmatpush1.msra.mxu0 0.0
      %2551 = vmatprep.subr.mxu0 0.0
      %2552 = vmatpush1.msra.mxu0 0.0
      %2553 = vmatprep.subr.mxu0 0.0
      %2554 = vmatpush1.msra.mxu0 0.0
      %2555 = vmatprep.subr.mxu0 0.0
      %2556 = vmatpush1.msra.mxu0 0.0
      %2557 = vmatprep.subr.mxu0 0.0
      %2558 = vmatpush1.msra.mxu0 0.0
      %2559 = vmatprep.subr.mxu0 0.0
      %2560 = vmatpush1.msra.mxu0 0.0
      %2561 = vmatprep.subr.mxu0 0.0
      %2562 = vmatpush1.msra.mxu0 0.0
      %2563 = vmatprep.subr.mxu0 0.0
      %2564 = vmatpush1.msra.mxu0 0.0
      %2565 = vmatprep.subr.mxu0 0.0
      %2566 = vmatpush1.msra.mxu0 0.0
      %2567 = vmatprep.subr.mxu0 0.0
      %2568 = vmatpush1.msra.mxu0 0.0
      %2569 = vmatprep.subr.mxu0 0.0
      %2570 = vmatpush1.msra.mxu0 0.0
      %2571 = vmatprep.subr.mxu0 0.0
      %2572 = vmatpush1.msra.mxu0 0.0
      %2573 = vmatprep.subr.mxu0 0.0
      %2574 = vmatpush1.msra.mxu0 0.0
      %2575 = vmatprep.subr.mxu0 0.0
      %2576 = vmatpush1.msra.mxu0 0.0
      %2577 = vmatprep.subr.mxu0 0.0
      %2578 = vmatpush1.msra.mxu0 0.0
      %2579 = vmatprep.subr.mxu0 0.0
      %2580 = vmatpush1.msra.mxu0 0.0
      %2581 = vmatprep.subr.mxu0 0.0
      %2582 = vmatpush1.msra.mxu0 0.0
      %2583 = vmatprep.subr.mxu0 0.0
      %2584 = vmatpush1.msra.mxu0 0.0
      %2585 = vmatprep.subr.mxu0 0.0
      %2586 = vmatpush1.msra.mxu0 0.0
      %2587 = vmatprep.subr.mxu0 0.0
      %2588 = vmatpush1.msra.mxu0 0.0
      %2589 = vmatprep.subr.mxu0 0.0
      %2590 = vmatpush1.msra.mxu0 0.0
      %2591 = vmatprep.subr.mxu0 0.0
      %2592 = vmatpush1.msra.mxu0 0.0
      %2593 = vmatprep.subr.mxu0 0.0
      %2594 = vmatpush1.msra.mxu0 0.0
      %2595 = vmatprep.subr.mxu0 0.0
      %2596 = vmatpush1.msra.mxu0 0.0
      %2597 = vmatprep.subr.mxu0 0.0
      %2598 = vmatpush1.msra.mxu0 0.0
      %2599 = vmatprep.subr.mxu0 0.0
      %2600 = vmatpush1.msra.mxu0 0.0
      %2601 = vmatprep.subr.mxu0 0.0
      %2602 = vmatpush1.msra.mxu0 0.0
      %2603 = vmatprep.mubr.f32.mxu0 0.0
      %2604 = vmatmul.mubr.f32.gmra.mrb[0].mxu0 %v2537
      %v2605 = vpop.f32.mrb[0].mxu0
      %v2606 = vadd.f32 0.0, %v2605
      %v2607 = vpop.f32.mrb[0].mxu0
      %2608 = vdwg.mxu0
      %v2610 = vsel %vm950, %v2368, 0
      %2612 = vmatprep.subr.mxu0 0.0
      %2613 = vmatpush1.msra.mxu0 %v2199
      %2614 = vmatprep.subr.mxu0 0.0
      %2615 = vmatpush1.msra.mxu0 0.0
      %2616 = vmatprep.subr.mxu0 0.0
      %2617 = vmatpush1.msra.mxu0 0.0
      %2618 = vmatprep.subr.mxu0 0.0
      %2619 = vmatpush1.msra.mxu0 0.0
      %2620 = vmatprep.subr.mxu0 0.0
      %2621 = vmatpush1.msra.mxu0 0.0
      %2622 = vmatprep.subr.mxu0 0.0
      %2623 = vmatpush1.msra.mxu0 0.0
      %2624 = vmatprep.subr.mxu0 0.0
      %2625 = vmatpush1.msra.mxu0 0.0
      %2626 = vmatprep.subr.mxu0 0.0
      %2627 = vmatpush1.msra.mxu0 0.0
      %2628 = vmatprep.subr.mxu0 0.0
      %2629 = vmatpush1.msra.mxu0 0.0
      %2630 = vmatprep.subr.mxu0 0.0
      %2631 = vmatpush1.msra.mxu0 0.0
      %2632 = vmatprep.subr.mxu0 0.0
      %2633 = vmatpush1.msra.mxu0 0.0
      %2634 = vmatprep.subr.mxu0 0.0
      %2635 = vmatpush1.msra.mxu0 0.0
      %2636 = vmatprep.subr.mxu0 0.0
      %2637 = vmatpush1.msra.mxu0 0.0
      %2638 = vmatprep.subr.mxu0 0.0
      %2639 = vmatpush1.msra.mxu0 0.0
      %2640 = vmatprep.subr.mxu0 0.0
      %2641 = vmatpush1.msra.mxu0 0.0
      %2642 = vmatprep.subr.mxu0 0.0
      %2643 = vmatpush1.msra.mxu0 0.0
      %2644 = vmatprep.subr.mxu0 0.0
      %2645 = vmatpush1.msra.mxu0 0.0
      %2646 = vmatprep.subr.mxu0 0.0
      %2647 = vmatpush1.msra.mxu0 0.0
      %2648 = vmatprep.subr.mxu0 0.0
      %2649 = vmatpush1.msra.mxu0 0.0
      %2650 = vmatprep.subr.mxu0 0.0
      %2651 = vmatpush1.msra.mxu0 0.0
      %2652 = vmatprep.subr.mxu0 0.0
      %2653 = vmatpush1.msra.mxu0 0.0
      %2654 = vmatprep.subr.mxu0 0.0
      %2655 = vmatpush1.msra.mxu0 0.0
      %2656 = vmatprep.subr.mxu0 0.0
      %2657 = vmatpush1.msra.mxu0 0.0
      %2658 = vmatprep.subr.mxu0 0.0
      %2659 = vmatpush1.msra.mxu0 0.0
      %2660 = vmatprep.subr.mxu0 0.0
      %2661 = vmatpush1.msra.mxu0 0.0
      %2662 = vmatprep.subr.mxu0 0.0
      %2663 = vmatpush1.msra.mxu0 0.0
      %2664 = vmatprep.subr.mxu0 0.0
      %2665 = vmatpush1.msra.mxu0 0.0
      %2666 = vmatprep.subr.mxu0 0.0
      %2667 = vmatpush1.msra.mxu0 0.0
      %2668 = vmatprep.subr.mxu0 0.0
      %2669 = vmatpush1.msra.mxu0 0.0
      %2670 = vmatprep.subr.mxu0 0.0
      %2671 = vmatpush1.msra.mxu0 0.0
      %2672 = vmatprep.subr.mxu0 0.0
      %2673 = vmatpush1.msra.mxu0 0.0
      %2674 = vmatprep.subr.mxu0 0.0
      %2675 = vmatpush1.msra.mxu0 0.0
      %2676 = vmatprep.mubr.f32.mxu0 0.0
      %2677 = vmatmul.mubr.f32.gmra.mrb[0].mxu0 %v2610
      %v2678 = vpop.f32.mrb[0].mxu0
      %v2679 = vadd.f32 %v2606, %v2678
      %v2680 = vpop.f32.mrb[0].mxu0
      %2681 = vdwg.mxu0
      %2682 = vrot.lane.b32.xlu0 %v2196, 112
      %v2683 = vpop.permute.xlu0 %2682
      %2684 = vrot.lane.b32.xlu0 %v2196, 80
      %v2685 = vpop.permute.xlu0 %2684
      %v2686 = vsel %vm950, %v2683, 0
      %v2688 = vsel %vm950, %v2685, 0
      %2690 = vmatprep.subr.mxu0 0.0
      %2691 = vmatpush1.xpose.msra.mxu0 %v2688
      %2692 = vmatprep.subr.mxu0 0.0
      %2693 = vmatpush1.xpose.msra.mxu0 0.0
      %2694 = vmatprep.subr.mxu0 0.0
      %2695 = vmatpush1.xpose.msra.mxu0 0.0
      %2696 = vmatprep.subr.mxu0 0.0
      %2697 = vmatpush1.xpose.msra.mxu0 0.0
      %2698 = vmatprep.subr.mxu0 0.0
      %2699 = vmatpush1.xpose.msra.mxu0 0.0
      %2700 = vmatprep.subr.mxu0 0.0
      %2701 = vmatpush1.xpose.msra.mxu0 0.0
      %2702 = vmatprep.subr.mxu0 0.0
      %2703 = vmatpush1.xpose.msra.mxu0 0.0
      %2704 = vmatprep.subr.mxu0 0.0
      %2705 = vmatpush1.xpose.msra.mxu0 0.0
      %2706 = vmatprep.subr.mxu0 0.0
      %2707 = vmatpush1.xpose.msra.mxu0 0.0
      %2708 = vmatprep.subr.mxu0 0.0
      %2709 = vmatpush1.xpose.msra.mxu0 0.0
      %2710 = vmatprep.subr.mxu0 0.0
      %2711 = vmatpush1.xpose.msra.mxu0 0.0
      %2712 = vmatprep.subr.mxu0 0.0
      %2713 = vmatpush1.xpose.msra.mxu0 0.0
      %2714 = vmatprep.subr.mxu0 0.0
      %2715 = vmatpush1.xpose.msra.mxu0 0.0
      %2716 = vmatprep.subr.mxu0 0.0
      %2717 = vmatpush1.xpose.msra.mxu0 0.0
      %2718 = vmatprep.subr.mxu0 0.0
      %2719 = vmatpush1.xpose.msra.mxu0 0.0
      %2720 = vmatprep.subr.mxu0 0.0
      %2721 = vmatpush1.xpose.msra.mxu0 0.0
      %2722 = vmatprep.subr.mxu0 0.0
      %2723 = vmatpush1.xpose.msra.mxu0 0.0
      %2724 = vmatprep.subr.mxu0 0.0
      %2725 = vmatpush1.xpose.msra.mxu0 0.0
      %2726 = vmatprep.subr.mxu0 0.0
      %2727 = vmatpush1.xpose.msra.mxu0 0.0
      %2728 = vmatprep.subr.mxu0 0.0
      %2729 = vmatpush1.xpose.msra.mxu0 0.0
      %2730 = vmatprep.subr.mxu0 0.0
      %2731 = vmatpush1.xpose.msra.mxu0 0.0
      %2732 = vmatprep.subr.mxu0 0.0
      %2733 = vmatpush1.xpose.msra.mxu0 0.0
      %2734 = vmatprep.subr.mxu0 0.0
      %2735 = vmatpush1.xpose.msra.mxu0 0.0
      %2736 = vmatprep.subr.mxu0 0.0
      %2737 = vmatpush1.xpose.msra.mxu0 0.0
      %2738 = vmatprep.subr.mxu0 0.0
      %2739 = vmatpush1.xpose.msra.mxu0 0.0
      %2740 = vmatprep.subr.mxu0 0.0
      %2741 = vmatpush1.xpose.msra.mxu0 0.0
      %2742 = vmatprep.subr.mxu0 0.0
      %2743 = vmatpush1.xpose.msra.mxu0 0.0
      %2744 = vmatprep.subr.mxu0 0.0
      %2745 = vmatpush1.xpose.msra.mxu0 0.0
      %2746 = vmatprep.subr.mxu0 0.0
      %2747 = vmatpush1.xpose.msra.mxu0 0.0
      %2748 = vmatprep.subr.mxu0 0.0
      %2749 = vmatpush1.xpose.msra.mxu0 0.0
      %2750 = vmatprep.subr.mxu0 0.0
      %2751 = vmatpush1.xpose.msra.mxu0 0.0
      %2752 = vmatprep.subr.mxu0 0.0
      %2753 = vmatpush1.xpose.msra.mxu0 0.0
      %2754 = vmatprep.mubr.f32.mxu0 0.0
      %2755 = vmatmul.mubr.f32.gmra.mrb[0].mxu0 %v2686
      %v2756 = vpop.f32.mrb[0].mxu0
      %v2757 = vadd.f32 %v2205, %v2756
      %v2758 = vpop.f32.mrb[0].mxu0
      %2759 = vdwg.mxu0
      %v2760 = vsel %vm950, %v2757, -inf
      %2761 = vmax.xlane.f32.xlu0 %v2760
      %v2762 = vpop.xlane.xlu0 %2761
      %v2763 = vsub.f32 %v2757, %v2762
      %v2764 = vmul.f32 %v2763, 1.442695
      %v2765 = vpow.pop %v2764
      %v2766 = vsel %vm950, %v2765, 0.0
      %2767 = vadd.xlane.f32.xlu0 %v2766
      %v2768 = vpop.xlane.xlu0 %2767
      %v2769 = vrcp.pop %v2768
      %v2770 = vmul.f32 %v2765, %v2769
      %2771 = vrot.lane.b32.xlu0 %v2196, 48
      %v2772 = vpop.permute.xlu0 %2771
      %v2775 = vsel %vm950, %v2770, 0
      %2777 = vmatprep.subr.mxu0 0.0
      %2778 = vmatpush1.msra.mxu0 %v2772
      %2779 = vmatprep.subr.mxu0 0.0
      %2780 = vmatpush1.msra.mxu0 0.0
      %2781 = vmatprep.subr.mxu0 0.0
      %2782 = vmatpush1.msra.mxu0 0.0
      %2783 = vmatprep.subr.mxu0 0.0
      %2784 = vmatpush1.msra.mxu0 0.0
      %2785 = vmatprep.subr.mxu0 0.0
      %2786 = vmatpush1.msra.mxu0 0.0
      %2787 = vmatprep.subr.mxu0 0.0
      %2788 = vmatpush1.msra.mxu0 0.0
      %2789 = vmatprep.subr.mxu0 0.0
      %2790 = vmatpush1.msra.mxu0 0.0
      %2791 = vmatprep.subr.mxu0 0.0
      %2792 = vmatpush1.msra.mxu0 0.0
      %2793 = vmatprep.subr.mxu0 0.0
      %2794 = vmatpush1.msra.mxu0 0.0
      %2795 = vmatprep.subr.mxu0 0.0
      %2796 = vmatpush1.msra.mxu0 0.0
      %2797 = vmatprep.subr.mxu0 0.0
      %2798 = vmatpush1.msra.mxu0 0.0
      %2799 = vmatprep.subr.mxu0 0.0
      %2800 = vmatpush1.msra.mxu0 0.0
      %2801 = vmatprep.subr.mxu0 0.0
      %2802 = vmatpush1.msra.mxu0 0.0
      %2803 = vmatprep.subr.mxu0 0.0
      %2804 = vmatpush1.msra.mxu0 0.0
      %2805 = vmatprep.subr.mxu0 0.0
      %2806 = vmatpush1.msra.mxu0 0.0
      %2807 = vmatprep.subr.mxu0 0.0
      %2808 = vmatpush1.msra.mxu0 0.0
      %2809 = vmatprep.subr.mxu0 0.0
      %2810 = vmatpush1.msra.mxu0 0.0
      %2811 = vmatprep.subr.mxu0 0.0
      %2812 = vmatpush1.msra.mxu0 0.0
      %2813 = vmatprep.subr.mxu0 0.0
      %2814 = vmatpush1.msra.mxu0 0.0
      %2815 = vmatprep.subr.mxu0 0.0
      %2816 = vmatpush1.msra.mxu0 0.0
      %2817 = vmatprep.subr.mxu0 0.0
      %2818 = vmatpush1.msra.mxu0 0.0
      %2819 = vmatprep.subr.mxu0 0.0
      %2820 = vmatpush1.msra.mxu0 0.0
      %2821 = vmatprep.subr.mxu0 0.0
      %2822 = vmatpush1.msra.mxu0 0.0
      %2823 = vmatprep.subr.mxu0 0.0
      %2824 = vmatpush1.msra.mxu0 0.0
      %2825 = vmatprep.subr.mxu0 0.0
      %2826 = vmatpush1.msra.mxu0 0.0
      %2827 = vmatprep.subr.mxu0 0.0
      %2828 = vmatpush1.msra.mxu0 0.0
      %2829 = vmatprep.subr.mxu0 0.0
      %2830 = vmatpush1.msra.mxu0 0.0
      %2831 = vmatprep.subr.mxu0 0.0
      %2832 = vmatpush1.msra.mxu0 0.0
      %2833 = vmatprep.subr.mxu0 0.0
      %2834 = vmatpush1.msra.mxu0 0.0
      %2835 = vmatprep.subr.mxu0 0.0
      %2836 = vmatpush1.msra.mxu0 0.0
      %2837 = vmatprep.subr.mxu0 0.0
      %2838 = vmatpush1.msra.mxu0 0.0
      %2839 = vmatprep.subr.mxu0 0.0
      %2840 = vmatpush1.msra.mxu0 0.0
      %2841 = vmatprep.mubr.f32.mxu0 0.0
      %2842 = vmatmul.mubr.f32.gmra.mrb[0].mxu0 %v2775
      %v2843 = vpop.f32.mrb[0].mxu0
      %v2844 = vadd.f32 0.0, %v2843
      %v2845 = vpop.f32.mrb[0].mxu0
      %2846 = vdwg.mxu0
      %v2848 = vsel %vm950, %v2844, 0
      %2850 = vmatprep.subr.mxu0 0.0
      %2851 = vmatpush1.msra.mxu0 %v2201
      %2852 = vmatprep.subr.mxu0 0.0
      %2853 = vmatpush1.msra.mxu0 0.0
      %2854 = vmatprep.subr.mxu0 0.0
      %2855 = vmatpush1.msra.mxu0 0.0
      %2856 = vmatprep.subr.mxu0 0.0
      %2857 = vmatpush1.msra.mxu0 0.0
      %2858 = vmatprep.subr.mxu0 0.0
      %2859 = vmatpush1.msra.mxu0 0.0
      %2860 = vmatprep.subr.mxu0 0.0
      %2861 = vmatpush1.msra.mxu0 0.0
      %2862 = vmatprep.subr.mxu0 0.0
      %2863 = vmatpush1.msra.mxu0 0.0
      %2864 = vmatprep.subr.mxu0 0.0
      %2865 = vmatpush1.msra.mxu0 0.0
      %2866 = vmatprep.subr.mxu0 0.0
      %2867 = vmatpush1.msra.mxu0 0.0
      %2868 = vmatprep.subr.mxu0 0.0
      %2869 = vmatpush1.msra.mxu0 0.0
      %2870 = vmatprep.subr.mxu0 0.0
      %2871 = vmatpush1.msra.mxu0 0.0
      %2872 = vmatprep.subr.mxu0 0.0
      %2873 = vmatpush1.msra.mxu0 0.0
      %2874 = vmatprep.subr.mxu0 0.0
      %2875 = vmatpush1.msra.mxu0 0.0
      %2876 = vmatprep.subr.mxu0 0.0
      %2877 = vmatpush1.msra.mxu0 0.0
      %2878 = vmatprep.subr.mxu0 0.0
      %2879 = vmatpush1.msra.mxu0 0.0
      %2880 = vmatprep.subr.mxu0 0.0
      %2881 = vmatpush1.msra.mxu0 0.0
      %2882 = vmatprep.subr.mxu0 0.0
      %2883 = vmatpush1.msra.mxu0 0.0
      %2884 = vmatprep.subr.mxu0 0.0
      %2885 = vmatpush1.msra.mxu0 0.0
      %2886 = vmatprep.subr.mxu0 0.0
      %2887 = vmatpush1.msra.mxu0 0.0
      %2888 = vmatprep.subr.mxu0 0.0
      %2889 = vmatpush1.msra.mxu0 0.0
      %2890 = vmatprep.subr.mxu0 0.0
      %2891 = vmatpush1.msra.mxu0 0.0
      %2892 = vmatprep.subr.mxu0 0.0
      %2893 = vmatpush1.msra.mxu0 0.0
      %2894 = vmatprep.subr.mxu0 0.0
      %2895 = vmatpush1.msra.mxu0 0.0
      %2896 = vmatprep.subr.mxu0 0.0
      %2897 = vmatpush1.msra.mxu0 0.0
      %2898 = vmatprep.subr.mxu0 0.0
      %2899 = vmatpush1.msra.mxu0 0.0
      %2900 = vmatprep.subr.mxu0 0.0
      %2901 = vmatpush1.msra.mxu0 0.0
      %2902 = vmatprep.subr.mxu0 0.0
      %2903 = vmatpush1.msra.mxu0 0.0
      %2904 = vmatprep.subr.mxu0 0.0
      %2905 = vmatpush1.msra.mxu0 0.0
      %2906 = vmatprep.subr.mxu0 0.0
      %2907 = vmatpush1.msra.mxu0 0.0
      %2908 = vmatprep.subr.mxu0 0.0
      %2909 = vmatpush1.msra.mxu0 0.0
      %2910 = vmatprep.subr.mxu0 0.0
      %2911 = vmatpush1.msra.mxu0 0.0
      %2912 = vmatprep.subr.mxu0 0.0
      %2913 = vmatpush1.msra.mxu0 0.0
      %2914 = vmatprep.mubr.f32.mxu0 0.0
      %2915 = vmatmul.mubr.f32.gmra.mrb[0].mxu0 %v2848
      %v2916 = vpop.f32.mrb[0].mxu0
      %v2917 = vadd.f32 0.0, %v2916
      %v2918 = vpop.f32.mrb[0].mxu0
      %2919 = vdwg.mxu0
      %v2920 = vadd.f32 %v2679, %v2917
      %2921 = vrot.lane.b32.xlu0 %v2196, 104
      %v2922 = vpop.permute.xlu0 %2921
      %2923 = vrot.lane.b32.xlu0 %v2196, 72
      %v2924 = vpop.permute.xlu0 %2923
      %v2925 = vsel %vm950, %v2922, 0
      %v2927 = vsel %vm950, %v2924, 0
      %2929 = vmatprep.subr.mxu0 0.0
      %2930 = vmatpush1.xpose.msra.mxu0 %v2927
      %2931 = vmatprep.subr.mxu0 0.0
      %2932 = vmatpush1.xpose.msra.mxu0 0.0
      %2933 = vmatprep.subr.mxu0 0.0
      %2934 = vmatpush1.xpose.msra.mxu0 0.0
      %2935 = vmatprep.subr.mxu0 0.0
      %2936 = vmatpush1.xpose.msra.mxu0 0.0
      %2937 = vmatprep.subr.mxu0 0.0
      %2938 = vmatpush1.xpose.msra.mxu0 0.0
      %2939 = vmatprep.subr.mxu0 0.0
      %2940 = vmatpush1.xpose.msra.mxu0 0.0
      %2941 = vmatprep.subr.mxu0 0.0
      %2942 = vmatpush1.xpose.msra.mxu0 0.0
      %2943 = vmatprep.subr.mxu0 0.0
      %2944 = vmatpush1.xpose.msra.mxu0 0.0
      %2945 = vmatprep.subr.mxu0 0.0
      %2946 = vmatpush1.xpose.msra.mxu0 0.0
      %2947 = vmatprep.subr.mxu0 0.0
      %2948 = vmatpush1.xpose.msra.mxu0 0.0
      %2949 = vmatprep.subr.mxu0 0.0
      %2950 = vmatpush1.xpose.msra.mxu0 0.0
      %2951 = vmatprep.subr.mxu0 0.0
      %2952 = vmatpush1.xpose.msra.mxu0 0.0
      %2953 = vmatprep.subr.mxu0 0.0
      %2954 = vmatpush1.xpose.msra.mxu0 0.0
      %2955 = vmatprep.subr.mxu0 0.0
      %2956 = vmatpush1.xpose.msra.mxu0 0.0
      %2957 = vmatprep.subr.mxu0 0.0
      %2958 = vmatpush1.xpose.msra.mxu0 0.0
      %2959 = vmatprep.subr.mxu0 0.0
      %2960 = vmatpush1.xpose.msra.mxu0 0.0
      %2961 = vmatprep.subr.mxu0 0.0
      %2962 = vmatpush1.xpose.msra.mxu0 0.0
      %2963 = vmatprep.subr.mxu0 0.0
      %2964 = vmatpush1.xpose.msra.mxu0 0.0
      %2965 = vmatprep.subr.mxu0 0.0
      %2966 = vmatpush1.xpose.msra.mxu0 0.0
      %2967 = vmatprep.subr.mxu0 0.0
      %2968 = vmatpush1.xpose.msra.mxu0 0.0
      %2969 = vmatprep.subr.mxu0 0.0
      %2970 = vmatpush1.xpose.msra.mxu0 0.0
      %2971 = vmatprep.subr.mxu0 0.0
      %2972 = vmatpush1.xpose.msra.mxu0 0.0
      %2973 = vmatprep.subr.mxu0 0.0
      %2974 = vmatpush1.xpose.msra.mxu0 0.0
      %2975 = vmatprep.subr.mxu0 0.0
      %2976 = vmatpush1.xpose.msra.mxu0 0.0
      %2977 = vmatprep.subr.mxu0 0.0
      %2978 = vmatpush1.xpose.msra.mxu0 0.0
      %2979 = vmatprep.subr.mxu0 0.0
      %2980 = vmatpush1.xpose.msra.mxu0 0.0
      %2981 = vmatprep.subr.mxu0 0.0
      %2982 = vmatpush1.xpose.msra.mxu0 0.0
      %2983 = vmatprep.subr.mxu0 0.0
      %2984 = vmatpush1.xpose.msra.mxu0 0.0
      %2985 = vmatprep.subr.mxu0 0.0
      %2986 = vmatpush1.xpose.msra.mxu0 0.0
      %2987 = vmatprep.subr.mxu0 0.0
      %2988 = vmatpush1.xpose.msra.mxu0 0.0
      %2989 = vmatprep.subr.mxu0 0.0
      %2990 = vmatpush1.xpose.msra.mxu0 0.0
      %2991 = vmatprep.subr.mxu0 0.0
      %2992 = vmatpush1.xpose.msra.mxu0 0.0
      %2993 = vmatprep.mubr.f32.mxu0 0.0
      %2994 = vmatmul.mubr.f32.gmra.mrb[0].mxu0 %v2925
      %v2995 = vpop.f32.mrb[0].mxu0
      %v2996 = vadd.f32 %v2206, %v2995
      %v2997 = vpop.f32.mrb[0].mxu0
      %2998 = vdwg.mxu0
      %v2999 = vsel %vm950, %v2996, -inf
      %3000 = vmax.xlane.f32.xlu0 %v2999
      %v3001 = vpop.xlane.xlu0 %3000
      %v3002 = vsub.f32 %v2996, %v3001
      %v3003 = vmul.f32 %v3002, 1.442695
      %v3004 = vpow.pop %v3003
      %v3005 = vsel %vm950, %v3004, 0.0
      %3006 = vadd.xlane.f32.xlu0 %v3005
      %v3007 = vpop.xlane.xlu0 %3006
      %v3008 = vrcp.pop %v3007
      %v3009 = vmul.f32 %v3004, %v3008
      %3010 = vrot.lane.b32.xlu0 %v2196, 40
      %v3011 = vpop.permute.xlu0 %3010
      %v3014 = vsel %vm950, %v3009, 0
      %3016 = vmatprep.subr.mxu0 0.0
      %3017 = vmatpush1.msra.mxu0 %v3011
      %3018 = vmatprep.subr.mxu0 0.0
      %3019 = vmatpush1.msra.mxu0 0.0
      %3020 = vmatprep.subr.mxu0 0.0
      %3021 = vmatpush1.msra.mxu0 0.0
      %3022 = vmatprep.subr.mxu0 0.0
      %3023 = vmatpush1.msra.mxu0 0.0
      %3024 = vmatprep.subr.mxu0 0.0
      %3025 = vmatpush1.msra.mxu0 0.0
      %3026 = vmatprep.subr.mxu0 0.0
      %3027 = vmatpush1.msra.mxu0 0.0
      %3028 = vmatprep.subr.mxu0 0.0
      %3029 = vmatpush1.msra.mxu0 0.0
      %3030 = vmatprep.subr.mxu0 0.0
      %3031 = vmatpush1.msra.mxu0 0.0
      %3032 = vmatprep.subr.mxu0 0.0
      %3033 = vmatpush1.msra.mxu0 0.0
      %3034 = vmatprep.subr.mxu0 0.0
      %3035 = vmatpush1.msra.mxu0 0.0
      %3036 = vmatprep.subr.mxu0 0.0
      %3037 = vmatpush1.msra.mxu0 0.0
      %3038 = vmatprep.subr.mxu0 0.0
      %3039 = vmatpush1.msra.mxu0 0.0
      %3040 = vmatprep.subr.mxu0 0.0
      %3041 = vmatpush1.msra.mxu0 0.0
      %3042 = vmatprep.subr.mxu0 0.0
      %3043 = vmatpush1.msra.mxu0 0.0
      %3044 = vmatprep.subr.mxu0 0.0
      %3045 = vmatpush1.msra.mxu0 0.0
      %3046 = vmatprep.subr.mxu0 0.0
      %3047 = vmatpush1.msra.mxu0 0.0
      %3048 = vmatprep.subr.mxu0 0.0
      %3049 = vmatpush1.msra.mxu0 0.0
      %3050 = vmatprep.subr.mxu0 0.0
      %3051 = vmatpush1.msra.mxu0 0.0
      %3052 = vmatprep.subr.mxu0 0.0
      %3053 = vmatpush1.msra.mxu0 0.0
      %3054 = vmatprep.subr.mxu0 0.0
      %3055 = vmatpush1.msra.mxu0 0.0
      %3056 = vmatprep.subr.mxu0 0.0
      %3057 = vmatpush1.msra.mxu0 0.0
      %3058 = vmatprep.subr.mxu0 0.0
      %3059 = vmatpush1.msra.mxu0 0.0
      %3060 = vmatprep.subr.mxu0 0.0
      %3061 = vmatpush1.msra.mxu0 0.0
      %3062 = vmatprep.subr.mxu0 0.0
      %3063 = vmatpush1.msra.mxu0 0.0
      %3064 = vmatprep.subr.mxu0 0.0
      %3065 = vmatpush1.msra.mxu0 0.0
      %3066 = vmatprep.subr.mxu0 0.0
      %3067 = vmatpush1.msra.mxu0 0.0
      %3068 = vmatprep.subr.mxu0 0.0
      %3069 = vmatpush1.msra.mxu0 0.0
      %3070 = vmatprep.subr.mxu0 0.0
      %3071 = vmatpush1.msra.mxu0 0.0
      %3072 = vmatprep.subr.mxu0 0.0
      %3073 = vmatpush1.msra.mxu0 0.0
      %3074 = vmatprep.subr.mxu0 0.0
      %3075 = vmatpush1.msra.mxu0 0.0
      %3076 = vmatprep.subr.mxu0 0.0
      %3077 = vmatpush1.msra.mxu0 0.0
      %3078 = vmatprep.subr.mxu0 0.0
      %3079 = vmatpush1.msra.mxu0 0.0
      %3080 = vmatprep.mubr.f32.mxu0 0.0
      %3081 = vmatmul.mubr.f32.gmra.mrb[0].mxu0 %v3014
      %v3082 = vpop.f32.mrb[0].mxu0
      %v3083 = vadd.f32 0.0, %v3082
      %v3084 = vpop.f32.mrb[0].mxu0
      %3085 = vdwg.mxu0
      %v3087 = vsel %vm950, %v3083, 0
      %3089 = vmatprep.subr.mxu0 0.0
      %3090 = vmatpush1.msra.mxu0 %v2202
      %3091 = vmatprep.subr.mxu0 0.0
      %3092 = vmatpush1.msra.mxu0 0.0
      %3093 = vmatprep.subr.mxu0 0.0
      %3094 = vmatpush1.msra.mxu0 0.0
      %3095 = vmatprep.subr.mxu0 0.0
      %3096 = vmatpush1.msra.mxu0 0.0
      %3097 = vmatprep.subr.mxu0 0.0
      %3098 = vmatpush1.msra.mxu0 0.0
      %3099 = vmatprep.subr.mxu0 0.0
      %3100 = vmatpush1.msra.mxu0 0.0
      %3101 = vmatprep.subr.mxu0 0.0
      %3102 = vmatpush1.msra.mxu0 0.0
      %3103 = vmatprep.subr.mxu0 0.0
      %3104 = vmatpush1.msra.mxu0 0.0
      %3105 = vmatprep.subr.mxu0 0.0
      %3106 = vmatpush1.msra.mxu0 0.0
      %3107 = vmatprep.subr.mxu0 0.0
      %3108 = vmatpush1.msra.mxu0 0.0
      %3109 = vmatprep.subr.mxu0 0.0
      %3110 = vmatpush1.msra.mxu0 0.0
      %3111 = vmatprep.subr.mxu0 0.0
      %3112 = vmatpush1.msra.mxu0 0.0
      %3113 = vmatprep.subr.mxu0 0.0
      %3114 = vmatpush1.msra.mxu0 0.0
      %3115 = vmatprep.subr.mxu0 0.0
      %3116 = vmatpush1.msra.mxu0 0.0
      %3117 = vmatprep.subr.mxu0 0.0
      %3118 = vmatpush1.msra.mxu0 0.0
      %3119 = vmatprep.subr.mxu0 0.0
      %3120 = vmatpush1.msra.mxu0 0.0
      %3121 = vmatprep.subr.mxu0 0.0
      %3122 = vmatpush1.msra.mxu0 0.0
      %3123 = vmatprep.subr.mxu0 0.0
      %3124 = vmatpush1.msra.mxu0 0.0
      %3125 = vmatprep.subr.mxu0 0.0
      %3126 = vmatpush1.msra.mxu0 0.0
      %3127 = vmatprep.subr.mxu0 0.0
      %3128 = vmatpush1.msra.mxu0 0.0
      %3129 = vmatprep.subr.mxu0 0.0
      %3130 = vmatpush1.msra.mxu0 0.0
      %3131 = vmatprep.subr.mxu0 0.0
      %3132 = vmatpush1.msra.mxu0 0.0
      %3133 = vmatprep.subr.mxu0 0.0
      %3134 = vmatpush1.msra.mxu0 0.0
      %3135 = vmatprep.subr.mxu0 0.0
      %3136 = vmatpush1.msra.mxu0 0.0
      %3137 = vmatprep.subr.mxu0 0.0
      %3138 = vmatpush1.msra.mxu0 0.0
      %3139 = vmatprep.subr.mxu0 0.0
      %3140 = vmatpush1.msra.mxu0 0.0
      %3141 = vmatprep.subr.mxu0 0.0
      %3142 = vmatpush1.msra.mxu0 0.0
      %3143 = vmatprep.subr.mxu0 0.0
      %3144 = vmatpush1.msra.mxu0 0.0
      %3145 = vmatprep.subr.mxu0 0.0
      %3146 = vmatpush1.msra.mxu0 0.0
      %3147 = vmatprep.subr.mxu0 0.0
      %3148 = vmatpush1.msra.mxu0 0.0
      %3149 = vmatprep.subr.mxu0 0.0
      %3150 = vmatpush1.msra.mxu0 0.0
      %3151 = vmatprep.subr.mxu0 0.0
      %3152 = vmatpush1.msra.mxu0 0.0
      %3153 = vmatprep.mubr.f32.mxu0 0.0
      %3154 = vmatmul.mubr.f32.gmra.mrb[0].mxu0 %v3087
      %v3155 = vpop.f32.mrb[0].mxu0
      %v3156 = vadd.f32 0.0, %v3155
      %v3157 = vpop.f32.mrb[0].mxu0
      %3158 = vdwg.mxu0
      %v3159 = vadd.f32 %v2920, %v3156
      %v3160 = vadd.f32 %v2105, %v3159
      %v3161 = vld [vmem:[%s16] sm:$0x1]
      %v3162 = vmul.f32 %v3160, %v3160
      %v3163 = vsel %vm846, %v3162, 0.0
      %3164 = vadd.xlane.f32.xlu0 %v3163
      %v3165 = vpop.xlane.xlu0 %3164
      %v3166 = vmul.f32 %v3165, %v850
      %v3167 = vadd.f32 %v3166, 1e-06
      %v3168 = vrsqrt.pop %v3167
      %v3169 = vmul.f32 %v3160, %v3168
      %v3171 = vlaneseq
      %v3172 = vshrl.u32 %v3171, 7
      %v3173 = vsub.s32 0, %v3172
      %v3174 = vrot.slane %v3161, %v3173
      %v3176 = vmul.f32 %v3169, %v3174
      %v3177 = vld [vmem:[%s17] sm:$0xff]
      %v3178 = vld [vmem:[%s17 + $0x8] sm:$0xff]
      %v3179 = vld [vmem:[%s17 + $0x10] sm:$0xff]
      %v3180 = vld [vmem:[%s17 + $0x18] sm:$0xff]
      %v3182 = vsel %vm846, %v3176, 0
      %3184 = vmatprep.subr.mxu0 0.0
      %3185 = vmatpush1.msra.mxu0 %v3177
      %3186 = vmatprep.subr.mxu0 0.0
      %3187 = vmatpush1.msra.mxu0 %v3178
      %3188 = vmatprep.subr.mxu0 0.0
      %3189 = vmatpush1.msra.mxu0 %v3179
      %3190 = vmatprep.subr.mxu0 0.0
      %3191 = vmatpush1.msra.mxu0 %v3180
      %3192 = vmatprep.subr.mxu0 0.0
      %3193 = vmatpush1.msra.mxu0 0.0
      %3194 = vmatprep.subr.mxu0 0.0
      %3195 = vmatpush1.msra.mxu0 0.0
      %3196 = vmatprep.subr.mxu0 0.0
      %3197 = vmatpush1.msra.mxu0 0.0
      %3198 = vmatprep.subr.mxu0 0.0
      %3199 = vmatpush1.msra.mxu0 0.0
      %3200 = vmatprep.subr.mxu0 0.0
      %3201 = vmatpush1.msra.mxu0 0.0
      %3202 = vmatprep.subr.mxu0 0.0
      %3203 = vmatpush1.msra.mxu0 0.0
      %3204 = vmatprep.subr.mxu0 0.0
      %3205 = vmatpush1.msra.mxu0 0.0
      %3206 = vmatprep.subr.mxu0 0.0
      %3207 = vmatpush1.msra.mxu0 0.0
      %3208 = vmatprep.subr.mxu0 0.0
      %3209 = vmatpush1.msra.mxu0 0.0
      %3210 = vmatprep.subr.mxu0 0.0
      %3211 = vmatpush1.msra.mxu0 0.0
      %3212 = vmatprep.subr.mxu0 0.0
      %3213 = vmatpush1.msra.mxu0 0.0
      %3214 = vmatprep.subr.mxu0 0.0
      %3215 = vmatpush1.msra.mxu0 0.0
      %3216 = vmatprep.subr.mxu0 0.0
      %3217 = vmatpush1.msra.mxu0 0.0
      %3218 = vmatprep.subr.mxu0 0.0
      %3219 = vmatpush1.msra.mxu0 0.0
      %3220 = vmatprep.subr.mxu0 0.0
      %3221 = vmatpush1.msra.mxu0 0.0
      %3222 = vmatprep.subr.mxu0 0.0
      %3223 = vmatpush1.msra.mxu0 0.0
      %3224 = vmatprep.subr.mxu0 0.0
      %3225 = vmatpush1.msra.mxu0 0.0
      %3226 = vmatprep.subr.mxu0 0.0
      %3227 = vmatpush1.msra.mxu0 0.0
      %3228 = vmatprep.subr.mxu0 0.0
      %3229 = vmatpush1.msra.mxu0 0.0
      %3230 = vmatprep.subr.mxu0 0.0
      %3231 = vmatpush1.msra.mxu0 0.0
      %3232 = vmatprep.subr.mxu0 0.0
      %3233 = vmatpush1.msra.mxu0 0.0
      %3234 = vmatprep.subr.mxu0 0.0
      %3235 = vmatpush1.msra.mxu0 0.0
      %3236 = vmatprep.subr.mxu0 0.0
      %3237 = vmatpush1.msra.mxu0 0.0
      %3238 = vmatprep.subr.mxu0 0.0
      %3239 = vmatpush1.msra.mxu0 0.0
      %3240 = vmatprep.subr.mxu0 0.0
      %3241 = vmatpush1.msra.mxu0 0.0
      %3242 = vmatprep.subr.mxu0 0.0
      %3243 = vmatpush1.msra.mxu0 0.0
      %3244 = vmatprep.subr.mxu0 0.0
      %3245 = vmatpush1.msra.mxu0 0.0
      %3246 = vmatprep.subr.mxu0 0.0
      %3247 = vmatpush1.msra.mxu0 0.0
      %3248 = vmatprep.mubr.f32.mxu0 0.0
      %3249 = vmatmul.mubr.f32.gmra.mrb[0].mxu0 %v3182
      %v3250 = vpop.f32.mrb[0].mxu0
      %v3251 = vadd.f32 0.0, %v3250
      %v3252 = vpop.f32.mrb[0].mxu0
      %3253 = vdwg.mxu0
      %v3254 = vld [vmem:[%s18] sm:$0xff]
      %v3255 = vld [vmem:[%s18 + $0x8] sm:$0xff]
      %v3256 = vld [vmem:[%s18 + $0x10] sm:$0xff]
      %v3257 = vld [vmem:[%s18 + $0x18] sm:$0xff]
      %v3259 = vsel %vm846, %v2104, 0
      %3261 = vmatprep.subr.mxu0 0.0
      %3262 = vmatpush1.msra.mxu0 %v3254
      %3263 = vmatprep.subr.mxu0 0.0
      %3264 = vmatpush1.msra.mxu0 %v3255
      %3265 = vmatprep.subr.mxu0 0.0
      %3266 = vmatpush1.msra.mxu0 %v3256
      %3267 = vmatprep.subr.mxu0 0.0
      %3268 = vmatpush1.msra.mxu0 %v3257
      %3269 = vmatprep.subr.mxu0 0.0
      %3270 = vmatpush1.msra.mxu0 0.0
      %3271 = vmatprep.subr.mxu0 0.0
      %3272 = vmatpush1.msra.mxu0 0.0
      %3273 = vmatprep.subr.mxu0 0.0
      %3274 = vmatpush1.msra.mxu0 0.0
      %3275 = vmatprep.subr.mxu0 0.0
      %3276 = vmatpush1.msra.mxu0 0.0
      %3277 = vmatprep.subr.mxu0 0.0
      %3278 = vmatpush1.msra.mxu0 0.0
      %3279 = vmatprep.subr.mxu0 0.0
      %3280 = vmatpush1.msra.mxu0 0.0
      %3281 = vmatprep.subr.mxu0 0.0
      %3282 = vmatpush1.msra.mxu0 0.0
      %3283 = vmatprep.subr.mxu0 0.0
      %3284 = vmatpush1.msra.mxu0 0.0
      %3285 = vmatprep.subr.mxu0 0.0
      %3286 = vmatpush1.msra.mxu0 0.0
      %3287 = vmatprep.subr.mxu0 0.0
      %3288 = vmatpush1.msra.mxu0 0.0
      %3289 = vmatprep.subr.mxu0 0.0
      %3290 = vmatpush1.msra.mxu0 0.0
      %3291 = vmatprep.subr.mxu0 0.0
      %3292 = vmatpush1.msra.mxu0 0.0
      %3293 = vmatprep.subr.mxu0 0.0
      %3294 = vmatpush1.msra.mxu0 0.0
      %3295 = vmatprep.subr.mxu0 0.0
      %3296 = vmatpush1.msra.mxu0 0.0
      %3297 = vmatprep.subr.mxu0 0.0
      %3298 = vmatpush1.msra.mxu0 0.0
      %3299 = vmatprep.subr.mxu0 0.0
      %3300 = vmatpush1.msra.mxu0 0.0
      %3301 = vmatprep.subr.mxu0 0.0
      %3302 = vmatpush1.msra.mxu0 0.0
      %3303 = vmatprep.subr.mxu0 0.0
      %3304 = vmatpush1.msra.mxu0 0.0
      %3305 = vmatprep.subr.mxu0 0.0
      %3306 = vmatpush1.msra.mxu0 0.0
      %3307 = vmatprep.subr.mxu0 0.0
      %3308 = vmatpush1.msra.mxu0 0.0
      %3309 = vmatprep.subr.mxu0 0.0
      %3310 = vmatpush1.msra.mxu0 0.0
      %3311 = vmatprep.subr.mxu0 0.0
      %3312 = vmatpush1.msra.mxu0 0.0
      %3313 = vmatprep.subr.mxu0 0.0
      %3314 = vmatpush1.msra.mxu0 0.0
      %3315 = vmatprep.subr.mxu0 0.0
      %3316 = vmatpush1.msra.mxu0 0.0
      %3317 = vmatprep.subr.mxu0 0.0
      %3318 = vmatpush1.msra.mxu0 0.0
      %3319 = vmatprep.subr.mxu0 0.0
      %3320 = vmatpush1.msra.mxu0 0.0
      %3321 = vmatprep.subr.mxu0 0.0
      %3322 = vmatpush1.msra.mxu0 0.0
      %3323 = vmatprep.subr.mxu0 0.0
      %3324 = vmatpush1.msra.mxu0 0.0
      %3325 = vmatprep.mubr.f32.mxu0 0.0
      %3326 = vmatmul.mubr.f32.gmra.mrb[0].mxu0 %v3259
      %v3327 = vpop.f32.mrb[0].mxu0
      %v3328 = vadd.f32 0.0, %v3327
      %v3329 = vpop.f32.mrb[0].mxu0
      %3330 = vdwg.mxu0
      %v3331 = vld [vmem:[%s19] sm:$0xff]
      %v3332 = vld [vmem:[%s19 + $0x8] sm:$0xff]
      %v3333 = vld [vmem:[%s19 + $0x10] sm:$0xff]
      %v3334 = vld [vmem:[%s19 + $0x18] sm:$0xff]
      %v3336 = vsel %vm950, %v3251, 0
      %v3339 = vsel %vm950, %v3328, 0
      %3341 = vmatprep.subr.mxu0 0.0
      %3342 = vmatpush1.xpose.msra.mxu0 %v3339
      %3343 = vmatprep.subr.mxu0 0.0
      %3344 = vmatpush1.xpose.msra.mxu0 0.0
      %3345 = vmatprep.subr.mxu0 0.0
      %3346 = vmatpush1.xpose.msra.mxu0 0.0
      %3347 = vmatprep.subr.mxu0 0.0
      %3348 = vmatpush1.xpose.msra.mxu0 0.0
      %3349 = vmatprep.subr.mxu0 0.0
      %3350 = vmatpush1.xpose.msra.mxu0 0.0
      %3351 = vmatprep.subr.mxu0 0.0
      %3352 = vmatpush1.xpose.msra.mxu0 0.0
      %3353 = vmatprep.subr.mxu0 0.0
      %3354 = vmatpush1.xpose.msra.mxu0 0.0
      %3355 = vmatprep.subr.mxu0 0.0
      %3356 = vmatpush1.xpose.msra.mxu0 0.0
      %3357 = vmatprep.subr.mxu0 0.0
      %3358 = vmatpush1.xpose.msra.mxu0 0.0
      %3359 = vmatprep.subr.mxu0 0.0
      %3360 = vmatpush1.xpose.msra.mxu0 0.0
      %3361 = vmatprep.subr.mxu0 0.0
      %3362 = vmatpush1.xpose.msra.mxu0 0.0
      %3363 = vmatprep.subr.mxu0 0.0
      %3364 = vmatpush1.xpose.msra.mxu0 0.0
      %3365 = vmatprep.subr.mxu0 0.0
      %3366 = vmatpush1.xpose.msra.mxu0 0.0
      %3367 = vmatprep.subr.mxu0 0.0
      %3368 = vmatpush1.xpose.msra.mxu0 0.0
      %3369 = vmatprep.subr.mxu0 0.0
      %3370 = vmatpush1.xpose.msra.mxu0 0.0
      %3371 = vmatprep.subr.mxu0 0.0
      %3372 = vmatpush1.xpose.msra.mxu0 0.0
      %3373 = vmatprep.subr.mxu0 0.0
      %3374 = vmatpush1.xpose.msra.mxu0 0.0
      %3375 = vmatprep.subr.mxu0 0.0
      %3376 = vmatpush1.xpose.msra.mxu0 0.0
      %3377 = vmatprep.subr.mxu0 0.0
      %3378 = vmatpush1.xpose.msra.mxu0 0.0
      %3379 = vmatprep.subr.mxu0 0.0
      %3380 = vmatpush1.xpose.msra.mxu0 0.0
      %3381 = vmatprep.subr.mxu0 0.0
      %3382 = vmatpush1.xpose.msra.mxu0 0.0
      %3383 = vmatprep.subr.mxu0 0.0
      %3384 = vmatpush1.xpose.msra.mxu0 0.0
      %3385 = vmatprep.subr.mxu0 0.0
      %3386 = vmatpush1.xpose.msra.mxu0 0.0
      %3387 = vmatprep.subr.mxu0 0.0
      %3388 = vmatpush1.xpose.msra.mxu0 0.0
      %3389 = vmatprep.subr.mxu0 0.0
      %3390 = vmatpush1.xpose.msra.mxu0 0.0
      %3391 = vmatprep.subr.mxu0 0.0
      %3392 = vmatpush1.xpose.msra.mxu0 0.0
      %3393 = vmatprep.subr.mxu0 0.0
      %3394 = vmatpush1.xpose.msra.mxu0 0.0
      %3395 = vmatprep.subr.mxu0 0.0
      %3396 = vmatpush1.xpose.msra.mxu0 0.0
      %3397 = vmatprep.subr.mxu0 0.0
      %3398 = vmatpush1.xpose.msra.mxu0 0.0
      %3399 = vmatprep.subr.mxu0 0.0
      %3400 = vmatpush1.xpose.msra.mxu0 0.0
      %3401 = vmatprep.subr.mxu0 0.0
      %3402 = vmatpush1.xpose.msra.mxu0 0.0
      %3403 = vmatprep.subr.mxu0 0.0
      %3404 = vmatpush1.xpose.msra.mxu0 0.0
      %3405 = vmatprep.mubr.f32.mxu0 0.0
      %3406 = vmatmul.mubr.f32.gmra.mrb[0].mxu0 %v3336
      %v3407 = vpop.f32.mrb[0].mxu0
      %v3408 = vadd.f32 %v1029, %v3407
      %v3409 = vpop.f32.mrb[0].mxu0
      %3410 = vdwg.mxu0
      %v3411 = vsel %vm950, %v3408, -inf
      %3412 = vmax.xlane.f32.xlu0 %v3411
      %v3413 = vpop.xlane.xlu0 %3412
      %v3414 = vsub.f32 %v3408, %v3413
      %v3415 = vmul.f32 %v3414, 1.442695
      %v3416 = vpow.pop %v3415
      %v3417 = vsel %vm950, %v3416, 0.0
      %3418 = vadd.xlane.f32.xlu0 %v3417
      %v3419 = vpop.xlane.xlu0 %3418
      %v3420 = vrcp.pop %v3419
      %v3421 = vmul.f32 %v3416, %v3420
      %3422 = vrot.lane.b32.xlu0 %v3328, 96
      %v3423 = vpop.permute.xlu0 %3422
      %v3426 = vsel %vm950, %v3421, 0
      %3428 = vmatprep.subr.mxu0 0.0
      %3429 = vmatpush1.msra.mxu0 %v3423
      %3430 = vmatprep.subr.mxu0 0.0
      %3431 = vmatpush1.msra.mxu0 0.0
      %3432 = vmatprep.subr.mxu0 0.0
      %3433 = vmatpush1.msra.mxu0 0.0
      %3434 = vmatprep.subr.mxu0 0.0
      %3435 = vmatpush1.msra.mxu0 0.0
      %3436 = vmatprep.subr.mxu0 0.0
      %3437 = vmatpush1.msra.mxu0 0.0
      %3438 = vmatprep.subr.mxu0 0.0
      %3439 = vmatpush1.msra.mxu0 0.0
      %3440 = vmatprep.subr.mxu0 0.0
      %3441 = vmatpush1.msra.mxu0 0.0
      %3442 = vmatprep.subr.mxu0 0.0
      %3443 = vmatpush1.msra.mxu0 0.0
      %3444 = vmatprep.subr.mxu0 0.0
      %3445 = vmatpush1.msra.mxu0 0.0
      %3446 = vmatprep.subr.mxu0 0.0
      %3447 = vmatpush1.msra.mxu0 0.0
      %3448 = vmatprep.subr.mxu0 0.0
      %3449 = vmatpush1.msra.mxu0 0.0
      %3450 = vmatprep.subr.mxu0 0.0
      %3451 = vmatpush1.msra.mxu0 0.0
      %3452 = vmatprep.subr.mxu0 0.0
      %3453 = vmatpush1.msra.mxu0 0.0
      %3454 = vmatprep.subr.mxu0 0.0
      %3455 = vmatpush1.msra.mxu0 0.0
      %3456 = vmatprep.subr.mxu0 0.0
      %3457 = vmatpush1.msra.mxu0 0.0
      %3458 = vmatprep.subr.mxu0 0.0
      %3459 = vmatpush1.msra.mxu0 0.0
      %3460 = vmatprep.subr.mxu0 0.0
      %3461 = vmatpush1.msra.mxu0 0.0
      %3462 = vmatprep.subr.mxu0 0.0
      %3463 = vmatpush1.msra.mxu0 0.0
      %3464 = vmatprep.subr.mxu0 0.0
      %3465 = vmatpush1.msra.mxu0 0.0
      %3466 = vmatprep.subr.mxu0 0.0
      %3467 = vmatpush1.msra.mxu0 0.0
      %3468 = vmatprep.subr.mxu0 0.0
      %3469 = vmatpush1.msra.mxu0 0.0
      %3470 = vmatprep.subr.mxu0 0.0
      %3471 = vmatpush1.msra.mxu0 0.0
      %3472 = vmatprep.subr.mxu0 0.0
      %3473 = vmatpush1.msra.mxu0 0.0
      %3474 = vmatprep.subr.mxu0 0.0
      %3475 = vmatpush1.msra.mxu0 0.0
      %3476 = vmatprep.subr.mxu0 0.0
      %3477 = vmatpush1.msra.mxu0 0.0
      %3478 = vmatprep.subr.mxu0 0.0
      %3479 = vmatpush1.msra.mxu0 0.0
      %3480 = vmatprep.subr.mxu0 0.0
      %3481 = vmatpush1.msra.mxu0 0.0
      %3482 = vmatprep.subr.mxu0 0.0
      %3483 = vmatpush1.msra.mxu0 0.0
      %3484 = vmatprep.subr.mxu0 0.0
      %3485 = vmatpush1.msra.mxu0 0.0
      %3486 = vmatprep.subr.mxu0 0.0
      %3487 = vmatpush1.msra.mxu0 0.0
      %3488 = vmatprep.subr.mxu0 0.0
      %3489 = vmatpush1.msra.mxu0 0.0
      %3490 = vmatprep.subr.mxu0 0.0
      %3491 = vmatpush1.msra.mxu0 0.0
      %3492 = vmatprep.mubr.f32.mxu0 0.0
      %3493 = vmatmul.mubr.f32.gmra.mrb[0].mxu0 %v3426
      %v3494 = vpop.f32.mrb[0].mxu0
      %v3495 = vadd.f32 0.0, %v3494
      %v3496 = vpop.f32.mrb[0].mxu0
      %3497 = vdwg.mxu0
      %3498 = vrot.lane.b32.xlu0 %v3251, 120
      %v3499 = vpop.permute.xlu0 %3498
      %3500 = vrot.lane.b32.xlu0 %v3328, 120
      %v3501 = vpop.permute.xlu0 %3500
      %v3502 = vsel %vm950, %v3499, 0
      %v3504 = vsel %vm950, %v3501, 0
      %3506 = vmatprep.subr.mxu0 0.0
      %3507 = vmatpush1.xpose.msra.mxu0 %v3504
      %3508 = vmatprep.subr.mxu0 0.0
      %3509 = vmatpush1.xpose.msra.mxu0 0.0
      %3510 = vmatprep.subr.mxu0 0.0
      %3511 = vmatpush1.xpose.msra.mxu0 0.0
      %3512 = vmatprep.subr.mxu0 0.0
      %3513 = vmatpush1.xpose.msra.mxu0 0.0
      %3514 = vmatprep.subr.mxu0 0.0
      %3515 = vmatpush1.xpose.msra.mxu0 0.0
      %3516 = vmatprep.subr.mxu0 0.0
      %3517 = vmatpush1.xpose.msra.mxu0 0.0
      %3518 = vmatprep.subr.mxu0 0.0
      %3519 = vmatpush1.xpose.msra.mxu0 0.0
      %3520 = vmatprep.subr.mxu0 0.0
      %3521 = vmatpush1.xpose.msra.mxu0 0.0
      %3522 = vmatprep.subr.mxu0 0.0
      %3523 = vmatpush1.xpose.msra.mxu0 0.0
      %3524 = vmatprep.subr.mxu0 0.0
      %3525 = vmatpush1.xpose.msra.mxu0 0.0
      %3526 = vmatprep.subr.mxu0 0.0
      %3527 = vmatpush1.xpose.msra.mxu0 0.0
      %3528 = vmatprep.subr.mxu0 0.0
      %3529 = vmatpush1.xpose.msra.mxu0 0.0
      %3530 = vmatprep.subr.mxu0 0.0
      %3531 = vmatpush1.xpose.msra.mxu0 0.0
      %3532 = vmatprep.subr.mxu0 0.0
      %3533 = vmatpush1.xpose.msra.mxu0 0.0
      %3534 = vmatprep.subr.mxu0 0.0
      %3535 = vmatpush1.xpose.msra.mxu0 0.0
      %3536 = vmatprep.subr.mxu0 0.0
      %3537 = vmatpush1.xpose.msra.mxu0 0.0
      %3538 = vmatprep.subr.mxu0 0.0
      %3539 = vmatpush1.xpose.msra.mxu0 0.0
      %3540 = vmatprep.subr.mxu0 0.0
      %3541 = vmatpush1.xpose.msra.mxu0 0.0
      %3542 = vmatprep.subr.mxu0 0.0
      %3543 = vmatpush1.xpose.msra.mxu0 0.0
      %3544 = vmatprep.subr.mxu0 0.0
      %3545 = vmatpush1.xpose.msra.mxu0 0.0
      %3546 = vmatprep.subr.mxu0 0.0
      %3547 = vmatpush1.xpose.msra.mxu0 0.0
      %3548 = vmatprep.subr.mxu0 0.0
      %3549 = vmatpush1.xpose.msra.mxu0 0.0
      %3550 = vmatprep.subr.mxu0 0.0
      %3551 = vmatpush1.xpose.msra.mxu0 0.0
      %3552 = vmatprep.subr.mxu0 0.0
      %3553 = vmatpush1.xpose.msra.mxu0 0.0
      %3554 = vmatprep.subr.mxu0 0.0
      %3555 = vmatpush1.xpose.msra.mxu0 0.0
      %3556 = vmatprep.subr.mxu0 0.0
      %3557 = vmatpush1.xpose.msra.mxu0 0.0
      %3558 = vmatprep.subr.mxu0 0.0
      %3559 = vmatpush1.xpose.msra.mxu0 0.0
      %3560 = vmatprep.subr.mxu0 0.0
      %3561 = vmatpush1.xpose.msra.mxu0 0.0
      %3562 = vmatprep.subr.mxu0 0.0
      %3563 = vmatpush1.xpose.msra.mxu0 0.0
      %3564 = vmatprep.subr.mxu0 0.0
      %3565 = vmatpush1.xpose.msra.mxu0 0.0
      %3566 = vmatprep.subr.mxu0 0.0
      %3567 = vmatpush1.xpose.msra.mxu0 0.0
      %3568 = vmatprep.subr.mxu0 0.0
      %3569 = vmatpush1.xpose.msra.mxu0 0.0
      %3570 = vmatprep.mubr.f32.mxu0 0.0
      %3571 = vmatmul.mubr.f32.gmra.mrb[0].mxu0 %v3502
      %v3572 = vpop.f32.mrb[0].mxu0
      %v3573 = vadd.f32 %v1029, %v3572
      %v3574 = vpop.f32.mrb[0].mxu0
      %3575 = vdwg.mxu0
      %v3576 = vsel %vm950, %v3573, -inf
      %3577 = vmax.xlane.f32.xlu0 %v3576
      %v3578 = vpop.xlane.xlu0 %3577
      %v3579 = vsub.f32 %v3573, %v3578
      %v3580 = vmul.f32 %v3579, 1.442695
      %v3581 = vpow.pop %v3580
      %v3582 = vsel %vm950, %v3581, 0.0
      %3583 = vadd.xlane.f32.xlu0 %v3582
      %v3584 = vpop.xlane.xlu0 %3583
      %v3585 = vrcp.pop %v3584
      %v3586 = vmul.f32 %v3581, %v3585
      %3587 = vrot.lane.b32.xlu0 %v3328, 88
      %v3588 = vpop.permute.xlu0 %3587
      %v3591 = vsel %vm950, %v3586, 0
      %3593 = vmatprep.subr.mxu0 0.0
      %3594 = vmatpush1.msra.mxu0 %v3588
      %3595 = vmatprep.subr.mxu0 0.0
      %3596 = vmatpush1.msra.mxu0 0.0
      %3597 = vmatprep.subr.mxu0 0.0
      %3598 = vmatpush1.msra.mxu0 0.0
      %3599 = vmatprep.subr.mxu0 0.0
      %3600 = vmatpush1.msra.mxu0 0.0
      %3601 = vmatprep.subr.mxu0 0.0
      %3602 = vmatpush1.msra.mxu0 0.0
      %3603 = vmatprep.subr.mxu0 0.0
      %3604 = vmatpush1.msra.mxu0 0.0
      %3605 = vmatprep.subr.mxu0 0.0
      %3606 = vmatpush1.msra.mxu0 0.0
      %3607 = vmatprep.subr.mxu0 0.0
      %3608 = vmatpush1.msra.mxu0 0.0
      %3609 = vmatprep.subr.mxu0 0.0
      %3610 = vmatpush1.msra.mxu0 0.0
      %3611 = vmatprep.subr.mxu0 0.0
      %3612 = vmatpush1.msra.mxu0 0.0
      %3613 = vmatprep.subr.mxu0 0.0
      %3614 = vmatpush1.msra.mxu0 0.0
      %3615 = vmatprep.subr.mxu0 0.0
      %3616 = vmatpush1.msra.mxu0 0.0
      %3617 = vmatprep.subr.mxu0 0.0
      %3618 = vmatpush1.msra.mxu0 0.0
      %3619 = vmatprep.subr.mxu0 0.0
      %3620 = vmatpush1.msra.mxu0 0.0
      %3621 = vmatprep.subr.mxu0 0.0
      %3622 = vmatpush1.msra.mxu0 0.0
      %3623 = vmatprep.subr.mxu0 0.0
      %3624 = vmatpush1.msra.mxu0 0.0
      %3625 = vmatprep.subr.mxu0 0.0
      %3626 = vmatpush1.msra.mxu0 0.0
      %3627 = vmatprep.subr.mxu0 0.0
      %3628 = vmatpush1.msra.mxu0 0.0
      %3629 = vmatprep.subr.mxu0 0.0
      %3630 = vmatpush1.msra.mxu0 0.0
      %3631 = vmatprep.subr.mxu0 0.0
      %3632 = vmatpush1.msra.mxu0 0.0
      %3633 = vmatprep.subr.mxu0 0.0
      %3634 = vmatpush1.msra.mxu0 0.0
      %3635 = vmatprep.subr.mxu0 0.0
      %3636 = vmatpush1.msra.mxu0 0.0
      %3637 = vmatprep.subr.mxu0 0.0
      %3638 = vmatpush1.msra.mxu0 0.0
      %3639 = vmatprep.subr.mxu0 0.0
      %3640 = vmatpush1.msra.mxu0 0.0
      %3641 = vmatprep.subr.mxu0 0.0
      %3642 = vmatpush1.msra.mxu0 0.0
      %3643 = vmatprep.subr.mxu0 0.0
      %3644 = vmatpush1.msra.mxu0 0.0
      %3645 = vmatprep.subr.mxu0 0.0
      %3646 = vmatpush1.msra.mxu0 0.0
      %3647 = vmatprep.subr.mxu0 0.0
      %3648 = vmatpush1.msra.mxu0 0.0
      %3649 = vmatprep.subr.mxu0 0.0
      %3650 = vmatpush1.msra.mxu0 0.0
      %3651 = vmatprep.subr.mxu0 0.0
      %3652 = vmatpush1.msra.mxu0 0.0
      %3653 = vmatprep.subr.mxu0 0.0
      %3654 = vmatpush1.msra.mxu0 0.0
      %3655 = vmatprep.subr.mxu0 0.0
      %3656 = vmatpush1.msra.mxu0 0.0
      %3657 = vmatprep.mubr.f32.mxu0 0.0
      %3658 = vmatmul.mubr.f32.gmra.mrb[0].mxu0 %v3591
      %v3659 = vpop.f32.mrb[0].mxu0
      %v3660 = vadd.f32 0.0, %v3659
      %v3661 = vpop.f32.mrb[0].mxu0
      %3662 = vdwg.mxu0
      %v3664 = vsel %vm950, %v3660, 0
      %3666 = vmatprep.subr.mxu0 0.0
      %3667 = vmatpush1.msra.mxu0 %v3332
      %3668 = vmatprep.subr.mxu0 0.0
      %3669 = vmatpush1.msra.mxu0 0.0
      %3670 = vmatprep.subr.mxu0 0.0
      %3671 = vmatpush1.msra.mxu0 0.0
      %3672 = vmatprep.subr.mxu0 0.0
      %3673 = vmatpush1.msra.mxu0 0.0
      %3674 = vmatprep.subr.mxu0 0.0
      %3675 = vmatpush1.msra.mxu0 0.0
      %3676 = vmatprep.subr.mxu0 0.0
      %3677 = vmatpush1.msra.mxu0 0.0
      %3678 = vmatprep.subr.mxu0 0.0
      %3679 = vmatpush1.msra.mxu0 0.0
      %3680 = vmatprep.subr.mxu0 0.0
      %3681 = vmatpush1.msra.mxu0 0.0
      %3682 = vmatprep.subr.mxu0 0.0
      %3683 = vmatpush1.msra.mxu0 0.0
      %3684 = vmatprep.subr.mxu0 0.0
      %3685 = vmatpush1.msra.mxu0 0.0
      %3686 = vmatprep.subr.mxu0 0.0
      %3687 = vmatpush1.msra.mxu0 0.0
      %3688 = vmatprep.subr.mxu0 0.0
      %3689 = vmatpush1.msra.mxu0 0.0
      %3690 = vmatprep.subr.mxu0 0.0
      %3691 = vmatpush1.msra.mxu0 0.0
      %3692 = vmatprep.subr.mxu0 0.0
      %3693 = vmatpush1.msra.mxu0 0.0
      %3694 = vmatprep.subr.mxu0 0.0
      %3695 = vmatpush1.msra.mxu0 0.0
      %3696 = vmatprep.subr.mxu0 0.0
      %3697 = vmatpush1.msra.mxu0 0.0
      %3698 = vmatprep.subr.mxu0 0.0
      %3699 = vmatpush1.msra.mxu0 0.0
      %3700 = vmatprep.subr.mxu0 0.0
      %3701 = vmatpush1.msra.mxu0 0.0
      %3702 = vmatprep.subr.mxu0 0.0
      %3703 = vmatpush1.msra.mxu0 0.0
      %3704 = vmatprep.subr.mxu0 0.0
      %3705 = vmatpush1.msra.mxu0 0.0
      %3706 = vmatprep.subr.mxu0 0.0
      %3707 = vmatpush1.msra.mxu0 0.0
      %3708 = vmatprep.subr.mxu0 0.0
      %3709 = vmatpush1.msra.mxu0 0.0
      %3710 = vmatprep.subr.mxu0 0.0
      %3711 = vmatpush1.msra.mxu0 0.0
      %3712 = vmatprep.subr.mxu0 0.0
      %3713 = vmatpush1.msra.mxu0 0.0
      %3714 = vmatprep.subr.mxu0 0.0
      %3715 = vmatpush1.msra.mxu0 0.0
      %3716 = vmatprep.subr.mxu0 0.0
      %3717 = vmatpush1.msra.mxu0 0.0
      %3718 = vmatprep.subr.mxu0 0.0
      %3719 = vmatpush1.msra.mxu0 0.0
      %3720 = vmatprep.subr.mxu0 0.0
      %3721 = vmatpush1.msra.mxu0 0.0
      %3722 = vmatprep.subr.mxu0 0.0
      %3723 = vmatpush1.msra.mxu0 0.0
      %3724 = vmatprep.subr.mxu0 0.0
      %3725 = vmatpush1.msra.mxu0 0.0
      %3726 = vmatprep.subr.mxu0 0.0
      %3727 = vmatpush1.msra.mxu0 0.0
      %3728 = vmatprep.subr.mxu0 0.0
      %3729 = vmatpush1.msra.mxu0 0.0
      %3730 = vmatprep.mubr.f32.mxu0 0.0
      %3731 = vmatmul.mubr.f32.gmra.mrb[0].mxu0 %v3664
      %v3732 = vpop.f32.mrb[0].mxu0
      %v3733 = vadd.f32 0.0, %v3732
      %v3734 = vpop.f32.mrb[0].mxu0
      %3735 = vdwg.mxu0
      %v3737 = vsel %vm950, %v3495, 0
      %3739 = vmatprep.subr.mxu0 0.0
      %3740 = vmatpush1.msra.mxu0 %v3331
      %3741 = vmatprep.subr.mxu0 0.0
      %3742 = vmatpush1.msra.mxu0 0.0
      %3743 = vmatprep.subr.mxu0 0.0
      %3744 = vmatpush1.msra.mxu0 0.0
      %3745 = vmatprep.subr.mxu0 0.0
      %3746 = vmatpush1.msra.mxu0 0.0
      %3747 = vmatprep.subr.mxu0 0.0
      %3748 = vmatpush1.msra.mxu0 0.0
      %3749 = vmatprep.subr.mxu0 0.0
      %3750 = vmatpush1.msra.mxu0 0.0
      %3751 = vmatprep.subr.mxu0 0.0
      %3752 = vmatpush1.msra.mxu0 0.0
      %3753 = vmatprep.subr.mxu0 0.0
      %3754 = vmatpush1.msra.mxu0 0.0
      %3755 = vmatprep.subr.mxu0 0.0
      %3756 = vmatpush1.msra.mxu0 0.0
      %3757 = vmatprep.subr.mxu0 0.0
      %3758 = vmatpush1.msra.mxu0 0.0
      %3759 = vmatprep.subr.mxu0 0.0
      %3760 = vmatpush1.msra.mxu0 0.0
      %3761 = vmatprep.subr.mxu0 0.0
      %3762 = vmatpush1.msra.mxu0 0.0
      %3763 = vmatprep.subr.mxu0 0.0
      %3764 = vmatpush1.msra.mxu0 0.0
      %3765 = vmatprep.subr.mxu0 0.0
      %3766 = vmatpush1.msra.mxu0 0.0
      %3767 = vmatprep.subr.mxu0 0.0
      %3768 = vmatpush1.msra.mxu0 0.0
      %3769 = vmatprep.subr.mxu0 0.0
      %3770 = vmatpush1.msra.mxu0 0.0
      %3771 = vmatprep.subr.mxu0 0.0
      %3772 = vmatpush1.msra.mxu0 0.0
      %3773 = vmatprep.subr.mxu0 0.0
      %3774 = vmatpush1.msra.mxu0 0.0
      %3775 = vmatprep.subr.mxu0 0.0
      %3776 = vmatpush1.msra.mxu0 0.0
      %3777 = vmatprep.subr.mxu0 0.0
      %3778 = vmatpush1.msra.mxu0 0.0
      %3779 = vmatprep.subr.mxu0 0.0
      %3780 = vmatpush1.msra.mxu0 0.0
      %3781 = vmatprep.subr.mxu0 0.0
      %3782 = vmatpush1.msra.mxu0 0.0
      %3783 = vmatprep.subr.mxu0 0.0
      %3784 = vmatpush1.msra.mxu0 0.0
      %3785 = vmatprep.subr.mxu0 0.0
      %3786 = vmatpush1.msra.mxu0 0.0
      %3787 = vmatprep.subr.mxu0 0.0
      %3788 = vmatpush1.msra.mxu0 0.0
      %3789 = vmatprep.subr.mxu0 0.0
      %3790 = vmatpush1.msra.mxu0 0.0
      %3791 = vmatprep.subr.mxu0 0.0
      %3792 = vmatpush1.msra.mxu0 0.0
      %3793 = vmatprep.subr.mxu0 0.0
      %3794 = vmatpush1.msra.mxu0 0.0
      %3795 = vmatprep.subr.mxu0 0.0
      %3796 = vmatpush1.msra.mxu0 0.0
      %3797 = vmatprep.subr.mxu0 0.0
      %3798 = vmatpush1.msra.mxu0 0.0
      %3799 = vmatprep.subr.mxu0 0.0
      %3800 = vmatpush1.msra.mxu0 0.0
      %3801 = vmatprep.subr.mxu0 0.0
      %3802 = vmatpush1.msra.mxu0 0.0
      %3803 = vmatprep.mubr.f32.mxu0 0.0
      %3804 = vmatmul.mubr.f32.gmra.mrb[0].mxu0 %v3737
      %v3805 = vpop.f32.mrb[0].mxu0
      %v3806 = vadd.f32 %v3733, %v3805
      %v3807 = vpop.f32.mrb[0].mxu0
      %3808 = vdwg.mxu0
      %3809 = vrot.lane.b32.xlu0 %v3251, 112
      %v3810 = vpop.permute.xlu0 %3809
      %3811 = vrot.lane.b32.xlu0 %v3328, 112
      %v3812 = vpop.permute.xlu0 %3811
      %v3813 = vsel %vm950, %v3810, 0
      %v3815 = vsel %vm950, %v3812, 0
      %3817 = vmatprep.subr.mxu0 0.0
      %3818 = vmatpush1.xpose.msra.mxu0 %v3815
      %3819 = vmatprep.subr.mxu0 0.0
      %3820 = vmatpush1.xpose.msra.mxu0 0.0
      %3821 = vmatprep.subr.mxu0 0.0
      %3822 = vmatpush1.xpose.msra.mxu0 0.0
      %3823 = vmatprep.subr.mxu0 0.0
      %3824 = vmatpush1.xpose.msra.mxu0 0.0
      %3825 = vmatprep.subr.mxu0 0.0
      %3826 = vmatpush1.xpose.msra.mxu0 0.0
      %3827 = vmatprep.subr.mxu0 0.0
      %3828 = vmatpush1.xpose.msra.mxu0 0.0
      %3829 = vmatprep.subr.mxu0 0.0
      %3830 = vmatpush1.xpose.msra.mxu0 0.0
      %3831 = vmatprep.subr.mxu0 0.0
      %3832 = vmatpush1.xpose.msra.mxu0 0.0
      %3833 = vmatprep.subr.mxu0 0.0
      %3834 = vmatpush1.xpose.msra.mxu0 0.0
      %3835 = vmatprep.subr.mxu0 0.0
      %3836 = vmatpush1.xpose.msra.mxu0 0.0
      %3837 = vmatprep.subr.mxu0 0.0
      %3838 = vmatpush1.xpose.msra.mxu0 0.0
      %3839 = vmatprep.subr.mxu0 0.0
      %3840 = vmatpush1.xpose.msra.mxu0 0.0
      %3841 = vmatprep.subr.mxu0 0.0
      %3842 = vmatpush1.xpose.msra.mxu0 0.0
      %3843 = vmatprep.subr.mxu0 0.0
      %3844 = vmatpush1.xpose.msra.mxu0 0.0
      %3845 = vmatprep.subr.mxu0 0.0
      %3846 = vmatpush1.xpose.msra.mxu0 0.0
      %3847 = vmatprep.subr.mxu0 0.0
      %3848 = vmatpush1.xpose.msra.mxu0 0.0
      %3849 = vmatprep.subr.mxu0 0.0
      %3850 = vmatpush1.xpose.msra.mxu0 0.0
      %3851 = vmatprep.subr.mxu0 0.0
      %3852 = vmatpush1.xpose.msra.mxu0 0.0
      %3853 = vmatprep.subr.mxu0 0.0
      %3854 = vmatpush1.xpose.msra.mxu0 0.0
      %3855 = vmatprep.subr.mxu0 0.0
      %3856 = vmatpush1.xpose.msra.mxu0 0.0
      %3857 = vmatprep.subr.mxu0 0.0
      %3858 = vmatpush1.xpose.msra.mxu0 0.0
      %3859 = vmatprep.subr.mxu0 0.0
      %3860 = vmatpush1.xpose.msra.mxu0 0.0
      %3861 = vmatprep.subr.mxu0 0.0
      %3862 = vmatpush1.xpose.msra.mxu0 0.0
      %3863 = vmatprep.subr.mxu0 0.0
      %3864 = vmatpush1.xpose.msra.mxu0 0.0
      %3865 = vmatprep.subr.mxu0 0.0
      %3866 = vmatpush1.xpose.msra.mxu0 0.0
      %3867 = vmatprep.subr.mxu0 0.0
      %3868 = vmatpush1.xpose.msra.mxu0 0.0
      %3869 = vmatprep.subr.mxu0 0.0
      %3870 = vmatpush1.xpose.msra.mxu0 0.0
      %3871 = vmatprep.subr.mxu0 0.0
      %3872 = vmatpush1.xpose.msra.mxu0 0.0
      %3873 = vmatprep.subr.mxu0 0.0
      %3874 = vmatpush1.xpose.msra.mxu0 0.0
      %3875 = vmatprep.subr.mxu0 0.0
      %3876 = vmatpush1.xpose.msra.mxu0 0.0
      %3877 = vmatprep.subr.mxu0 0.0
      %3878 = vmatpush1.xpose.msra.mxu0 0.0
      %3879 = vmatprep.subr.mxu0 0.0
      %3880 = vmatpush1.xpose.msra.mxu0 0.0
      %3881 = vmatprep.mubr.f32.mxu0 0.0
      %3882 = vmatmul.mubr.f32.gmra.mrb[0].mxu0 %v3813
      %v3883 = vpop.f32.mrb[0].mxu0
      %v3884 = vadd.f32 %v1029, %v3883
      %v3885 = vpop.f32.mrb[0].mxu0
      %3886 = vdwg.mxu0
      %v3887 = vsel %vm950, %v3884, -inf
      %3888 = vmax.xlane.f32.xlu0 %v3887
      %v3889 = vpop.xlane.xlu0 %3888
      %v3890 = vsub.f32 %v3884, %v3889
      %v3891 = vmul.f32 %v3890, 1.442695
      %v3892 = vpow.pop %v3891
      %v3893 = vsel %vm950, %v3892, 0.0
      %3894 = vadd.xlane.f32.xlu0 %v3893
      %v3895 = vpop.xlane.xlu0 %3894
      %v3896 = vrcp.pop %v3895
      %v3897 = vmul.f32 %v3892, %v3896
      %3898 = vrot.lane.b32.xlu0 %v3328, 80
      %v3899 = vpop.permute.xlu0 %3898
      %v3902 = vsel %vm950, %v3897, 0
      %3904 = vmatprep.subr.mxu0 0.0
      %3905 = vmatpush1.msra.mxu0 %v3899
      %3906 = vmatprep.subr.mxu0 0.0
      %3907 = vmatpush1.msra.mxu0 0.0
      %3908 = vmatprep.subr.mxu0 0.0
      %3909 = vmatpush1.msra.mxu0 0.0
      %3910 = vmatprep.subr.mxu0 0.0
      %3911 = vmatpush1.msra.mxu0 0.0
      %3912 = vmatprep.subr.mxu0 0.0
      %3913 = vmatpush1.msra.mxu0 0.0
      %3914 = vmatprep.subr.mxu0 0.0
      %3915 = vmatpush1.msra.mxu0 0.0
      %3916 = vmatprep.subr.mxu0 0.0
      %3917 = vmatpush1.msra.mxu0 0.0
      %3918 = vmatprep.subr.mxu0 0.0
      %3919 = vmatpush1.msra.mxu0 0.0
      %3920 = vmatprep.subr.mxu0 0.0
      %3921 = vmatpush1.msra.mxu0 0.0
      %3922 = vmatprep.subr.mxu0 0.0
      %3923 = vmatpush1.msra.mxu0 0.0
      %3924 = vmatprep.subr.mxu0 0.0
      %3925 = vmatpush1.msra.mxu0 0.0
      %3926 = vmatprep.subr.mxu0 0.0
      %3927 = vmatpush1.msra.mxu0 0.0
      %3928 = vmatprep.subr.mxu0 0.0
      %3929 = vmatpush1.msra.mxu0 0.0
      %3930 = vmatprep.subr.mxu0 0.0
      %3931 = vmatpush1.msra.mxu0 0.0
      %3932 = vmatprep.subr.mxu0 0.0
      %3933 = vmatpush1.msra.mxu0 0.0
      %3934 = vmatprep.subr.mxu0 0.0
      %3935 = vmatpush1.msra.mxu0 0.0
      %3936 = vmatprep.subr.mxu0 0.0
      %3937 = vmatpush1.msra.mxu0 0.0
      %3938 = vmatprep.subr.mxu0 0.0
      %3939 = vmatpush1.msra.mxu0 0.0
      %3940 = vmatprep.subr.mxu0 0.0
      %3941 = vmatpush1.msra.mxu0 0.0
      %3942 = vmatprep.subr.mxu0 0.0
      %3943 = vmatpush1.msra.mxu0 0.0
      %3944 = vmatprep.subr.mxu0 0.0
      %3945 = vmatpush1.msra.mxu0 0.0
      %3946 = vmatprep.subr.mxu0 0.0
      %3947 = vmatpush1.msra.mxu0 0.0
      %3948 = vmatprep.subr.mxu0 0.0
      %3949 = vmatpush1.msra.mxu0 0.0
      %3950 = vmatprep.subr.mxu0 0.0
      %3951 = vmatpush1.msra.mxu0 0.0
      %3952 = vmatprep.subr.mxu0 0.0
      %3953 = vmatpush1.msra.mxu0 0.0
      %3954 = vmatprep.subr.mxu0 0.0
      %3955 = vmatpush1.msra.mxu0 0.0
      %3956 = vmatprep.subr.mxu0 0.0
      %3957 = vmatpush1.msra.mxu0 0.0
      %3958 = vmatprep.subr.mxu0 0.0
      %3959 = vmatpush1.msra.mxu0 0.0
      %3960 = vmatprep.subr.mxu0 0.0
      %3961 = vmatpush1.msra.mxu0 0.0
      %3962 = vmatprep.subr.mxu0 0.0
      %3963 = vmatpush1.msra.mxu0 0.0
      %3964 = vmatprep.subr.mxu0 0.0
      %3965 = vmatpush1.msra.mxu0 0.0
      %3966 = vmatprep.subr.mxu0 0.0
      %3967 = vmatpush1.msra.mxu0 0.0
      %3968 = vmatprep.mubr.f32.mxu0 0.0
      %3969 = vmatmul.mubr.f32.gmra.mrb[0].mxu0 %v3902
      %v3970 = vpop.f32.mrb[0].mxu0
      %v3971 = vadd.f32 0.0, %v3970
      %v3972 = vpop.f32.mrb[0].mxu0
      %3973 = vdwg.mxu0
      %v3975 = vsel %vm950, %v3971, 0
      %3977 = vmatprep.subr.mxu0 0.0
      %3978 = vmatpush1.msra.mxu0 %v3333
      %3979 = vmatprep.subr.mxu0 0.0
      %3980 = vmatpush1.msra.mxu0 0.0
      %3981 = vmatprep.subr.mxu0 0.0
      %3982 = vmatpush1.msra.mxu0 0.0
      %3983 = vmatprep.subr.mxu0 0.0
      %3984 = vmatpush1.msra.mxu0 0.0
      %3985 = vmatprep.subr.mxu0 0.0
      %3986 = vmatpush1.msra.mxu0 0.0
      %3987 = vmatprep.subr.mxu0 0.0
      %3988 = vmatpush1.msra.mxu0 0.0
      %3989 = vmatprep.subr.mxu0 0.0
      %3990 = vmatpush1.msra.mxu0 0.0
      %3991 = vmatprep.subr.mxu0 0.0
      %3992 = vmatpush1.msra.mxu0 0.0
      %3993 = vmatprep.subr.mxu0 0.0
      %3994 = vmatpush1.msra.mxu0 0.0
      %3995 = vmatprep.subr.mxu0 0.0
      %3996 = vmatpush1.msra.mxu0 0.0
      %3997 = vmatprep.subr.mxu0 0.0
      %3998 = vmatpush1.msra.mxu0 0.0
      %3999 = vmatprep.subr.mxu0 0.0
      %4000 = vmatpush1.msra.mxu0 0.0
      %4001 = vmatprep.subr.mxu0 0.0
      %4002 = vmatpush1.msra.mxu0 0.0
      %4003 = vmatprep.subr.mxu0 0.0
      %4004 = vmatpush1.msra.mxu0 0.0
      %4005 = vmatprep.subr.mxu0 0.0
      %4006 = vmatpush1.msra.mxu0 0.0
      %4007 = vmatprep.subr.mxu0 0.0
      %4008 = vmatpush1.msra.mxu0 0.0
      %4009 = vmatprep.subr.mxu0 0.0
      %4010 = vmatpush1.msra.mxu0 0.0
      %4011 = vmatprep.subr.mxu0 0.0
      %4012 = vmatpush1.msra.mxu0 0.0
      %4013 = vmatprep.subr.mxu0 0.0
      %4014 = vmatpush1.msra.mxu0 0.0
      %4015 = vmatprep.subr.mxu0 0.0
      %4016 = vmatpush1.msra.mxu0 0.0
      %4017 = vmatprep.subr.mxu0 0.0
      %4018 = vmatpush1.msra.mxu0 0.0
      %4019 = vmatprep.subr.mxu0 0.0
      %4020 = vmatpush1.msra.mxu0 0.0
      %4021 = vmatprep.subr.mxu0 0.0
      %4022 = vmatpush1.msra.mxu0 0.0
      %4023 = vmatprep.subr.mxu0 0.0
      %4024 = vmatpush1.msra.mxu0 0.0
      %4025 = vmatprep.subr.mxu0 0.0
      %4026 = vmatpush1.msra.mxu0 0.0
      %4027 = vmatprep.subr.mxu0 0.0
      %4028 = vmatpush1.msra.mxu0 0.0
      %4029 = vmatprep.subr.mxu0 0.0
      %4030 = vmatpush1.msra.mxu0 0.0
      %4031 = vmatprep.subr.mxu0 0.0
      %4032 = vmatpush1.msra.mxu0 0.0
      %4033 = vmatprep.subr.mxu0 0.0
      %4034 = vmatpush1.msra.mxu0 0.0
      %4035 = vmatprep.subr.mxu0 0.0
      %4036 = vmatpush1.msra.mxu0 0.0
      %4037 = vmatprep.subr.mxu0 0.0
      %4038 = vmatpush1.msra.mxu0 0.0
      %4039 = vmatprep.subr.mxu0 0.0
      %4040 = vmatpush1.msra.mxu0 0.0
      %4041 = vmatprep.mubr.f32.mxu0 0.0
      %4042 = vmatmul.mubr.f32.gmra.mrb[0].mxu0 %v3975
      %v4043 = vpop.f32.mrb[0].mxu0
      %v4044 = vadd.f32 0.0, %v4043
      %v4045 = vpop.f32.mrb[0].mxu0
      %4046 = vdwg.mxu0
      %v4047 = vadd.f32 %v3806, %v4044
      %4048 = vrot.lane.b32.xlu0 %v3251, 104
      %v4049 = vpop.permute.xlu0 %4048
      %4050 = vrot.lane.b32.xlu0 %v3328, 104
      %v4051 = vpop.permute.xlu0 %4050
      %v4052 = vsel %vm950, %v4049, 0
      %v4054 = vsel %vm950, %v4051, 0
      %4056 = vmatprep.subr.mxu0 0.0
      %4057 = vmatpush1.xpose.msra.mxu0 %v4054
      %4058 = vmatprep.subr.mxu0 0.0
      %4059 = vmatpush1.xpose.msra.mxu0 0.0
      %4060 = vmatprep.subr.mxu0 0.0
      %4061 = vmatpush1.xpose.msra.mxu0 0.0
      %4062 = vmatprep.subr.mxu0 0.0
      %4063 = vmatpush1.xpose.msra.mxu0 0.0
      %4064 = vmatprep.subr.mxu0 0.0
      %4065 = vmatpush1.xpose.msra.mxu0 0.0
      %4066 = vmatprep.subr.mxu0 0.0
      %4067 = vmatpush1.xpose.msra.mxu0 0.0
      %4068 = vmatprep.subr.mxu0 0.0
      %4069 = vmatpush1.xpose.msra.mxu0 0.0
      %4070 = vmatprep.subr.mxu0 0.0
      %4071 = vmatpush1.xpose.msra.mxu0 0.0
      %4072 = vmatprep.subr.mxu0 0.0
      %4073 = vmatpush1.xpose.msra.mxu0 0.0
      %4074 = vmatprep.subr.mxu0 0.0
      %4075 = vmatpush1.xpose.msra.mxu0 0.0
      %4076 = vmatprep.subr.mxu0 0.0
      %4077 = vmatpush1.xpose.msra.mxu0 0.0
      %4078 = vmatprep.subr.mxu0 0.0
      %4079 = vmatpush1.xpose.msra.mxu0 0.0
      %4080 = vmatprep.subr.mxu0 0.0
      %4081 = vmatpush1.xpose.msra.mxu0 0.0
      %4082 = vmatprep.subr.mxu0 0.0
      %4083 = vmatpush1.xpose.msra.mxu0 0.0
      %4084 = vmatprep.subr.mxu0 0.0
      %4085 = vmatpush1.xpose.msra.mxu0 0.0
      %4086 = vmatprep.subr.mxu0 0.0
      %4087 = vmatpush1.xpose.msra.mxu0 0.0
      %4088 = vmatprep.subr.mxu0 0.0
      %4089 = vmatpush1.xpose.msra.mxu0 0.0
      %4090 = vmatprep.subr.mxu0 0.0
      %4091 = vmatpush1.xpose.msra.mxu0 0.0
      %4092 = vmatprep.subr.mxu0 0.0
      %4093 = vmatpush1.xpose.msra.mxu0 0.0
      %4094 = vmatprep.subr.mxu0 0.0
      %4095 = vmatpush1.xpose.msra.mxu0 0.0
      %4096 = vmatprep.subr.mxu0 0.0
      %4097 = vmatpush1.xpose.msra.mxu0 0.0
      %4098 = vmatprep.subr.mxu0 0.0
      %4099 = vmatpush1.xpose.msra.mxu0 0.0
      %4100 = vmatprep.subr.mxu0 0.0
      %4101 = vmatpush1.xpose.msra.mxu0 0.0
      %4102 = vmatprep.subr.mxu0 0.0
      %4103 = vmatpush1.xpose.msra.mxu0 0.0
      %4104 = vmatprep.subr.mxu0 0.0
      %4105 = vmatpush1.xpose.msra.mxu0 0.0
      %4106 = vmatprep.subr.mxu0 0.0
      %4107 = vmatpush1.xpose.msra.mxu0 0.0
      %4108 = vmatprep.subr.mxu0 0.0
      %4109 = vmatpush1.xpose.msra.mxu0 0.0
      %4110 = vmatprep.subr.mxu0 0.0
      %4111 = vmatpush1.xpose.msra.mxu0 0.0
      %4112 = vmatprep.subr.mxu0 0.0
      %4113 = vmatpush1.xpose.msra.mxu0 0.0
      %4114 = vmatprep.subr.mxu0 0.0
      %4115 = vmatpush1.xpose.msra.mxu0 0.0
      %4116 = vmatprep.subr.mxu0 0.0
      %4117 = vmatpush1.xpose.msra.mxu0 0.0
      %4118 = vmatprep.subr.mxu0 0.0
      %4119 = vmatpush1.xpose.msra.mxu0 0.0
      %4120 = vmatprep.mubr.f32.mxu0 0.0
      %4121 = vmatmul.mubr.f32.gmra.mrb[0].mxu0 %v4052
      %v4122 = vpop.f32.mrb[0].mxu0
      %v4123 = vadd.f32 %v1029, %v4122
      %v4124 = vpop.f32.mrb[0].mxu0
      %4125 = vdwg.mxu0
      %v4126 = vsel %vm950, %v4123, -inf
      %4127 = vmax.xlane.f32.xlu0 %v4126
      %v4128 = vpop.xlane.xlu0 %4127
      %v4129 = vsub.f32 %v4123, %v4128
      %v4130 = vmul.f32 %v4129, 1.442695
      %v4131 = vpow.pop %v4130
      %v4132 = vsel %vm950, %v4131, 0.0
      %4133 = vadd.xlane.f32.xlu0 %v4132
      %v4134 = vpop.xlane.xlu0 %4133
      %v4135 = vrcp.pop %v4134
      %v4136 = vmul.f32 %v4131, %v4135
      %4137 = vrot.lane.b32.xlu0 %v3328, 72
      %v4138 = vpop.permute.xlu0 %4137
      %v4141 = vsel %vm950, %v4136, 0
      %4143 = vmatprep.subr.mxu0 0.0
      %4144 = vmatpush1.msra.mxu0 %v4138
      %4145 = vmatprep.subr.mxu0 0.0
      %4146 = vmatpush1.msra.mxu0 0.0
      %4147 = vmatprep.subr.mxu0 0.0
      %4148 = vmatpush1.msra.mxu0 0.0
      %4149 = vmatprep.subr.mxu0 0.0
      %4150 = vmatpush1.msra.mxu0 0.0
      %4151 = vmatprep.subr.mxu0 0.0
      %4152 = vmatpush1.msra.mxu0 0.0
      %4153 = vmatprep.subr.mxu0 0.0
      %4154 = vmatpush1.msra.mxu0 0.0
      %4155 = vmatprep.subr.mxu0 0.0
      %4156 = vmatpush1.msra.mxu0 0.0
      %4157 = vmatprep.subr.mxu0 0.0
      %4158 = vmatpush1.msra.mxu0 0.0
      %4159 = vmatprep.subr.mxu0 0.0
      %4160 = vmatpush1.msra.mxu0 0.0
      %4161 = vmatprep.subr.mxu0 0.0
      %4162 = vmatpush1.msra.mxu0 0.0
      %4163 = vmatprep.subr.mxu0 0.0
      %4164 = vmatpush1.msra.mxu0 0.0
      %4165 = vmatprep.subr.mxu0 0.0
      %4166 = vmatpush1.msra.mxu0 0.0
      %4167 = vmatprep.subr.mxu0 0.0
      %4168 = vmatpush1.msra.mxu0 0.0
      %4169 = vmatprep.subr.mxu0 0.0
      %4170 = vmatpush1.msra.mxu0 0.0
      %4171 = vmatprep.subr.mxu0 0.0
      %4172 = vmatpush1.msra.mxu0 0.0
      %4173 = vmatprep.subr.mxu0 0.0
      %4174 = vmatpush1.msra.mxu0 0.0
      %4175 = vmatprep.subr.mxu0 0.0
      %4176 = vmatpush1.msra.mxu0 0.0
      %4177 = vmatprep.subr.mxu0 0.0
      %4178 = vmatpush1.msra.mxu0 0.0
      %4179 = vmatprep.subr.mxu0 0.0
      %4180 = vmatpush1.msra.mxu0 0.0
      %4181 = vmatprep.subr.mxu0 0.0
      %4182 = vmatpush1.msra.mxu0 0.0
      %4183 = vmatprep.subr.mxu0 0.0
      %4184 = vmatpush1.msra.mxu0 0.0
      %4185 = vmatprep.subr.mxu0 0.0
      %4186 = vmatpush1.msra.mxu0 0.0
      %4187 = vmatprep.subr.mxu0 0.0
      %4188 = vmatpush1.msra.mxu0 0.0
      %4189 = vmatprep.subr.mxu0 0.0
      %4190 = vmatpush1.msra.mxu0 0.0
      %4191 = vmatprep.subr.mxu0 0.0
      %4192 = vmatpush1.msra.mxu0 0.0
      %4193 = vmatprep.subr.mxu0 0.0
      %4194 = vmatpush1.msra.mxu0 0.0
      %4195 = vmatprep.subr.mxu0 0.0
      %4196 = vmatpush1.msra.mxu0 0.0
      %4197 = vmatprep.subr.mxu0 0.0
      %4198 = vmatpush1.msra.mxu0 0.0
      %4199 = vmatprep.subr.mxu0 0.0
      %4200 = vmatpush1.msra.mxu0 0.0
      %4201 = vmatprep.subr.mxu0 0.0
      %4202 = vmatpush1.msra.mxu0 0.0
      %4203 = vmatprep.subr.mxu0 0.0
      %4204 = vmatpush1.msra.mxu0 0.0
      %4205 = vmatprep.subr.mxu0 0.0
      %4206 = vmatpush1.msra.mxu0 0.0
      %4207 = vmatprep.mubr.f32.mxu0 0.0
      %4208 = vmatmul.mubr.f32.gmra.mrb[0].mxu0 %v4141
      %v4209 = vpop.f32.mrb[0].mxu0
      %v4210 = vadd.f32 0.0, %v4209
      %v4211 = vpop.f32.mrb[0].mxu0
      %4212 = vdwg.mxu0
      %v4214 = vsel %vm950, %v4210, 0
      %4216 = vmatprep.subr.mxu0 0.0
      %4217 = vmatpush1.msra.mxu0 %v3334
      %4218 = vmatprep.subr.mxu0 0.0
      %4219 = vmatpush1.msra.mxu0 0.0
      %4220 = vmatprep.subr.mxu0 0.0
      %4221 = vmatpush1.msra.mxu0 0.0
      %4222 = vmatprep.subr.mxu0 0.0
      %4223 = vmatpush1.msra.mxu0 0.0
      %4224 = vmatprep.subr.mxu0 0.0
      %4225 = vmatpush1.msra.mxu0 0.0
      %4226 = vmatprep.subr.mxu0 0.0
      %4227 = vmatpush1.msra.mxu0 0.0
      %4228 = vmatprep.subr.mxu0 0.0
      %4229 = vmatpush1.msra.mxu0 0.0
      %4230 = vmatprep.subr.mxu0 0.0
      %4231 = vmatpush1.msra.mxu0 0.0
      %4232 = vmatprep.subr.mxu0 0.0
      %4233 = vmatpush1.msra.mxu0 0.0
      %4234 = vmatprep.subr.mxu0 0.0
      %4235 = vmatpush1.msra.mxu0 0.0
      %4236 = vmatprep.subr.mxu0 0.0
      %4237 = vmatpush1.msra.mxu0 0.0
      %4238 = vmatprep.subr.mxu0 0.0
      %4239 = vmatpush1.msra.mxu0 0.0
      %4240 = vmatprep.subr.mxu0 0.0
      %4241 = vmatpush1.msra.mxu0 0.0
      %4242 = vmatprep.subr.mxu0 0.0
      %4243 = vmatpush1.msra.mxu0 0.0
      %4244 = vmatprep.subr.mxu0 0.0
      %4245 = vmatpush1.msra.mxu0 0.0
      %4246 = vmatprep.subr.mxu0 0.0
      %4247 = vmatpush1.msra.mxu0 0.0
      %4248 = vmatprep.subr.mxu0 0.0
      %4249 = vmatpush1.msra.mxu0 0.0
      %4250 = vmatprep.subr.mxu0 0.0
      %4251 = vmatpush1.msra.mxu0 0.0
      %4252 = vmatprep.subr.mxu0 0.0
      %4253 = vmatpush1.msra.mxu0 0.0
      %4254 = vmatprep.subr.mxu0 0.0
      %4255 = vmatpush1.msra.mxu0 0.0
      %4256 = vmatprep.subr.mxu0 0.0
      %4257 = vmatpush1.msra.mxu0 0.0
      %4258 = vmatprep.subr.mxu0 0.0
      %4259 = vmatpush1.msra.mxu0 0.0
      %4260 = vmatprep.subr.mxu0 0.0
      %4261 = vmatpush1.msra.mxu0 0.0
      %4262 = vmatprep.subr.mxu0 0.0
      %4263 = vmatpush1.msra.mxu0 0.0
      %4264 = vmatprep.subr.mxu0 0.0
      %4265 = vmatpush1.msra.mxu0 0.0
      %4266 = vmatprep.subr.mxu0 0.0
      %4267 = vmatpush1.msra.mxu0 0.0
      %4268 = vmatprep.subr.mxu0 0.0
      %4269 = vmatpush1.msra.mxu0 0.0
      %4270 = vmatprep.subr.mxu0 0.0
      %4271 = vmatpush1.msra.mxu0 0.0
      %4272 = vmatprep.subr.mxu0 0.0
      %4273 = vmatpush1.msra.mxu0 0.0
      %4274 = vmatprep.subr.mxu0 0.0
      %4275 = vmatpush1.msra.mxu0 0.0
      %4276 = vmatprep.subr.mxu0 0.0
      %4277 = vmatpush1.msra.mxu0 0.0
      %4278 = vmatprep.subr.mxu0 0.0
      %4279 = vmatpush1.msra.mxu0 0.0
      %4280 = vmatprep.mubr.f32.mxu0 0.0
      %4281 = vmatmul.mubr.f32.gmra.mrb[0].mxu0 %v4214
      %v4282 = vpop.f32.mrb[0].mxu0
      %v4283 = vadd.f32 0.0, %v4282
      %v4284 = vpop.f32.mrb[0].mxu0
      %4285 = vdwg.mxu0
      %v4286 = vadd.f32 %v4047, %v4283
      %v4287 = vadd.f32 %v3160, %v4286
      %v4288 = vld [vmem:[%s20] sm:$0x1]
      %v4289 = vmul.f32 %v4287, %v4287
      %v4290 = vsel %vm846, %v4289, 0.0
      %4291 = vadd.xlane.f32.xlu0 %v4290
      %v4292 = vpop.xlane.xlu0 %4291
      %v4293 = vmul.f32 %v4292, %v850
      %v4294 = vadd.f32 %v4293, 1e-06
      %v4295 = vrsqrt.pop %v4294
      %v4296 = vmul.f32 %v4287, %v4295
      %v4298 = vlaneseq
      %v4299 = vshrl.u32 %v4298, 7
      %v4300 = vsub.s32 0, %v4299
      %v4301 = vrot.slane %v4288, %v4300
      %v4303 = vmul.f32 %v4296, %v4301
      %v4304 = vld [vmem:[%s21] sm:$0xff]
      %v4305 = vld [vmem:[%s21 + $0x8] sm:$0xff]
      %v4306 = vld [vmem:[%s21 + $0x10] sm:$0xff]
      %v4307 = vld [vmem:[%s21 + $0x18] sm:$0xff]
      %v4309 = vsel %vm846, %v4303, 0
      %4311 = vmatprep.subr.mxu0 0.0
      %4312 = vmatpush1.msra.mxu0 %v4304
      %4313 = vmatprep.subr.mxu0 0.0
      %4314 = vmatpush1.msra.mxu0 %v4305
      %4315 = vmatprep.subr.mxu0 0.0
      %4316 = vmatpush1.msra.mxu0 %v4306
      %4317 = vmatprep.subr.mxu0 0.0
      %4318 = vmatpush1.msra.mxu0 %v4307
      %4319 = vmatprep.subr.mxu0 0.0
      %4320 = vmatpush1.msra.mxu0 0.0
      %4321 = vmatprep.subr.mxu0 0.0
      %4322 = vmatpush1.msra.mxu0 0.0
      %4323 = vmatprep.subr.mxu0 0.0
      %4324 = vmatpush1.msra.mxu0 0.0
      %4325 = vmatprep.subr.mxu0 0.0
      %4326 = vmatpush1.msra.mxu0 0.0
      %4327 = vmatprep.subr.mxu0 0.0
      %4328 = vmatpush1.msra.mxu0 0.0
      %4329 = vmatprep.subr.mxu0 0.0
      %4330 = vmatpush1.msra.mxu0 0.0
      %4331 = vmatprep.subr.mxu0 0.0
      %4332 = vmatpush1.msra.mxu0 0.0
      %4333 = vmatprep.subr.mxu0 0.0
      %4334 = vmatpush1.msra.mxu0 0.0
      %4335 = vmatprep.subr.mxu0 0.0
      %4336 = vmatpush1.msra.mxu0 0.0
      %4337 = vmatprep.subr.mxu0 0.0
      %4338 = vmatpush1.msra.mxu0 0.0
      %4339 = vmatprep.subr.mxu0 0.0
      %4340 = vmatpush1.msra.mxu0 0.0
      %4341 = vmatprep.subr.mxu0 0.0
      %4342 = vmatpush1.msra.mxu0 0.0
      %4343 = vmatprep.subr.mxu0 0.0
      %4344 = vmatpush1.msra.mxu0 0.0
      %4345 = vmatprep.subr.mxu0 0.0
      %4346 = vmatpush1.msra.mxu0 0.0
      %4347 = vmatprep.subr.mxu0 0.0
      %4348 = vmatpush1.msra.mxu0 0.0
      %4349 = vmatprep.subr.mxu0 0.0
      %4350 = vmatpush1.msra.mxu0 0.0
      %4351 = vmatprep.subr.mxu0 0.0
      %4352 = vmatpush1.msra.mxu0 0.0
      %4353 = vmatprep.subr.mxu0 0.0
      %4354 = vmatpush1.msra.mxu0 0.0
      %4355 = vmatprep.subr.mxu0 0.0
      %4356 = vmatpush1.msra.mxu0 0.0
      %4357 = vmatprep.subr.mxu0 0.0
      %4358 = vmatpush1.msra.mxu0 0.0
      %4359 = vmatprep.subr.mxu0 0.0
      %4360 = vmatpush1.msra.mxu0 0.0
      %4361 = vmatprep.subr.mxu0 0.0
      %4362 = vmatpush1.msra.mxu0 0.0
      %4363 = vmatprep.subr.mxu0 0.0
      %4364 = vmatpush1.msra.mxu0 0.0
      %4365 = vmatprep.subr.mxu0 0.0
      %4366 = vmatpush1.msra.mxu0 0.0
      %4367 = vmatprep.subr.mxu0 0.0
      %4368 = vmatpush1.msra.mxu0 0.0
      %4369 = vmatprep.subr.mxu0 0.0
      %4370 = vmatpush1.msra.mxu0 0.0
      %4371 = vmatprep.subr.mxu0 0.0
      %4372 = vmatpush1.msra.mxu0 0.0
      %4373 = vmatprep.subr.mxu0 0.0
      %4374 = vmatpush1.msra.mxu0 0.0
      %4375 = vmatprep.mubr.f32.mxu0 0.0
      %4376 = vmatmul.mubr.f32.gmra.mrb[0].mxu0 %v4309
      %v4377 = vpop.f32.mrb[0].mxu0
      %v4378 = vadd.f32 0.0, %v4377
      %v4379 = vpop.f32.mrb[0].mxu0
      %4380 = vdwg.mxu0
      %v4381 = vmax.f32 %v4378, 0.0
      %v4382 = vld [vmem:[%s22] sm:$0xff]
      %v4383 = vld [vmem:[%s22 + $0x8] sm:$0xff]
      %v4384 = vld [vmem:[%s22 + $0x10] sm:$0xff]
      %v4385 = vld [vmem:[%s22 + $0x18] sm:$0xff]
      %v4386 = vld [vmem:[%s22 + $0x20] sm:$0xff]
      %v4387 = vld [vmem:[%s22 + $0x28] sm:$0xff]
      %v4388 = vld [vmem:[%s22 + $0x30] sm:$0xff]
      %v4389 = vld [vmem:[%s22 + $0x38] sm:$0xff]
      %v4391 = vsel %vm2014, %v4381, 0
      %4393 = vmatprep.subr.mxu0 0.0
      %4394 = vmatpush1.msra.mxu0 %v4382
      %4395 = vmatprep.subr.mxu0 0.0
      %4396 = vmatpush1.msra.mxu0 %v4383
      %4397 = vmatprep.subr.mxu0 0.0
      %4398 = vmatpush1.msra.mxu0 %v4384
      %4399 = vmatprep.subr.mxu0 0.0
      %4400 = vmatpush1.msra.mxu0 %v4385
      %4401 = vmatprep.subr.mxu0 0.0
      %4402 = vmatpush1.msra.mxu0 %v4386
      %4403 = vmatprep.subr.mxu0 0.0
      %4404 = vmatpush1.msra.mxu0 %v4387
      %4405 = vmatprep.subr.mxu0 0.0
      %4406 = vmatpush1.msra.mxu0 %v4388
      %4407 = vmatprep.subr.mxu0 0.0
      %4408 = vmatpush1.msra.mxu0 %v4389
      %4409 = vmatprep.subr.mxu0 0.0
      %4410 = vmatpush1.msra.mxu0 0.0
      %4411 = vmatprep.subr.mxu0 0.0
      %4412 = vmatpush1.msra.mxu0 0.0
      %4413 = vmatprep.subr.mxu0 0.0
      %4414 = vmatpush1.msra.mxu0 0.0
      %4415 = vmatprep.subr.mxu0 0.0
      %4416 = vmatpush1.msra.mxu0 0.0
      %4417 = vmatprep.subr.mxu0 0.0
      %4418 = vmatpush1.msra.mxu0 0.0
      %4419 = vmatprep.subr.mxu0 0.0
      %4420 = vmatpush1.msra.mxu0 0.0
      %4421 = vmatprep.subr.mxu0 0.0
      %4422 = vmatpush1.msra.mxu0 0.0
      %4423 = vmatprep.subr.mxu0 0.0
      %4424 = vmatpush1.msra.mxu0 0.0
      %4425 = vmatprep.subr.mxu0 0.0
      %4426 = vmatpush1.msra.mxu0 0.0
      %4427 = vmatprep.subr.mxu0 0.0
      %4428 = vmatpush1.msra.mxu0 0.0
      %4429 = vmatprep.subr.mxu0 0.0
      %4430 = vmatpush1.msra.mxu0 0.0
      %4431 = vmatprep.subr.mxu0 0.0
      %4432 = vmatpush1.msra.mxu0 0.0
      %4433 = vmatprep.subr.mxu0 0.0
      %4434 = vmatpush1.msra.mxu0 0.0
      %4435 = vmatprep.subr.mxu0 0.0
      %4436 = vmatpush1.msra.mxu0 0.0
      %4437 = vmatprep.subr.mxu0 0.0
      %4438 = vmatpush1.msra.mxu0 0.0
      %4439 = vmatprep.subr.mxu0 0.0
      %4440 = vmatpush1.msra.mxu0 0.0
      %4441 = vmatprep.subr.mxu0 0.0
      %4442 = vmatpush1.msra.mxu0 0.0
      %4443 = vmatprep.subr.mxu0 0.0
      %4444 = vmatpush1.msra.mxu0 0.0
      %4445 = vmatprep.subr.mxu0 0.0
      %4446 = vmatpush1.msra.mxu0 0.0
      %4447 = vmatprep.subr.mxu0 0.0
      %4448 = vmatpush1.msra.mxu0 0.0
      %4449 = vmatprep.subr.mxu0 0.0
      %4450 = vmatpush1.msra.mxu0 0.0
      %4451 = vmatprep.subr.mxu0 0.0
      %4452 = vmatpush1.msra.mxu0 0.0
      %4453 = vmatprep.subr.mxu0 0.0
      %4454 = vmatpush1.msra.mxu0 0.0
      %4455 = vmatprep.subr.mxu0 0.0
      %4456 = vmatpush1.msra.mxu0 0.0
      %4457 = vmatprep.mubr.f32.mxu0 0.0
      %4458 = vmatmul.mubr.f32.gmra.mrb[0].mxu0 %v4391
      %v4459 = vpop.f32.mrb[0].mxu0
      %v4460 = vadd.f32 0.0, %v4459
      %v4461 = vpop.f32.mrb[0].mxu0
      %4462 = vdwg.mxu0
      %v4463 = vadd.f32 %v4287, %v4460
      %v4464 = vld [vmem:[%s23] sm:$0x1]
      %v4465 = vmul.f32 %v4463, %v4463
      %v4466 = vsel %vm846, %v4465, 0.0
      %4467 = vadd.xlane.f32.xlu0 %v4466
      %v4468 = vpop.xlane.xlu0 %4467
      %v4469 = vmul.f32 %v4468, %v850
      %v4470 = vadd.f32 %v4469, 1e-06
      %v4471 = vrsqrt.pop %v4470
      %v4472 = vmul.f32 %v4463, %v4471
      %v4474 = vlaneseq
      %v4475 = vshrl.u32 %v4474, 7
      %v4476 = vsub.s32 0, %v4475
      %v4477 = vrot.slane %v4464, %v4476
      %v4479 = vmul.f32 %v4472, %v4477
      %v4480 = vld [vmem:[%s24] sm:$0xff]
      %v4481 = vld [vmem:[%s24 + $0x8] sm:$0xff]
      %v4482 = vld [vmem:[%s24 + $0x10] sm:$0xff]
      %v4483 = vld [vmem:[%s24 + $0x18] sm:$0xff]
      %v4484 = vld [vmem:[%s24 + $0x20] sm:$0xff]
      %v4485 = vld [vmem:[%s24 + $0x28] sm:$0xff]
      %v4486 = vld [vmem:[%s24 + $0x30] sm:$0xff]
      %v4487 = vld [vmem:[%s24 + $0x38] sm:$0xff]
      %v4489 = vsel %vm846, %v4479, 0
      %4491 = vmatprep.subr.mxu0 %v4481
      %4492 = vmatpush1.msra.mxu0 %v4480
      %4493 = vmatprep.subr.mxu0 %v4483
      %4494 = vmatpush1.msra.mxu0 %v4482
      %4495 = vmatprep.subr.mxu0 %v4485
      %4496 = vmatpush1.msra.mxu0 %v4484
      %4497 = vmatprep.subr.mxu0 %v4487
      %4498 = vmatpush1.msra.mxu0 %v4486
      %4499 = vmatprep.subr.mxu0 0.0
      %4500 = vmatpush1.msra.mxu0 0.0
      %4501 = vmatprep.subr.mxu0 0.0
      %4502 = vmatpush1.msra.mxu0 0.0
      %4503 = vmatprep.subr.mxu0 0.0
      %4504 = vmatpush1.msra.mxu0 0.0
      %4505 = vmatprep.subr.mxu0 0.0
      %4506 = vmatpush1.msra.mxu0 0.0
      %4507 = vmatprep.subr.mxu0 0.0
      %4508 = vmatpush1.msra.mxu0 0.0
      %4509 = vmatprep.subr.mxu0 0.0
      %4510 = vmatpush1.msra.mxu0 0.0
      %4511 = vmatprep.subr.mxu0 0.0
      %4512 = vmatpush1.msra.mxu0 0.0
      %4513 = vmatprep.subr.mxu0 0.0
      %4514 = vmatpush1.msra.mxu0 0.0
      %4515 = vmatprep.subr.mxu0 0.0
      %4516 = vmatpush1.msra.mxu0 0.0
      %4517 = vmatprep.subr.mxu0 0.0
      %4518 = vmatpush1.msra.mxu0 0.0
      %4519 = vmatprep.subr.mxu0 0.0
      %4520 = vmatpush1.msra.mxu0 0.0
      %4521 = vmatprep.subr.mxu0 0.0
      %4522 = vmatpush1.msra.mxu0 0.0
      %4523 = vmatprep.subr.mxu0 0.0
      %4524 = vmatpush1.msra.mxu0 0.0
      %4525 = vmatprep.subr.mxu0 0.0
      %4526 = vmatpush1.msra.mxu0 0.0
      %4527 = vmatprep.subr.mxu0 0.0
      %4528 = vmatpush1.msra.mxu0 0.0
      %4529 = vmatprep.subr.mxu0 0.0
      %4530 = vmatpush1.msra.mxu0 0.0
      %4531 = vmatprep.subr.mxu0 0.0
      %4532 = vmatpush1.msra.mxu0 0.0
      %4533 = vmatprep.subr.mxu0 0.0
      %4534 = vmatpush1.msra.mxu0 0.0
      %4535 = vmatprep.subr.mxu0 0.0
      %4536 = vmatpush1.msra.mxu0 0.0
      %4537 = vmatprep.subr.mxu0 0.0
      %4538 = vmatpush1.msra.mxu0 0.0
      %4539 = vmatprep.subr.mxu0 0.0
      %4540 = vmatpush1.msra.mxu0 0.0
      %4541 = vmatprep.subr.mxu0 0.0
      %4542 = vmatpush1.msra.mxu0 0.0
      %4543 = vmatprep.subr.mxu0 0.0
      %4544 = vmatpush1.msra.mxu0 0.0
      %4545 = vmatprep.subr.mxu0 0.0
      %4546 = vmatpush1.msra.mxu0 0.0
      %4547 = vmatprep.subr.mxu0 0.0
      %4548 = vmatpush1.msra.mxu0 0.0
      %4549 = vmatprep.subr.mxu0 0.0
      %4550 = vmatpush1.msra.mxu0 0.0
      %4551 = vmatprep.subr.mxu0 0.0
      %4552 = vmatpush1.msra.mxu0 0.0
      %4553 = vmatprep.subr.mxu0 0.0
      %4554 = vmatpush1.msra.mxu0 0.0
      %4555 = vmatprep.mubr.f32.mxu0 0.0
      %4556 = vmatmul.mubr.f32.gmra.mrb[0].mxu0 %v4489
      %v4557 = vpop.f32.mrb[0].mxu0
      %v4558 = vadd.f32 0.0, %v4557
      %v4559 = vpop.f32.mrb[0].mxu0
      %v4560 = vadd.f32 0.0, %v4559
      %4561 = vdwg.mxu0
      %v4562 = vld [vmem:[%s835] sm:$0xff]
      %v4563 = vmax.f32 %v4558, %v4560
      %4564 = vmax.xlane.f32.xlu0 %v4563
      %v4565 = vpop.xlane.xlu0 %4564
      %v4566 = vsub.f32 %v4558, %v4565
      %v4567 = vsub.f32 %v4560, %v4565
      %v4568 = vmul.f32 %v4566, 1.442695
      %v4569 = vpow.pop %v4568
      %v4570 = vmul.f32 %v4567, 1.442695
      %v4571 = vpow.pop %v4570
      %v4572 = vadd.f32 %v4569, %v4571
      %4573 = vadd.xlane.f32.xlu0 %v4572
      %v4574 = vpop.xlane.xlu0 %4573
      %v4575 = vlog2.pop %v4574
      %v4576 = vmul.f32 %v4575, 0.6931472
      %v4577 = vsub.f32 %v4566, %v4576
      %v4578 = vsub.f32 %v4567, %v4576
      %v4579 = vlaneseq
      %v4580 = vand.u32 %v4579, 127
      %v4581 = vadd.s32 %v4580, 128
      %4582 = vset.pattern.permute.xlu0 0
      %4583 = vperm.xlu0 %4582, %v4562
      %v4584 = vpop.permute.xlu0 %4583
      %vm4585 = vcmp.eq.s32.totalorder %v4580, %v4584
      %vm4586 = vcmp.eq.s32.totalorder %v4581, %v4584
      %v4587 = vsel %vm4585, 1, 0
      %v4588 = vsel %vm4586, 1, 0
      %v4589 = vcvt.s32.f32 %v4587
      %v4590 = vcvt.s32.f32 %v4588
      %v4591 = vmul.f32 %v4577, %v4589
      %v4592 = vmul.f32 %v4578, %v4590
      %v4593 = vadd.f32 %v4591, %v4592
      %4594 = vadd.xlane.f32.xlu0 %v4593
      %v4595 = vpop.xlane.xlu0 %4594
      %vm4596 = vcmp.ne.s32.totalorder %v4562, 4294967196
      %v4597 = vsel %vm4596, 1, 0
      %v4598 = vcvt.s32.f32 %v4597
      %v4599 = vsub.f32 0.0, %v4595
      %v4600 = vmul.f32 %v4599, %v4598
      %vm4601 = vcmask 7168
      %v4602 = vsel %vm4601, %v4600, 0.0
      %4603 = vadd.xlane.f32.xlu0 %v4602
      %v4604 = vpop.xlane.xlu0 %4603
      %v4605 = vrot.slane %v4604, 4
      %v4606 = vadd.f32 %v4604, %v4605
      %v4607 = vrot.slane %v4606, 2
      %v4608 = vadd.f32 %v4606, %v4607
      %v4609 = vrot.slane %v4608, 1
      %v4610 = vadd.f32 %v4608, %v4609
      %s4611 = vtos %v4610
      %v4612 = vstv %s4611
      %vm4613 = vcmask 0
      %4614 = vst.msk [vmem:[%s838] sm:$0x1] %vm4613, %v4612
      %v4615 = vsel %vm4601, %v4598, 0.0
      %4616 = vadd.xlane.f32.xlu0 %v4615
      %v4617 = vpop.xlane.xlu0 %4616
      %v4618 = vrot.slane %v4617, 4
      %v4619 = vadd.f32 %v4617, %v4618
      %v4620 = vrot.slane %v4619, 2
      %v4621 = vadd.f32 %v4619, %v4620
      %v4622 = vrot.slane %v4621, 1
      %v4623 = vadd.f32 %v4621, %v4622
      %s4624 = vtos %v4623
      %v4625 = vstv %s4624
      %4626 = vst.msk [vmem:[%s841] sm:$0x1] %vm4613, %v4625
      %p4627 = scmp.lt.s32.totalorder %s38, 1
      %s4628 = scalar_select %p4627, %s38, 1
      %s4629 = scalar_lea.vmem %s25, %s4628
      %p4630 = scmp.lt.s32.totalorder %s38, 1
      %s4631 = scalar_select %p4630, %s38, 1
      %s4632 = scalar_lea.vmem %s26, %s4631
      // Predicated region
      $region121: #{t5_forward.1} parent=119 // pred_check
        %p4633 = pneg %p601
      $region122: #{t5_forward.1} parent=119 // pred_check_branch
        %4635 = sbr.rel (%p4633) target = $region124
      $region123: #{t5_forward.1} parent=119 // pred_region
        _
      $region124: #{t5_forward.1} parent=119 // pred_fallthru
        _
      // Predicated region
      $region125: #{t5_forward.1} parent=119 // pred_check
        %p4636 = pneg %p627
      $region126: #{t5_forward.1} parent=119 // pred_check_branch
        %4638 = sbr.rel (%p4636) target = $region128
      $region127: #{t5_forward.1} parent=119 // pred_region
        _
      $region128: #{t5_forward.1} parent=119 // pred_fallthru
        _
    $region120: #{t5_forward.1} parent=5 // pred_fallthru
      _
    %p4639 = scmp.le.s32.totalorder 2, %s33
    // Predicated region
    $region129: #{t5_forward.1} parent=5 // pred_check
      %p4640 = pneg %p4639
    $region130: #{t5_forward.1} parent=5 // pred_check_branch
      %4642 = sbr.rel (%p4640) target = $region132
    $region131: #{t5_forward.1} parent=5 // pred_region
      %s4643 = ssub.s32 %s33, 2
      // Predicated region
      $region133: #{t5_forward.1} parent=131 // pred_check
        %p4644 = pneg %p607
      $region134: #{t5_forward.1} parent=131 // pred_check_branch
        %4646 = sbr.rel (%p4644) target = $region136
      $region135: #{t5_forward.1} parent=131 // pred_region
        %p4647 = scmp.lt.s32.totalorder %s39, 1
        %s4648 = scalar_select %p4647, %s39, 1
        %s4649 = scalar_lea.vmem %s25, %s4648
      $region136: #{t5_forward.1} parent=131 // pred_fallthru
        _
      // Predicated region
      $region137: #{t5_forward.1} parent=131 // pred_check
        %p4650 = pneg %p633
      $region138: #{t5_forward.1} parent=131 // pred_check_branch
        %4652 = sbr.rel (%p4650) target = $region140
      $region139: #{t5_forward.1} parent=131 // pred_region
        %p4653 = scmp.lt.s32.totalorder %s39, 1
        %s4654 = scalar_select %p4653, %s39, 1
        %s4655 = scalar_lea.vmem %s26, %s4654
      $region140: #{t5_forward.1} parent=131 // pred_fallthru
        _
    $region132: #{t5_forward.1} parent=5 // pred_fallthru
      _
  $region6: #{t5_forward.1} parent=0 // loop_footer
    %s37 = sadd.s32 1, %s33
  $region7: #{t5_forward.1} parent=0 // loop_footer_branch
    %32 = sbr.rel target = $region3
  $region8: #{t5_forward.1} parent=0 // loop_exit
    _

</llo_original>
